<compile_context>
chip_gen: v5e
topology: v5e:2x2
jax: 0.10.0
libtpu: 0.0.40
codegen_flags: <defaults>
</compile_context>

<pallas_src>
import functools
import math

import jax
import jax.numpy as jnp
from jax.experimental import pallas as pl
from jax.experimental.pallas import tpu as pltpu


# ----------------------------------------------------------------------------
# Fused kernel: attention -> add+LayerNorm -> gate softmax -> MoE experts.
# Grid: (batch, seq_tile, expert); expert axis is the innermost reduction.
# ----------------------------------------------------------------------------
def _fused_kernel(x_ref, wqkv_ref, bqkv_ref, wo_ref, bo_ref,
                  ln_g_ref, ln_b_ref, wg_ref, we_ref, be_ref,
                  o_ref, y_sc, g_sc, acc_sc,
                  *, num_heads, num_experts, block_size, eps,
                  compute_dtype, resident_experts, approx_recip):
    e = pl.program_id(2)

    def _softmax_lastdim(s):
        s = s - jnp.max(s, axis=-1, keepdims=True)
        p = jnp.exp(s)
        denom = jnp.sum(p, axis=-1, keepdims=True)
        if approx_recip:
            return p * pl.reciprocal(denom, approx=True)
        return p / denom

    # ---- prologue (runs once per (batch, tile), at e == 0) -----------------
    @pl.when(e == 0)
    def _prologue():
        x = x_ref[0]                                     # (T, D) input dtype
        T, D = x.shape
        H = num_heads
        hd = D // H
        n_blk = T // block_size
        scale = jnp.float32(1.0 / math.sqrt(hd))

        # Fused QKV projection for the whole token tile: one wide MXU pass.
        qkv = jnp.dot(x.astype(compute_dtype), wqkv_ref[...],
                      preferred_element_type=jnp.float32)
        qkv = qkv + bqkv_ref[...]                        # (T, 3D) f32

        # Block-local multi-head attention (static loop over n_blk blocks;
        # within a block, heads are batched: (H, bs, hd) einsums).
        ctx_blocks = []
        for blk in range(n_blk):
            r0 = blk * block_size
            qb = qkv[r0:r0 + block_size, 0 * D:1 * D]
            kb = qkv[r0:r0 + block_size, 1 * D:2 * D]
            vb = qkv[r0:r0 + block_size, 2 * D:3 * D]
            q = jnp.transpose(qb.reshape(block_size, H, hd), (1, 0, 2))
            k = jnp.transpose(kb.reshape(block_size, H, hd), (1, 0, 2))
            v = jnp.transpose(vb.reshape(block_size, H, hd), (1, 0, 2))

            s = jnp.einsum("hqd,hkd->hqk",
                           q.astype(compute_dtype), k.astype(compute_dtype),
                           preferred_element_type=jnp.float32) * scale
            p = _softmax_lastdim(s)                      # (H, bs, bs) f32
            ob = jnp.einsum("hqk,hkd->hqd",
                            p.astype(compute_dtype), v.astype(compute_dtype),
                            preferred_element_type=jnp.float32)
            ctx_blocks.append(
                jnp.transpose(ob, (1, 0, 2)).reshape(block_size, D))
        ctx = ctx_blocks[0] if n_blk == 1 else jnp.concatenate(ctx_blocks, 0)

        attn = jnp.dot(ctx.astype(compute_dtype), wo_ref[...],
                       preferred_element_type=jnp.float32) + bo_ref[...]

        # Residual add + LayerNorm (f32).
        y = attn + x.astype(jnp.float32)
        mu = jnp.mean(y, axis=-1, keepdims=True)
        var = jnp.mean(jnp.square(y - mu), axis=-1, keepdims=True)
        y = (y - mu) * jax.lax.rsqrt(var + eps)
        y = y * ln_g_ref[...] + ln_b_ref[...]
        y_sc[...] = y

        # Gate softmax over experts (f32); stored expert-major ONCE so the
        # hot expert loop only does a dynamic first-axis load.
        logits = jnp.dot(y.astype(compute_dtype), wg_ref[...],
                         preferred_element_type=jnp.float32)    # (T, E)
        g = _softmax_lastdim(logits)
        lane = jax.lax.broadcasted_iota(jnp.int32, g.shape, 1)
        for ee in range(num_experts):                   # static, prologue-only
            g_sc[ee] = jnp.sum(jnp.where(lane == ee, g, 0.0),
                               axis=-1, keepdims=True)  # (T, 1)

        acc_sc[...] = jnp.zeros_like(acc_sc)

    # ---- expert step (hot loop): one (T, D) x (D, D) matmul ----------------
    if resident_experts:
        w_e = we_ref[e]            # whole (E, D, D) bank resident in VMEM
    else:
        w_e = we_ref[0]            # streamed (D, D) slab for this grid step
    b_e = be_ref[e]                # (1, D), bias bank always resident (tiny)

    ye = jnp.dot(y_sc[...].astype(compute_dtype), w_e,
                 preferred_element_type=jnp.float32) + b_e      # (T, D) f32
    acc_sc[...] += g_sc[e] * ye

    # ---- epilogue: single lane-dense writeback at the last expert ----------
    @pl.when(e == num_experts - 1)
    def _epilogue():
        o_ref[0] = acc_sc[...].astype(o_ref.dtype)


# ----------------------------------------------------------------------------
# Wrapper
# ----------------------------------------------------------------------------
def _pick_seq_tile(seq_len, block_size, target_rows):
    """Largest multiple of block_size that divides seq_len and is <= target."""
    n_total = seq_len // block_size
    best = 1
    for n in range(1, n_total + 1):
        if n_total % n == 0 and n * block_size <= max(target_rows, block_size):
            best = n
    return best * block_size


def moe_transformer_forward(x, params, *, num_heads, num_experts, block_size,
                            eps=1e-5, compute_dtype=None, seq_tile=None,
                            target_tile_rows=256, resident_experts=None,
                            single_buffer_weights=True, approx_reciprocal=True):
    """Fused MoETransformer forward.

    Set compute_dtype=jnp.bfloat16 on v6e/v7x to halve the HBM weight stream
    and feed the MXU bf16 inputs (softmax / LayerNorm / accumulation stay f32).
    """
    B, S, D = x.shape
    assert S % block_size == 0, "sequence length must be divisible by block_size"
    assert D % num_heads == 0
    E = num_experts
    if compute_dtype is None:
        compute_dtype = x.dtype
    compute_dtype = jnp.dtype(compute_dtype)

    if seq_tile is None:
        seq_tile = _pick_seq_tile(S, block_size, target_tile_rows)
    assert S % seq_tile == 0 and seq_tile % block_size == 0
    n_tiles = S // seq_tile

    w_item = compute_dtype.itemsize
    x_item = jnp.dtype(x.dtype).itemsize

    try:
        vmem_cap = int(pltpu.get_tpu_info().vmem_capacity_bytes)
    except Exception:
        vmem_cap = 64 * 1024 * 1024          # conservative (v7x per-core VMEM)

    # Resident expert bank if it fits comfortably (easy on v5e/v6e 128 MiB,
    # tight on v7x 64 MiB); otherwise stream one (D, D) slab per expert step.
    if resident_experts is None:
        resident_experts = (E * D * D * w_item) <= vmem_cap // 3

    # Weights cast to compute_dtype in the wrapper (no in-kernel casts, halved
    # DMA in bf16).  Biases / LN params stay f32 (tiny, keeps math exact).
    wqkv = jnp.concatenate([params["wq"], params["wk"], params["wv"]],
                           axis=1).astype(compute_dtype)
    bqkv = jnp.concatenate([params["bq"], params["bk"], params["bv"]],
                           axis=1).astype(jnp.float32)
    wo = params["wo"].astype(compute_dtype)
    wg = params["wg"].astype(compute_dtype)
    we = params["we"].astype(compute_dtype)
    bo = params["bo"].astype(jnp.float32)
    ln_g = params["ln_g"].astype(jnp.float32)
    ln_b = params["ln_b"].astype(jnp.float32)
    be = params["be"].astype(jnp.float32)

    pipe1 = pl.Buffered(1) if single_buffer_weights else None

    def const_spec(shape):
        n = len(shape)

        def idx(b, k, e):
            return (0,) * n

        if pipe1 is None:
            return pl.BlockSpec(shape, idx)
        return pl.BlockSpec(shape, idx, pipeline_mode=pipe1)

    xspec = pl.BlockSpec((1, seq_tile, D), lambda b, k, e: (b, k, 0))
    wqkv_spec = const_spec((D, 3 * D))
    bqkv_spec = const_spec((1, 3 * D))
    wo_spec = const_spec((D, D))
    bo_spec = const_spec((1, D))
    ln_spec = const_spec((1, D))
    wg_spec = const_spec((D, E))
    be_spec = const_spec((E, 1, D))                        # always resident
    if resident_experts:
        we_spec = const_spec((E, D, D))                    # DMA'd once
    else:
        we_spec = pl.BlockSpec((1, D, D), lambda b, k, e: (e, 0, 0))  # streamed

    # Explicit VMEM budget (blocks + buffering + scratch) with headroom.
    nbuf_w = 1 if single_buffer_weights else 2
    small_w = (D * 3 * D + D * D + D * E) * w_item
    small_b = (3 * D + D + 2 * D + E * D) * 4
    we_bytes = (nbuf_w * E * D * D if resident_experts else 2 * D * D) * w_item
    io_bytes = 2 * 2 * seq_tile * D * x_item               # x + out, dbl buffered
    scratch_bytes = 4 * (2 * seq_tile * D + E * seq_tile * 128)
    needed = io_bytes + nbuf_w * (small_w + small_b) + we_bytes + scratch_bytes
    vmem_limit = int(min(vmem_cap,
                         max(needed * 1.5 + (8 << 20), 32 << 20)))

    kernel = functools.partial(
        _fused_kernel, num_heads=num_heads, num_experts=E,
        block_size=block_size, eps=eps, compute_dtype=compute_dtype,
        resident_experts=resident_experts, approx_recip=approx_reciprocal)

    return pl.pallas_call(
        kernel,
        out_shape=jax.ShapeDtypeStruct((B, S, D), x.dtype),
        grid=(B, n_tiles, E),
        in_specs=[xspec, wqkv_spec, bqkv_spec, wo_spec, bo_spec,
                  ln_spec, ln_spec, wg_spec, we_spec, be_spec],
        out_specs=pl.BlockSpec((1, seq_tile, D), lambda b, k, e: (b, k, 0)),
        scratch_shapes=[
            pltpu.VMEM((seq_tile, D), jnp.float32),        # y (LN output)
            pltpu.VMEM((E, seq_tile, 1), jnp.float32),     # gate probs (expert-major)
            pltpu.VMEM((seq_tile, D), jnp.float32),        # MoE accumulator
        ],
        compiler_params=pltpu.CompilerParams(
            dimension_semantics=("parallel", "parallel", "arbitrary"),
            vmem_limit_bytes=vmem_limit),
    )(x, wqkv, bqkv, wo, bo, ln_g, ln_b, wg, we, be)


def init_params(key, embed_dim, num_experts):
    D, E = embed_dim, num_experts
    ks = jax.random.split(key, 8)
    s = 0.02
    return {
        "wq": jax.random.normal(ks[0], (D, D), jnp.float32) * s,
        "wk": jax.random.normal(ks[1], (D, D), jnp.float32) * s,
        "wv": jax.random.normal(ks[2], (D, D), jnp.float32) * s,
        "wo": jax.random.normal(ks[3], (D, D), jnp.float32) * s,
        "bq": jnp.zeros((1, D), jnp.float32),
        "bk": jnp.zeros((1, D), jnp.float32),
        "bv": jnp.zeros((1, D), jnp.float32),
        "bo": jnp.zeros((1, D), jnp.float32),
        "ln_g": jnp.ones((1, D), jnp.float32),
        "ln_b": jnp.zeros((1, D), jnp.float32),
        "wg": jax.random.normal(ks[4], (D, E), jnp.float32) * s,
        "we": jax.random.normal(ks[5], (E, D, D), jnp.float32) * s,
        "be": jax.random.normal(ks[6], (E, 1, D), jnp.float32) * s,
    }


# ----------------------------------------------------------------------------
# Pure-JAX reference (same math) for a correctness check
# ----------------------------------------------------------------------------
def reference(x, p, *, num_heads, num_experts, block_size, eps=1e-5):
    B, S, D = x.shape
    H, hd = num_heads, D // num_heads
    nb = S // block_size
    xb = x.reshape(B, nb, block_size, D)
    q = xb @ p["wq"] + p["bq"]
    k = xb @ p["wk"] + p["bk"]
    v = xb @ p["wv"] + p["bv"]
    q = q.reshape(B, nb, block_size, H, hd)
    k = k.reshape(B, nb, block_size, H, hd)
    v = v.reshape(B, nb, block_size, H, hd)
    s = jnp.einsum("bnqhd,bnkhd->bnhqk", q, k) / jnp.sqrt(jnp.float32(hd))
    pr = jax.nn.softmax(s, axis=-1)
    o = jnp.einsum("bnhqk,bnkhd->bnqhd", pr, v).reshape(B, nb, block_size, D)
    attn = (o @ p["wo"] + p["bo"]).reshape(B, S, D)
    y = attn + x
    mu = jnp.mean(y, -1, keepdims=True)
    var = jnp.mean((y - mu) ** 2, -1, keepdims=True)
    y = (y - mu) * jax.lax.rsqrt(var + eps) * p["ln_g"] + p["ln_b"]
    gate = jax.nn.softmax(y @ p["wg"], axis=-1)                       # (B,S,E)
    ye = jnp.einsum("bsd,edf->besf", y, p["we"]) + p["be"][None]      # (B,E,S,D)
    return jnp.einsum("bse,besd->bsd", gate, ye)


if __name__ == "__main__":
    # Small config consistent with the module (lane-dense embed dim).
    B, S, D, H, E, BLK = 2, 16, 128, 4, 4, 8
    key = jax.random.PRNGKey(0)
    kx, kp = jax.random.split(key)
    x = jax.random.normal(kx, (B, S, D), jnp.float32)
    params = init_params(kp, D, E)

    def run(compute_dtype, single_buffer):
        return moe_transformer_forward(
            x, params, num_heads=H, num_experts=E, block_size=BLK,
            compute_dtype=compute_dtype,
            single_buffer_weights=single_buffer)

    # Single-buffering constant-index weights (pl.Buffered(1)) is a pure VMEM
    # optimization; fall back gracefully if this JAX build rejects pipeline_mode.
    try:
        out = jax.block_until_ready(run(jnp.float32, True))
        single_buffer_ok = True
    except Exception:
        out = jax.block_until_ready(run(jnp.float32, False))
        single_buffer_ok = False

    ref = reference(x, params, num_heads=H, num_experts=E, block_size=BLK)
    assert out.shape == (B, S, D)
    assert jnp.allclose(out, ref, rtol=2e-3, atol=2e-3), "f32 mismatch vs reference"

    # bf16 weight-streaming path (halves HBM weight traffic at real sizes);
    # activations / softmax / LN / accumulation stay f32 -> loose tolerance.
    out_bf16 = jax.block_until_ready(run(jnp.bfloat16, single_buffer_ok))
    assert out_bf16.shape == (B, S, D)
    assert bool(jnp.all(jnp.isfinite(out_bf16)))
    assert jnp.allclose(out_bf16, ref, rtol=7.5e-2, atol=7.5e-2), \
        "bf16 mismatch vs reference"

    print("KERNEL_OK")
</pallas_src>

<mosaic_0001>
module attributes {stable_mosaic.version = 11 : i64} {
  func.func @_fused_kernel(%arg0: i32, %arg1: i32, %arg2: i32, %arg3: memref<1x16x128xf32, #tpu.memory_space<vmem>>, %arg4: memref<128x384xf32, #tpu.memory_space<vmem>>, %arg5: memref<1x384xf32, #tpu.memory_space<vmem>>, %arg6: memref<128x128xf32, #tpu.memory_space<vmem>>, %arg7: memref<1x128xf32, #tpu.memory_space<vmem>>, %arg8: memref<1x128xf32, #tpu.memory_space<vmem>>, %arg9: memref<1x128xf32, #tpu.memory_space<vmem>>, %arg10: memref<128x4xf32, #tpu.memory_space<vmem>>, %arg11: memref<4x128x128xf32, #tpu.memory_space<vmem>>, %arg12: memref<4x1x128xf32, #tpu.memory_space<vmem>>, %arg13: memref<1x16x128xf32, #tpu.memory_space<vmem>>, %arg14: memref<16x128xf32, #tpu.memory_space<vmem>>, %arg15: memref<4x16x1xf32, #tpu.memory_space<vmem>>, %arg16: memref<16x128xf32, #tpu.memory_space<vmem>>) attributes {dimension_semantics = [#tpu.dimension_semantics<parallel>, #tpu.dimension_semantics<parallel>, #tpu.dimension_semantics<arbitrary>], iteration_bounds = array<i64: 2, 1, 4>, scalar_prefetch = 0 : i64, scratch_operands = 3 : i64, tpu.core_type = #tpu.core_type<tc>, window_params = [{transform_indices = @transform_0, window_bounds = array<i64: 1, 16, 128>}, {pipeline_mode = #tpu.pipeline_mode<synchronous>, transform_indices = @transform_1, window_bounds = array<i64: 128, 384>}, {pipeline_mode = #tpu.pipeline_mode<synchronous>, transform_indices = @transform_2, window_bounds = array<i64: 1, 384>}, {pipeline_mode = #tpu.pipeline_mode<synchronous>, transform_indices = @transform_3, window_bounds = array<i64: 128, 128>}, {pipeline_mode = #tpu.pipeline_mode<synchronous>, transform_indices = @transform_4, window_bounds = array<i64: 1, 128>}, {pipeline_mode = #tpu.pipeline_mode<synchronous>, transform_indices = @transform_5, window_bounds = array<i64: 1, 128>}, {pipeline_mode = #tpu.pipeline_mode<synchronous>, transform_indices = @transform_6, window_bounds = array<i64: 1, 128>}, {pipeline_mode = #tpu.pipeline_mode<synchronous>, transform_indices = @transform_7, window_bounds = array<i64: 128, 4>}, {pipeline_mode = #tpu.pipeline_mode<synchronous>, transform_indices = @transform_8, window_bounds = array<i64: 4, 128, 128>}, {pipeline_mode = #tpu.pipeline_mode<synchronous>, transform_indices = @transform_9, window_bounds = array<i64: 4, 1, 128>}, {transform_indices = @transform_10, window_bounds = array<i64: 1, 16, 128>}]} {
    %c0_i32 = arith.constant 0 : i32
    %0 = arith.cmpi eq, %arg2, %c0_i32 : i32
    %1 = arith.extui %0 : i1 to i32
    %c0_i32_0 = arith.constant 0 : i32
    %2 = arith.cmpi ne, %1, %c0_i32_0 : i32
    scf.if %2 {
      %c0_13 = arith.constant 0 : index
      %c0_14 = arith.constant 0 : index
      %c0_15 = arith.constant 0 : index
      %24 = vector.load %arg3[%c0_13, %c0_14, %c0_15] : memref<1x16x128xf32, #tpu.memory_space<vmem>>, vector<1x16x128xf32>
      %25 = vector.shape_cast %24 : vector<1x16x128xf32> to vector<16x128xf32>
      %c0_16 = arith.constant 0 : index
      %c0_17 = arith.constant 0 : index
      %26 = vector.load %arg4[%c0_16, %c0_17] : memref<128x384xf32, #tpu.memory_space<vmem>>, vector<128x384xf32>
      %cst_18 = arith.constant dense<0.000000e+00> : vector<16x384xf32>
      %27 = tpu.matmul %25, %26, %cst_18 {dimension_numbers = #tpu.dot_dimension_numbers<[1], [0], [0], [1], [0, 0, 1, 1], [], []>} : vector<16x128xf32>, vector<128x384xf32>, vector<16x384xf32> -> vector<16x384xf32>
      %c0_19 = arith.constant 0 : index
      %c0_20 = arith.constant 0 : index
      %28 = vector.load %arg5[%c0_19, %c0_20] : memref<1x384xf32, #tpu.memory_space<vmem>>, vector<1x384xf32>
      %29 = vector.broadcast %28 : vector<1x384xf32> to vector<16x384xf32>
      %30 = arith.addf %27, %29 : vector<16x384xf32>
      %31 = vector.extract_strided_slice %30 {offsets = [0, 0], sizes = [8, 128], strides = [1, 1]} : vector<16x384xf32> to vector<8x128xf32>
      %32 = vector.extract_strided_slice %30 {offsets = [0, 128], sizes = [8, 128], strides = [1, 1]} : vector<16x384xf32> to vector<8x128xf32>
      %33 = vector.extract_strided_slice %30 {offsets = [0, 256], sizes = [8, 128], strides = [1, 1]} : vector<16x384xf32> to vector<8x128xf32>
      %34 = vector.shape_cast %31 : vector<8x128xf32> to vector<8x4x32xf32>
      %35 = tpu.transpose %34, [1, 0, 2] : vector<8x4x32xf32> -> vector<4x8x32xf32>
      %36 = vector.shape_cast %32 : vector<8x128xf32> to vector<8x4x32xf32>
      %37 = tpu.transpose %36, [1, 0, 2] : vector<8x4x32xf32> -> vector<4x8x32xf32>
      %38 = vector.shape_cast %33 : vector<8x128xf32> to vector<8x4x32xf32>
      %39 = tpu.transpose %38, [1, 0, 2] : vector<8x4x32xf32> -> vector<4x8x32xf32>
      "tpu.trace_start"() <{level = 10 : i32, message = "hqd,hkd->hqk"}> : () -> ()
      %cst_21 = arith.constant dense<0.000000e+00> : vector<4x8x8xf32>
      %40 = tpu.matmul %35, %37, %cst_21 {dimension_numbers = #tpu.dot_dimension_numbers<[2], [2], [1], [1], [0, 0, 0, 1, 1, 1], [0], [0]>} : vector<4x8x32xf32>, vector<4x8x32xf32>, vector<4x8x8xf32> -> vector<4x8x8xf32>
      "tpu.trace_stop"() : () -> ()
      %cst_22 = arith.constant 0.176776692 : f32
      %41 = vector.broadcast %cst_22 : f32 to vector<4x8x8xf32>
      %42 = arith.mulf %40, %41 : vector<4x8x8xf32>
      %cst_23 = arith.constant dense<0xFF800000> : vector<4x8xf32>
      %43 = vector.multi_reduction <maximumf>, %42, %cst_23 [2] : vector<4x8x8xf32> to vector<4x8xf32>
      %44 = vector.shape_cast %43 : vector<4x8xf32> to vector<4x8x1xf32>
      %45 = vector.broadcast %44 : vector<4x8x1xf32> to vector<4x8x8xf32>
      %46 = arith.subf %42, %45 : vector<4x8x8xf32>
      %47 = math.exp %46 : vector<4x8x8xf32>
      %cst_24 = arith.constant dense<0.000000e+00> : vector<4x8xf32>
      %48 = vector.multi_reduction <add>, %47, %cst_24 [2] : vector<4x8x8xf32> to vector<4x8xf32>
      %49 = vector.shape_cast %48 : vector<4x8xf32> to vector<4x8x1xf32>
      %50 = tpu.reciprocal %49 {approx = true} : vector<4x8x1xf32> -> vector<4x8x1xf32>
      %51 = vector.broadcast %50 : vector<4x8x1xf32> to vector<4x8x8xf32>
      %52 = arith.mulf %47, %51 : vector<4x8x8xf32>
      "tpu.trace_start"() <{level = 10 : i32, message = "hqk,hkd->hqd"}> : () -> ()
      %cst_25 = arith.constant dense<0.000000e+00> : vector<4x8x32xf32>
      %53 = tpu.matmul %52, %39, %cst_25 {dimension_numbers = #tpu.dot_dimension_numbers<[2], [1], [1], [2], [0, 0, 0, 1, 1, 2], [0], [0]>} : vector<4x8x8xf32>, vector<4x8x32xf32>, vector<4x8x32xf32> -> vector<4x8x32xf32>
      "tpu.trace_stop"() : () -> ()
      %54 = tpu.transpose %53, [1, 0, 2] : vector<4x8x32xf32> -> vector<8x4x32xf32>
      %55 = vector.shape_cast %54 : vector<8x4x32xf32> to vector<8x128xf32>
      %56 = vector.extract_strided_slice %30 {offsets = [8, 0], sizes = [8, 128], strides = [1, 1]} : vector<16x384xf32> to vector<8x128xf32>
      %57 = vector.extract_strided_slice %30 {offsets = [8, 128], sizes = [8, 128], strides = [1, 1]} : vector<16x384xf32> to vector<8x128xf32>
      %58 = vector.extract_strided_slice %30 {offsets = [8, 256], sizes = [8, 128], strides = [1, 1]} : vector<16x384xf32> to vector<8x128xf32>
      %59 = vector.shape_cast %56 : vector<8x128xf32> to vector<8x4x32xf32>
      %60 = tpu.transpose %59, [1, 0, 2] : vector<8x4x32xf32> -> vector<4x8x32xf32>
      %61 = vector.shape_cast %57 : vector<8x128xf32> to vector<8x4x32xf32>
      %62 = tpu.transpose %61, [1, 0, 2] : vector<8x4x32xf32> -> vector<4x8x32xf32>
      %63 = vector.shape_cast %58 : vector<8x128xf32> to vector<8x4x32xf32>
      %64 = tpu.transpose %63, [1, 0, 2] : vector<8x4x32xf32> -> vector<4x8x32xf32>
      "tpu.trace_start"() <{level = 10 : i32, message = "hqd,hkd->hqk"}> : () -> ()
      %cst_26 = arith.constant dense<0.000000e+00> : vector<4x8x8xf32>
      %65 = tpu.matmul %60, %62, %cst_26 {dimension_numbers = #tpu.dot_dimension_numbers<[2], [2], [1], [1], [0, 0, 0, 1, 1, 1], [0], [0]>} : vector<4x8x32xf32>, vector<4x8x32xf32>, vector<4x8x8xf32> -> vector<4x8x8xf32>
      "tpu.trace_stop"() : () -> ()
      %cst_27 = arith.constant 0.176776692 : f32
      %66 = vector.broadcast %cst_27 : f32 to vector<4x8x8xf32>
      %67 = arith.mulf %65, %66 : vector<4x8x8xf32>
      %cst_28 = arith.constant dense<0xFF800000> : vector<4x8xf32>
      %68 = vector.multi_reduction <maximumf>, %67, %cst_28 [2] : vector<4x8x8xf32> to vector<4x8xf32>
      %69 = vector.shape_cast %68 : vector<4x8xf32> to vector<4x8x1xf32>
      %70 = vector.broadcast %69 : vector<4x8x1xf32> to vector<4x8x8xf32>
      %71 = arith.subf %67, %70 : vector<4x8x8xf32>
      %72 = math.exp %71 : vector<4x8x8xf32>
      %cst_29 = arith.constant dense<0.000000e+00> : vector<4x8xf32>
      %73 = vector.multi_reduction <add>, %72, %cst_29 [2] : vector<4x8x8xf32> to vector<4x8xf32>
      %74 = vector.shape_cast %73 : vector<4x8xf32> to vector<4x8x1xf32>
      %75 = tpu.reciprocal %74 {approx = true} : vector<4x8x1xf32> -> vector<4x8x1xf32>
      %76 = vector.broadcast %75 : vector<4x8x1xf32> to vector<4x8x8xf32>
      %77 = arith.mulf %72, %76 : vector<4x8x8xf32>
      "tpu.trace_start"() <{level = 10 : i32, message = "hqk,hkd->hqd"}> : () -> ()
      %cst_30 = arith.constant dense<0.000000e+00> : vector<4x8x32xf32>
      %78 = tpu.matmul %77, %64, %cst_30 {dimension_numbers = #tpu.dot_dimension_numbers<[2], [1], [1], [2], [0, 0, 0, 1, 1, 2], [0], [0]>} : vector<4x8x8xf32>, vector<4x8x32xf32>, vector<4x8x32xf32> -> vector<4x8x32xf32>
      "tpu.trace_stop"() : () -> ()
      %79 = tpu.transpose %78, [1, 0, 2] : vector<4x8x32xf32> -> vector<8x4x32xf32>
      %80 = vector.shape_cast %79 : vector<8x4x32xf32> to vector<8x128xf32>
      %81 = tpu.concatenate %55, %80 in 0 : vector<8x128xf32>, vector<8x128xf32> -> vector<16x128xf32>
      %c0_31 = arith.constant 0 : index
      %c0_32 = arith.constant 0 : index
      %82 = vector.load %arg6[%c0_31, %c0_32] : memref<128x128xf32, #tpu.memory_space<vmem>>, vector<128x128xf32>
      %cst_33 = arith.constant dense<0.000000e+00> : vector<16x128xf32>
      %83 = tpu.matmul %81, %82, %cst_33 {dimension_numbers = #tpu.dot_dimension_numbers<[1], [0], [0], [1], [0, 0, 1, 1], [], []>} : vector<16x128xf32>, vector<128x128xf32>, vector<16x128xf32> -> vector<16x128xf32>
      %c0_34 = arith.constant 0 : index
      %c0_35 = arith.constant 0 : index
      %84 = vector.load %arg7[%c0_34, %c0_35] : memref<1x128xf32, #tpu.memory_space<vmem>>, vector<1x128xf32>
      %85 = vector.broadcast %84 : vector<1x128xf32> to vector<16x128xf32>
      %86 = arith.addf %83, %85 : vector<16x128xf32>
      %87 = arith.addf %86, %25 : vector<16x128xf32>
      %cst_36 = arith.constant dense<0.000000e+00> : vector<16xf32>
      %88 = vector.multi_reduction <add>, %87, %cst_36 [1] : vector<16x128xf32> to vector<16xf32>
      %89 = vector.shape_cast %88 : vector<16xf32> to vector<16x1xf32>
      %cst_37 = arith.constant 1.280000e+02 : f32
      %90 = vector.broadcast %cst_37 : f32 to vector<16x1xf32>
      %91 = arith.divf %89, %90 : vector<16x1xf32>
      %92 = vector.broadcast %91 : vector<16x1xf32> to vector<16x128xf32>
      %93 = arith.subf %87, %92 : vector<16x128xf32>
      %94 = arith.mulf %93, %93 : vector<16x128xf32>
      %cst_38 = arith.constant dense<0.000000e+00> : vector<16xf32>
      %95 = vector.multi_reduction <add>, %94, %cst_38 [1] : vector<16x128xf32> to vector<16xf32>
      %96 = vector.shape_cast %95 : vector<16xf32> to vector<16x1xf32>
      %cst_39 = arith.constant 1.280000e+02 : f32
      %97 = vector.broadcast %cst_39 : f32 to vector<16x1xf32>
      %98 = arith.divf %96, %97 : vector<16x1xf32>
      %99 = vector.broadcast %91 : vector<16x1xf32> to vector<16x128xf32>
      %100 = arith.subf %87, %99 : vector<16x128xf32>
      %cst_40 = arith.constant 9.99999974E-6 : f32
      %101 = vector.broadcast %cst_40 : f32 to vector<16x1xf32>
      %102 = arith.addf %98, %101 : vector<16x1xf32>
      %103 = math.rsqrt %102 : vector<16x1xf32>
      %104 = vector.broadcast %103 : vector<16x1xf32> to vector<16x128xf32>
      %105 = arith.mulf %100, %104 : vector<16x128xf32>
      %c0_41 = arith.constant 0 : index
      %c0_42 = arith.constant 0 : index
      %106 = vector.load %arg8[%c0_41, %c0_42] : memref<1x128xf32, #tpu.memory_space<vmem>>, vector<1x128xf32>
      %107 = vector.broadcast %106 : vector<1x128xf32> to vector<16x128xf32>
      %108 = arith.mulf %105, %107 : vector<16x128xf32>
      %c0_43 = arith.constant 0 : index
      %c0_44 = arith.constant 0 : index
      %109 = vector.load %arg9[%c0_43, %c0_44] : memref<1x128xf32, #tpu.memory_space<vmem>>, vector<1x128xf32>
      %110 = vector.broadcast %109 : vector<1x128xf32> to vector<16x128xf32>
      %111 = arith.addf %108, %110 : vector<16x128xf32>
      %c0_45 = arith.constant 0 : index
      %c0_46 = arith.constant 0 : index
      %112 = vector.load %arg14[%c0_45, %c0_46] : memref<16x128xf32, #tpu.memory_space<vmem>>, vector<16x128xf32>
      tpu.vector_store %arg14[%c0_45, %c0_46], %111 {strides = array<i32>} : memref<16x128xf32, #tpu.memory_space<vmem>>, vector<16x128xf32>,
      %c0_47 = arith.constant 0 : index
      %c0_48 = arith.constant 0 : index
      %113 = vector.load %arg10[%c0_47, %c0_48] : memref<128x4xf32, #tpu.memory_space<vmem>>, vector<128x4xf32>
      %cst_49 = arith.constant dense<0.000000e+00> : vector<16x4xf32>
      %114 = tpu.matmul %111, %113, %cst_49 {dimension_numbers = #tpu.dot_dimension_numbers<[1], [0], [0], [1], [0, 0, 1, 1], [], []>} : vector<16x128xf32>, vector<128x4xf32>, vector<16x4xf32> -> vector<16x4xf32>
      %cst_50 = arith.constant dense<0xFF800000> : vector<16xf32>
      %115 = vector.multi_reduction <maximumf>, %114, %cst_50 [1] : vector<16x4xf32> to vector<16xf32>
      %116 = vector.shape_cast %115 : vector<16xf32> to vector<16x1xf32>
      %117 = vector.broadcast %116 : vector<16x1xf32> to vector<16x4xf32>
      %118 = arith.subf %114, %117 : vector<16x4xf32>
      %119 = math.exp %118 : vector<16x4xf32>
      %cst_51 = arith.constant dense<0.000000e+00> : vector<16xf32>
      %120 = vector.multi_reduction <add>, %119, %cst_51 [1] : vector<16x4xf32> to vector<16xf32>
      %121 = vector.shape_cast %120 : vector<16xf32> to vector<16x1xf32>
      %122 = tpu.reciprocal %121 {approx = true} : vector<16x1xf32> -> vector<16x1xf32>
      %123 = vector.broadcast %122 : vector<16x1xf32> to vector<16x4xf32>
      %124 = arith.mulf %119, %123 : vector<16x4xf32>
      %125 = tpu.iota {dimensions = array<i32: 1>} : vector<16x4xi32>
      %c0_i32_52 = arith.constant 0 : i32
      %126 = vector.broadcast %c0_i32_52 : i32 to vector<16x4xi32>
      %127 = arith.cmpi eq, %125, %126 : vector<16x4xi32>
      %cst_53 = arith.constant 0.000000e+00 : f32
      %128 = vector.broadcast %cst_53 : f32 to vector<16x4xf32>
      %129 = arith.select %127, %124, %128 : vector<16x4xi1>, vector<16x4xf32>
      %cst_54 = arith.constant dense<0.000000e+00> : vector<16xf32>
      %130 = vector.multi_reduction <add>, %129, %cst_54 [1] : vector<16x4xf32> to vector<16xf32>
      %131 = vector.shape_cast %130 : vector<16xf32> to vector<16x1xf32>
      %c0_55 = arith.constant 0 : index
      %c0_56 = arith.constant 0 : index
      %c0_57 = arith.constant 0 : index
      %132 = vector.load %arg15[%c0_55, %c0_56, %c0_57] : memref<4x16x1xf32, #tpu.memory_space<vmem>>, vector<1x16x1xf32>
      %133 = vector.shape_cast %132 : vector<1x16x1xf32> to vector<16x1xf32>
      %134 = vector.shape_cast %131 : vector<16x1xf32> to vector<1x16x1xf32>
      tpu.vector_store %arg15[%c0_55, %c0_56, %c0_57], %134 {strides = array<i32>} : memref<4x16x1xf32, #tpu.memory_space<vmem>>, vector<1x16x1xf32>,
      %c1_i32 = arith.constant 1 : i32
      %135 = vector.broadcast %c1_i32 : i32 to vector<16x4xi32>
      %136 = arith.cmpi eq, %125, %135 : vector<16x4xi32>
      %cst_58 = arith.constant 0.000000e+00 : f32
      %137 = vector.broadcast %cst_58 : f32 to vector<16x4xf32>
      %138 = arith.select %136, %124, %137 : vector<16x4xi1>, vector<16x4xf32>
      %cst_59 = arith.constant dense<0.000000e+00> : vector<16xf32>
      %139 = vector.multi_reduction <add>, %138, %cst_59 [1] : vector<16x4xf32> to vector<16xf32>
      %140 = vector.shape_cast %139 : vector<16xf32> to vector<16x1xf32>
      %c1 = arith.constant 1 : index
      %c0_60 = arith.constant 0 : index
      %c0_61 = arith.constant 0 : index
      %141 = vector.load %arg15[%c1, %c0_60, %c0_61] : memref<4x16x1xf32, #tpu.memory_space<vmem>>, vector<1x16x1xf32>
      %142 = vector.shape_cast %141 : vector<1x16x1xf32> to vector<16x1xf32>
      %143 = vector.shape_cast %140 : vector<16x1xf32> to vector<1x16x1xf32>
      tpu.vector_store %arg15[%c1, %c0_60, %c0_61], %143 {strides = array<i32>} : memref<4x16x1xf32, #tpu.memory_space<vmem>>, vector<1x16x1xf32>,
      %c2_i32 = arith.constant 2 : i32
      %144 = vector.broadcast %c2_i32 : i32 to vector<16x4xi32>
      %145 = arith.cmpi eq, %125, %144 : vector<16x4xi32>
      %cst_62 = arith.constant 0.000000e+00 : f32
      %146 = vector.broadcast %cst_62 : f32 to vector<16x4xf32>
      %147 = arith.select %145, %124, %146 : vector<16x4xi1>, vector<16x4xf32>
      %cst_63 = arith.constant dense<0.000000e+00> : vector<16xf32>
      %148 = vector.multi_reduction <add>, %147, %cst_63 [1] : vector<16x4xf32> to vector<16xf32>
      %149 = vector.shape_cast %148 : vector<16xf32> to vector<16x1xf32>
      %c2 = arith.constant 2 : index
      %c0_64 = arith.constant 0 : index
      %c0_65 = arith.constant 0 : index
      %150 = vector.load %arg15[%c2, %c0_64, %c0_65] : memref<4x16x1xf32, #tpu.memory_space<vmem>>, vector<1x16x1xf32>
      %151 = vector.shape_cast %150 : vector<1x16x1xf32> to vector<16x1xf32>
      %152 = vector.shape_cast %149 : vector<16x1xf32> to vector<1x16x1xf32>
      tpu.vector_store %arg15[%c2, %c0_64, %c0_65], %152 {strides = array<i32>} : memref<4x16x1xf32, #tpu.memory_space<vmem>>, vector<1x16x1xf32>,
      %c3_i32_66 = arith.constant 3 : i32
      %153 = vector.broadcast %c3_i32_66 : i32 to vector<16x4xi32>
      %154 = arith.cmpi eq, %125, %153 : vector<16x4xi32>
      %cst_67 = arith.constant 0.000000e+00 : f32
      %155 = vector.broadcast %cst_67 : f32 to vector<16x4xf32>
      %156 = arith.select %154, %124, %155 : vector<16x4xi1>, vector<16x4xf32>
      %cst_68 = arith.constant dense<0.000000e+00> : vector<16xf32>
      %157 = vector.multi_reduction <add>, %156, %cst_68 [1] : vector<16x4xf32> to vector<16xf32>
      %158 = vector.shape_cast %157 : vector<16xf32> to vector<16x1xf32>
      %c3 = arith.constant 3 : index
      %c0_69 = arith.constant 0 : index
      %c0_70 = arith.constant 0 : index
      %159 = vector.load %arg15[%c3, %c0_69, %c0_70] : memref<4x16x1xf32, #tpu.memory_space<vmem>>, vector<1x16x1xf32>
      %160 = vector.shape_cast %159 : vector<1x16x1xf32> to vector<16x1xf32>
      %161 = vector.shape_cast %158 : vector<16x1xf32> to vector<1x16x1xf32>
      tpu.vector_store %arg15[%c3, %c0_69, %c0_70], %161 {strides = array<i32>} : memref<4x16x1xf32, #tpu.memory_space<vmem>>, vector<1x16x1xf32>,
      %cst_71 = arith.constant 0.000000e+00 : f32
      %162 = vector.broadcast %cst_71 : f32 to vector<16x128xf32>
      %c0_72 = arith.constant 0 : index
      %c0_73 = arith.constant 0 : index
      %163 = vector.load %arg16[%c0_72, %c0_73] : memref<16x128xf32, #tpu.memory_space<vmem>>, vector<16x128xf32>
      tpu.vector_store %arg16[%c0_72, %c0_73], %162 {strides = array<i32>} : memref<16x128xf32, #tpu.memory_space<vmem>>, vector<16x128xf32>,
    } else {
    }
    %3 = arith.index_cast %arg2 : i32 to index
    %c0 = arith.constant 0 : index
    %c0_1 = arith.constant 0 : index
    %4 = vector.load %arg11[%3, %c0, %c0_1] : memref<4x128x128xf32, #tpu.memory_space<vmem>>, vector<1x128x128xf32>
    %5 = vector.shape_cast %4 : vector<1x128x128xf32> to vector<128x128xf32>
    %6 = arith.index_cast %arg2 : i32 to index
    %c0_2 = arith.constant 0 : index
    %c0_3 = arith.constant 0 : index
    %7 = vector.load %arg12[%6, %c0_2, %c0_3] : memref<4x1x128xf32, #tpu.memory_space<vmem>>, vector<1x1x128xf32>
    %8 = vector.shape_cast %7 : vector<1x1x128xf32> to vector<1x128xf32>
    %c0_4 = arith.constant 0 : index
    %c0_5 = arith.constant 0 : index
    %9 = vector.load %arg14[%c0_4, %c0_5] : memref<16x128xf32, #tpu.memory_space<vmem>>, vector<16x128xf32>
    %cst = arith.constant dense<0.000000e+00> : vector<16x128xf32>
    %10 = tpu.matmul %9, %5, %cst {dimension_numbers = #tpu.dot_dimension_numbers<[1], [0], [0], [1], [0, 0, 1, 1], [], []>} : vector<16x128xf32>, vector<128x128xf32>, vector<16x128xf32> -> vector<16x128xf32>
    %11 = vector.broadcast %8 : vector<1x128xf32> to vector<16x128xf32>
    %12 = arith.addf %10, %11 : vector<16x128xf32>
    %c0_6 = arith.constant 0 : index
    %c0_7 = arith.constant 0 : index
    %13 = vector.load %arg16[%c0_6, %c0_7] : memref<16x128xf32, #tpu.memory_space<vmem>>, vector<16x128xf32>
    %14 = arith.index_cast %arg2 : i32 to index
    %c0_8 = arith.constant 0 : index
    %c0_9 = arith.constant 0 : index
    %15 = vector.load %arg15[%14, %c0_8, %c0_9] : memref<4x16x1xf32, #tpu.memory_space<vmem>>, vector<1x16x1xf32>
    %16 = vector.shape_cast %15 : vector<1x16x1xf32> to vector<16x1xf32>
    %17 = vector.broadcast %16 : vector<16x1xf32> to vector<16x128xf32>
    %18 = arith.mulf %17, %12 : vector<16x128xf32>
    %19 = arith.addf %13, %18 : vector<16x128xf32>
    %c0_10 = arith.constant 0 : index
    %c0_11 = arith.constant 0 : index
    %20 = vector.load %arg16[%c0_10, %c0_11] : memref<16x128xf32, #tpu.memory_space<vmem>>, vector<16x128xf32>
    tpu.vector_store %arg16[%c0_10, %c0_11], %19 {strides = array<i32>} : memref<16x128xf32, #tpu.memory_space<vmem>>, vector<16x128xf32>,
    %c3_i32 = arith.constant 3 : i32
    %21 = arith.cmpi eq, %arg2, %c3_i32 : i32
    %22 = arith.extui %21 : i1 to i32
    %c0_i32_12 = arith.constant 0 : i32
    %23 = arith.cmpi ne, %22, %c0_i32_12 : i32
    scf.if %23 {
      %c0_13 = arith.constant 0 : index
      %c0_14 = arith.constant 0 : index
      %24 = vector.load %arg16[%c0_13, %c0_14] : memref<16x128xf32, #tpu.memory_space<vmem>>, vector<16x128xf32>
      %c0_15 = arith.constant 0 : index
      %c0_16 = arith.constant 0 : index
      %c0_17 = arith.constant 0 : index
      %25 = vector.load %arg13[%c0_15, %c0_16, %c0_17] : memref<1x16x128xf32, #tpu.memory_space<vmem>>, vector<1x16x128xf32>
      %26 = vector.shape_cast %25 : vector<1x16x128xf32> to vector<16x128xf32>
      %27 = vector.shape_cast %24 : vector<16x128xf32> to vector<1x16x128xf32>
      tpu.vector_store %arg13[%c0_15, %c0_16, %c0_17], %27 {strides = array<i32>} : memref<1x16x128xf32, #tpu.memory_space<vmem>>, vector<1x16x128xf32>,
    } else {
    }
    return
  }
  func.func @transform_0(%arg0: i32, %arg1: i32, %arg2: i32) -> (i32, i32, i32) {
    %c0_i32 = arith.constant 0 : i32
    %c0_i32_0 = arith.constant 0 : i32
    return %arg0, %arg1, %c0_i32 : i32, i32, i32
  }
  func.func @transform_1(%arg0: i32, %arg1: i32, %arg2: i32) -> (i32, i32) {
    %c0_i32 = arith.constant 0 : i32
    %c0_i32_0 = arith.constant 0 : i32
    %c0_i32_1 = arith.constant 0 : i32
    return %c0_i32, %c0_i32_0 : i32, i32
  }
  func.func @transform_2(%arg0: i32, %arg1: i32, %arg2: i32) -> (i32, i32) {
    %c0_i32 = arith.constant 0 : i32
    %c0_i32_0 = arith.constant 0 : i32
    %c0_i32_1 = arith.constant 0 : i32
    return %c0_i32, %c0_i32_0 : i32, i32
  }
  func.func @transform_3(%arg0: i32, %arg1: i32, %arg2: i32) -> (i32, i32) {
    %c0_i32 = arith.constant 0 : i32
    %c0_i32_0 = arith.constant 0 : i32
    %c0_i32_1 = arith.constant 0 : i32
    return %c0_i32, %c0_i32_0 : i32, i32
  }
  func.func @transform_4(%arg0: i32, %arg1: i32, %arg2: i32) -> (i32, i32) {
    %c0_i32 = arith.constant 0 : i32
    %c0_i32_0 = arith.constant 0 : i32
    %c0_i32_1 = arith.constant 0 : i32
    return %c0_i32, %c0_i32_0 : i32, i32
  }
  func.func @transform_5(%arg0: i32, %arg1: i32, %arg2: i32) -> (i32, i32) {
    %c0_i32 = arith.constant 0 : i32
    %c0_i32_0 = arith.constant 0 : i32
    %c0_i32_1 = arith.constant 0 : i32
    return %c0_i32, %c0_i32_0 : i32, i32
  }
  func.func @transform_6(%arg0: i32, %arg1: i32, %arg2: i32) -> (i32, i32) {
    %c0_i32 = arith.constant 0 : i32
    %c0_i32_0 = arith.constant 0 : i32
    %c0_i32_1 = arith.constant 0 : i32
    return %c0_i32, %c0_i32_0 : i32, i32
  }
  func.func @transform_7(%arg0: i32, %arg1: i32, %arg2: i32) -> (i32, i32) {
    %c0_i32 = arith.constant 0 : i32
    %c0_i32_0 = arith.constant 0 : i32
    %c0_i32_1 = arith.constant 0 : i32
    return %c0_i32, %c0_i32_0 : i32, i32
  }
  func.func @transform_8(%arg0: i32, %arg1: i32, %arg2: i32) -> (i32, i32, i32) {
    %c0_i32 = arith.constant 0 : i32
    %c0_i32_0 = arith.constant 0 : i32
    %c0_i32_1 = arith.constant 0 : i32
    %c0_i32_2 = arith.constant 0 : i32
    return %c0_i32, %c0_i32_0, %c0_i32_1 : i32, i32, i32
  }
  func.func @transform_9(%arg0: i32, %arg1: i32, %arg2: i32) -> (i32, i32, i32) {
    %c0_i32 = arith.constant 0 : i32
    %c0_i32_0 = arith.constant 0 : i32
    %c0_i32_1 = arith.constant 0 : i32
    %c0_i32_2 = arith.constant 0 : i32
    return %c0_i32, %c0_i32_0, %c0_i32_1 : i32, i32, i32
  }
  func.func @transform_10(%arg0: i32, %arg1: i32, %arg2: i32) -> (i32, i32, i32) {
    %c0_i32 = arith.constant 0 : i32
    %c0_i32_0 = arith.constant 0 : i32
    return %arg0, %arg1, %c0_i32 : i32, i32, i32
  }
}

module attributes {stable_mosaic.version = 11 : i64} {
  func.func @_fused_kernel(%arg0: i32, %arg1: i32, %arg2: i32, %arg3: memref<1x16x128xf32, #tpu.memory_space<vmem>>, %arg4: memref<128x384xf32, #tpu.memory_space<vmem>>, %arg5: memref<1x384xf32, #tpu.memory_space<vmem>>, %arg6: memref<128x128xf32, #tpu.memory_space<vmem>>, %arg7: memref<1x128xf32, #tpu.memory_space<vmem>>, %arg8: memref<1x128xf32, #tpu.memory_space<vmem>>, %arg9: memref<1x128xf32, #tpu.memory_space<vmem>>, %arg10: memref<128x4xf32, #tpu.memory_space<vmem>>, %arg11: memref<4x128x128xf32, #tpu.memory_space<vmem>>, %arg12: memref<4x1x128xf32, #tpu.memory_space<vmem>>, %arg13: memref<1x16x128xf32, #tpu.memory_space<vmem>>, %arg14: memref<16x128xf32, #tpu.memory_space<vmem>>, %arg15: memref<4x16x1xf32, #tpu.memory_space<vmem>>, %arg16: memref<16x128xf32, #tpu.memory_space<vmem>>) attributes {dimension_semantics = [#tpu.dimension_semantics<parallel>, #tpu.dimension_semantics<parallel>, #tpu.dimension_semantics<arbitrary>], iteration_bounds = array<i64: 2, 1, 4>, scalar_prefetch = 0 : i64, scratch_operands = 3 : i64, tpu.core_type = #tpu.core_type<tc>, window_params = [{transform_indices = @transform_0, window_bounds = array<i64: 1, 16, 128>}, {pipeline_mode = #tpu.pipeline_mode<synchronous>, transform_indices = @transform_1, window_bounds = array<i64: 128, 384>}, {pipeline_mode = #tpu.pipeline_mode<synchronous>, transform_indices = @transform_2, window_bounds = array<i64: 1, 384>}, {pipeline_mode = #tpu.pipeline_mode<synchronous>, transform_indices = @transform_3, window_bounds = array<i64: 128, 128>}, {pipeline_mode = #tpu.pipeline_mode<synchronous>, transform_indices = @transform_4, window_bounds = array<i64: 1, 128>}, {pipeline_mode = #tpu.pipeline_mode<synchronous>, transform_indices = @transform_5, window_bounds = array<i64: 1, 128>}, {pipeline_mode = #tpu.pipeline_mode<synchronous>, transform_indices = @transform_6, window_bounds = array<i64: 1, 128>}, {pipeline_mode = #tpu.pipeline_mode<synchronous>, transform_indices = @transform_7, window_bounds = array<i64: 128, 4>}, {pipeline_mode = #tpu.pipeline_mode<synchronous>, transform_indices = @transform_8, window_bounds = array<i64: 4, 128, 128>}, {pipeline_mode = #tpu.pipeline_mode<synchronous>, transform_indices = @transform_9, window_bounds = array<i64: 4, 1, 128>}, {transform_indices = @transform_10, window_bounds = array<i64: 1, 16, 128>}]} {
    %c0_i32 = arith.constant 0 : i32
    %0 = arith.cmpi eq, %arg2, %c0_i32 : i32
    %1 = arith.extui %0 : i1 to i32
    %c0_i32_0 = arith.constant 0 : i32
    %2 = arith.cmpi ne, %1, %c0_i32_0 : i32
    scf.if %2 {
      %c0_13 = arith.constant 0 : index
      %c0_14 = arith.constant 0 : index
      %c0_15 = arith.constant 0 : index
      %24 = vector.load %arg3[%c0_13, %c0_14, %c0_15] : memref<1x16x128xf32, #tpu.memory_space<vmem>>, vector<1x16x128xf32>
      %25 = vector.shape_cast %24 : vector<1x16x128xf32> to vector<16x128xf32>
      %c0_16 = arith.constant 0 : index
      %c0_17 = arith.constant 0 : index
      %26 = vector.load %arg4[%c0_16, %c0_17] : memref<128x384xf32, #tpu.memory_space<vmem>>, vector<128x384xf32>
      %cst_18 = arith.constant dense<0.000000e+00> : vector<16x384xf32>
      %27 = tpu.matmul %25, %26, %cst_18 {dimension_numbers = #tpu.dot_dimension_numbers<[1], [0], [0], [1], [0, 0, 1, 1], [], []>} : vector<16x128xf32>, vector<128x384xf32>, vector<16x384xf32> -> vector<16x384xf32>
      %c0_19 = arith.constant 0 : index
      %c0_20 = arith.constant 0 : index
      %28 = vector.load %arg5[%c0_19, %c0_20] : memref<1x384xf32, #tpu.memory_space<vmem>>, vector<1x384xf32>
      %29 = vector.broadcast %28 : vector<1x384xf32> to vector<16x384xf32>
      %30 = arith.addf %27, %29 : vector<16x384xf32>
      %31 = vector.extract_strided_slice %30 {offsets = [0, 0], sizes = [8, 128], strides = [1, 1]} : vector<16x384xf32> to vector<8x128xf32>
      %32 = vector.extract_strided_slice %30 {offsets = [0, 128], sizes = [8, 128], strides = [1, 1]} : vector<16x384xf32> to vector<8x128xf32>
      %33 = vector.extract_strided_slice %30 {offsets = [0, 256], sizes = [8, 128], strides = [1, 1]} : vector<16x384xf32> to vector<8x128xf32>
      %34 = vector.shape_cast %31 : vector<8x128xf32> to vector<8x4x32xf32>
      %35 = tpu.transpose %34, [1, 0, 2] : vector<8x4x32xf32> -> vector<4x8x32xf32>
      %36 = vector.shape_cast %32 : vector<8x128xf32> to vector<8x4x32xf32>
      %37 = tpu.transpose %36, [1, 0, 2] : vector<8x4x32xf32> -> vector<4x8x32xf32>
      %38 = vector.shape_cast %33 : vector<8x128xf32> to vector<8x4x32xf32>
      %39 = tpu.transpose %38, [1, 0, 2] : vector<8x4x32xf32> -> vector<4x8x32xf32>
      "tpu.trace_start"() <{level = 10 : i32, message = "hqd,hkd->hqk"}> : () -> ()
      %cst_21 = arith.constant dense<0.000000e+00> : vector<4x8x8xf32>
      %40 = tpu.matmul %35, %37, %cst_21 {dimension_numbers = #tpu.dot_dimension_numbers<[2], [2], [1], [1], [0, 0, 0, 1, 1, 1], [0], [0]>} : vector<4x8x32xf32>, vector<4x8x32xf32>, vector<4x8x8xf32> -> vector<4x8x8xf32>
      "tpu.trace_stop"() : () -> ()
      %cst_22 = arith.constant 0.176776692 : f32
      %41 = vector.broadcast %cst_22 : f32 to vector<4x8x8xf32>
      %42 = arith.mulf %40, %41 : vector<4x8x8xf32>
      %cst_23 = arith.constant dense<0xFF800000> : vector<4x8xf32>
      %43 = vector.multi_reduction <maximumf>, %42, %cst_23 [2] : vector<4x8x8xf32> to vector<4x8xf32>
      %44 = vector.shape_cast %43 : vector<4x8xf32> to vector<4x8x1xf32>
      %45 = vector.broadcast %44 : vector<4x8x1xf32> to vector<4x8x8xf32>
      %46 = arith.subf %42, %45 : vector<4x8x8xf32>
      %47 = math.exp %46 : vector<4x8x8xf32>
      %cst_24 = arith.constant dense<0.000000e+00> : vector<4x8xf32>
      %48 = vector.multi_reduction <add>, %47, %cst_24 [2] : vector<4x8x8xf32> to vector<4x8xf32>
      %49 = vector.shape_cast %48 : vector<4x8xf32> to vector<4x8x1xf32>
      %50 = tpu.reciprocal %49 {approx = true} : vector<4x8x1xf32> -> vector<4x8x1xf32>
      %51 = vector.broadcast %50 : vector<4x8x1xf32> to vector<4x8x8xf32>
      %52 = arith.mulf %47, %51 : vector<4x8x8xf32>
      "tpu.trace_start"() <{level = 10 : i32, message = "hqk,hkd->hqd"}> : () -> ()
      %cst_25 = arith.constant dense<0.000000e+00> : vector<4x8x32xf32>
      %53 = tpu.matmul %52, %39, %cst_25 {dimension_numbers = #tpu.dot_dimension_numbers<[2], [1], [1], [2], [0, 0, 0, 1, 1, 2], [0], [0]>} : vector<4x8x8xf32>, vector<4x8x32xf32>, vector<4x8x32xf32> -> vector<4x8x32xf32>
      "tpu.trace_stop"() : () -> ()
      %54 = tpu.transpose %53, [1, 0, 2] : vector<4x8x32xf32> -> vector<8x4x32xf32>
      %55 = vector.shape_cast %54 : vector<8x4x32xf32> to vector<8x128xf32>
      %56 = vector.extract_strided_slice %30 {offsets = [8, 0], sizes = [8, 128], strides = [1, 1]} : vector<16x384xf32> to vector<8x128xf32>
      %57 = vector.extract_strided_slice %30 {offsets = [8, 128], sizes = [8, 128], strides = [1, 1]} : vector<16x384xf32> to vector<8x128xf32>
      %58 = vector.extract_strided_slice %30 {offsets = [8, 256], sizes = [8, 128], strides = [1, 1]} : vector<16x384xf32> to vector<8x128xf32>
      %59 = vector.shape_cast %56 : vector<8x128xf32> to vector<8x4x32xf32>
      %60 = tpu.transpose %59, [1, 0, 2] : vector<8x4x32xf32> -> vector<4x8x32xf32>
      %61 = vector.shape_cast %57 : vector<8x128xf32> to vector<8x4x32xf32>
      %62 = tpu.transpose %61, [1, 0, 2] : vector<8x4x32xf32> -> vector<4x8x32xf32>
      %63 = vector.shape_cast %58 : vector<8x128xf32> to vector<8x4x32xf32>
      %64 = tpu.transpose %63, [1, 0, 2] : vector<8x4x32xf32> -> vector<4x8x32xf32>
      "tpu.trace_start"() <{level = 10 : i32, message = "hqd,hkd->hqk"}> : () -> ()
      %cst_26 = arith.constant dense<0.000000e+00> : vector<4x8x8xf32>
      %65 = tpu.matmul %60, %62, %cst_26 {dimension_numbers = #tpu.dot_dimension_numbers<[2], [2], [1], [1], [0, 0, 0, 1, 1, 1], [0], [0]>} : vector<4x8x32xf32>, vector<4x8x32xf32>, vector<4x8x8xf32> -> vector<4x8x8xf32>
      "tpu.trace_stop"() : () -> ()
      %cst_27 = arith.constant 0.176776692 : f32
      %66 = vector.broadcast %cst_27 : f32 to vector<4x8x8xf32>
      %67 = arith.mulf %65, %66 : vector<4x8x8xf32>
      %cst_28 = arith.constant dense<0xFF800000> : vector<4x8xf32>
      %68 = vector.multi_reduction <maximumf>, %67, %cst_28 [2] : vector<4x8x8xf32> to vector<4x8xf32>
      %69 = vector.shape_cast %68 : vector<4x8xf32> to vector<4x8x1xf32>
      %70 = vector.broadcast %69 : vector<4x8x1xf32> to vector<4x8x8xf32>
      %71 = arith.subf %67, %70 : vector<4x8x8xf32>
      %72 = math.exp %71 : vector<4x8x8xf32>
      %cst_29 = arith.constant dense<0.000000e+00> : vector<4x8xf32>
      %73 = vector.multi_reduction <add>, %72, %cst_29 [2] : vector<4x8x8xf32> to vector<4x8xf32>
      %74 = vector.shape_cast %73 : vector<4x8xf32> to vector<4x8x1xf32>
      %75 = tpu.reciprocal %74 {approx = true} : vector<4x8x1xf32> -> vector<4x8x1xf32>
      %76 = vector.broadcast %75 : vector<4x8x1xf32> to vector<4x8x8xf32>
      %77 = arith.mulf %72, %76 : vector<4x8x8xf32>
      "tpu.trace_start"() <{level = 10 : i32, message = "hqk,hkd->hqd"}> : () -> ()
      %cst_30 = arith.constant dense<0.000000e+00> : vector<4x8x32xf32>
      %78 = tpu.matmul %77, %64, %cst_30 {dimension_numbers = #tpu.dot_dimension_numbers<[2], [1], [1], [2], [0, 0, 0, 1, 1, 2], [0], [0]>} : vector<4x8x8xf32>, vector<4x8x32xf32>, vector<4x8x32xf32> -> vector<4x8x32xf32>
      "tpu.trace_stop"() : () -> ()
      %79 = tpu.transpose %78, [1, 0, 2] : vector<4x8x32xf32> -> vector<8x4x32xf32>
      %80 = vector.shape_cast %79 : vector<8x4x32xf32> to vector<8x128xf32>
      %81 = tpu.concatenate %55, %80 in 0 : vector<8x128xf32>, vector<8x128xf32> -> vector<16x128xf32>
      %c0_31 = arith.constant 0 : index
      %c0_32 = arith.constant 0 : index
      %82 = vector.load %arg6[%c0_31, %c0_32] : memref<128x128xf32, #tpu.memory_space<vmem>>, vector<128x128xf32>
      %cst_33 = arith.constant dense<0.000000e+00> : vector<16x128xf32>
      %83 = tpu.matmul %81, %82, %cst_33 {dimension_numbers = #tpu.dot_dimension_numbers<[1], [0], [0], [1], [0, 0, 1, 1], [], []>} : vector<16x128xf32>, vector<128x128xf32>, vector<16x128xf32> -> vector<16x128xf32>
      %c0_34 = arith.constant 0 : index
      %c0_35 = arith.constant 0 : index
      %84 = vector.load %arg7[%c0_34, %c0_35] : memref<1x128xf32, #tpu.memory_space<vmem>>, vector<1x128xf32>
      %85 = vector.broadcast %84 : vector<1x128xf32> to vector<16x128xf32>
      %86 = arith.addf %83, %85 : vector<16x128xf32>
      %87 = arith.addf %86, %25 : vector<16x128xf32>
      %cst_36 = arith.constant dense<0.000000e+00> : vector<16xf32>
      %88 = vector.multi_reduction <add>, %87, %cst_36 [1] : vector<16x128xf32> to vector<16xf32>
      %89 = vector.shape_cast %88 : vector<16xf32> to vector<16x1xf32>
      %cst_37 = arith.constant 1.280000e+02 : f32
      %90 = vector.broadcast %cst_37 : f32 to vector<16x1xf32>
      %91 = arith.divf %89, %90 : vector<16x1xf32>
      %92 = vector.broadcast %91 : vector<16x1xf32> to vector<16x128xf32>
      %93 = arith.subf %87, %92 : vector<16x128xf32>
      %94 = arith.mulf %93, %93 : vector<16x128xf32>
      %cst_38 = arith.constant dense<0.000000e+00> : vector<16xf32>
      %95 = vector.multi_reduction <add>, %94, %cst_38 [1] : vector<16x128xf32> to vector<16xf32>
      %96 = vector.shape_cast %95 : vector<16xf32> to vector<16x1xf32>
      %cst_39 = arith.constant 1.280000e+02 : f32
      %97 = vector.broadcast %cst_39 : f32 to vector<16x1xf32>
      %98 = arith.divf %96, %97 : vector<16x1xf32>
      %99 = vector.broadcast %91 : vector<16x1xf32> to vector<16x128xf32>
      %100 = arith.subf %87, %99 : vector<16x128xf32>
      %cst_40 = arith.constant 9.99999974E-6 : f32
      %101 = vector.broadcast %cst_40 : f32 to vector<16x1xf32>
      %102 = arith.addf %98, %101 : vector<16x1xf32>
      %103 = math.rsqrt %102 : vector<16x1xf32>
      %104 = vector.broadcast %103 : vector<16x1xf32> to vector<16x128xf32>
      %105 = arith.mulf %100, %104 : vector<16x128xf32>
      %c0_41 = arith.constant 0 : index
      %c0_42 = arith.constant 0 : index
      %106 = vector.load %arg8[%c0_41, %c0_42] : memref<1x128xf32, #tpu.memory_space<vmem>>, vector<1x128xf32>
      %107 = vector.broadcast %106 : vector<1x128xf32> to vector<16x128xf32>
      %108 = arith.mulf %105, %107 : vector<16x128xf32>
      %c0_43 = arith.constant 0 : index
      %c0_44 = arith.constant 0 : index
      %109 = vector.load %arg9[%c0_43, %c0_44] : memref<1x128xf32, #tpu.memory_space<vmem>>, vector<1x128xf32>
      %110 = vector.broadcast %109 : vector<1x128xf32> to vector<16x128xf32>
      %111 = arith.addf %108, %110 : vector<16x128xf32>
      %c0_45 = arith.constant 0 : index
      %c0_46 = arith.constant 0 : index
      %112 = vector.load %arg14[%c0_45, %c0_46] : memref<16x128xf32, #tpu.memory_space<vmem>>, vector<16x128xf32>
      tpu.vector_store %arg14[%c0_45, %c0_46], %111 {strides = array<i32>} : memref<16x128xf32, #tpu.memory_space<vmem>>, vector<16x128xf32>,
      %c0_47 = arith.constant 0 : index
      %c0_48 = arith.constant 0 : index
      %113 = vector.load %arg10[%c0_47, %c0_48] : memref<128x4xf32, #tpu.memory_space<vmem>>, vector<128x4xf32>
      %cst_49 = arith.constant dense<0.000000e+00> : vector<16x4xf32>
      %114 = tpu.matmul %111, %113, %cst_49 {dimension_numbers = #tpu.dot_dimension_numbers<[1], [0], [0], [1], [0, 0, 1, 1], [], []>} : vector<16x128xf32>, vector<128x4xf32>, vector<16x4xf32> -> vector<16x4xf32>
      %cst_50 = arith.constant dense<0xFF800000> : vector<16xf32>
      %115 = vector.multi_reduction <maximumf>, %114, %cst_50 [1] : vector<16x4xf32> to vector<16xf32>
      %116 = vector.shape_cast %115 : vector<16xf32> to vector<16x1xf32>
      %117 = vector.broadcast %116 : vector<16x1xf32> to vector<16x4xf32>
      %118 = arith.subf %114, %117 : vector<16x4xf32>
      %119 = math.exp %118 : vector<16x4xf32>
      %cst_51 = arith.constant dense<0.000000e+00> : vector<16xf32>
      %120 = vector.multi_reduction <add>, %119, %cst_51 [1] : vector<16x4xf32> to vector<16xf32>
      %121 = vector.shape_cast %120 : vector<16xf32> to vector<16x1xf32>
      %122 = tpu.reciprocal %121 {approx = true} : vector<16x1xf32> -> vector<16x1xf32>
      %123 = vector.broadcast %122 : vector<16x1xf32> to vector<16x4xf32>
      %124 = arith.mulf %119, %123 : vector<16x4xf32>
      %125 = tpu.iota {dimensions = array<i32: 1>} : vector<16x4xi32>
      %c0_i32_52 = arith.constant 0 : i32
      %126 = vector.broadcast %c0_i32_52 : i32 to vector<16x4xi32>
      %127 = arith.cmpi eq, %125, %126 : vector<16x4xi32>
      %cst_53 = arith.constant 0.000000e+00 : f32
      %128 = vector.broadcast %cst_53 : f32 to vector<16x4xf32>
      %129 = arith.select %127, %124, %128 : vector<16x4xi1>, vector<16x4xf32>
      %cst_54 = arith.constant dense<0.000000e+00> : vector<16xf32>
      %130 = vector.multi_reduction <add>, %129, %cst_54 [1] : vector<16x4xf32> to vector<16xf32>
      %131 = vector.shape_cast %130 : vector<16xf32> to vector<16x1xf32>
      %c0_55 = arith.constant 0 : index
      %c0_56 = arith.constant 0 : index
      %c0_57 = arith.constant 0 : index
      %132 = vector.load %arg15[%c0_55, %c0_56, %c0_57] : memref<4x16x1xf32, #tpu.memory_space<vmem>>, vector<1x16x1xf32>
      %133 = vector.shape_cast %132 : vector<1x16x1xf32> to vector<16x1xf32>
      %134 = vector.shape_cast %131 : vector<16x1xf32> to vector<1x16x1xf32>
      tpu.vector_store %arg15[%c0_55, %c0_56, %c0_57], %134 {strides = array<i32>} : memref<4x16x1xf32, #tpu.memory_space<vmem>>, vector<1x16x1xf32>,
      %c1_i32 = arith.constant 1 : i32
      %135 = vector.broadcast %c1_i32 : i32 to vector<16x4xi32>
      %136 = arith.cmpi eq, %125, %135 : vector<16x4xi32>
      %cst_58 = arith.constant 0.000000e+00 : f32
      %137 = vector.broadcast %cst_58 : f32 to vector<16x4xf32>
      %138 = arith.select %136, %124, %137 : vector<16x4xi1>, vector<16x4xf32>
      %cst_59 = arith.constant dense<0.000000e+00> : vector<16xf32>
      %139 = vector.multi_reduction <add>, %138, %cst_59 [1] : vector<16x4xf32> to vector<16xf32>
      %140 = vector.shape_cast %139 : vector<16xf32> to vector<16x1xf32>
      %c1 = arith.constant 1 : index
      %c0_60 = arith.constant 0 : index
      %c0_61 = arith.constant 0 : index
      %141 = vector.load %arg15[%c1, %c0_60, %c0_61] : memref<4x16x1xf32, #tpu.memory_space<vmem>>, vector<1x16x1xf32>
      %142 = vector.shape_cast %141 : vector<1x16x1xf32> to vector<16x1xf32>
      %143 = vector.shape_cast %140 : vector<16x1xf32> to vector<1x16x1xf32>
      tpu.vector_store %arg15[%c1, %c0_60, %c0_61], %143 {strides = array<i32>} : memref<4x16x1xf32, #tpu.memory_space<vmem>>, vector<1x16x1xf32>,
      %c2_i32 = arith.constant 2 : i32
      %144 = vector.broadcast %c2_i32 : i32 to vector<16x4xi32>
      %145 = arith.cmpi eq, %125, %144 : vector<16x4xi32>
      %cst_62 = arith.constant 0.000000e+00 : f32
      %146 = vector.broadcast %cst_62 : f32 to vector<16x4xf32>
      %147 = arith.select %145, %124, %146 : vector<16x4xi1>, vector<16x4xf32>
      %cst_63 = arith.constant dense<0.000000e+00> : vector<16xf32>
      %148 = vector.multi_reduction <add>, %147, %cst_63 [1] : vector<16x4xf32> to vector<16xf32>
      %149 = vector.shape_cast %148 : vector<16xf32> to vector<16x1xf32>
      %c2 = arith.constant 2 : index
      %c0_64 = arith.constant 0 : index
      %c0_65 = arith.constant 0 : index
      %150 = vector.load %arg15[%c2, %c0_64, %c0_65] : memref<4x16x1xf32, #tpu.memory_space<vmem>>, vector<1x16x1xf32>
      %151 = vector.shape_cast %150 : vector<1x16x1xf32> to vector<16x1xf32>
      %152 = vector.shape_cast %149 : vector<16x1xf32> to vector<1x16x1xf32>
      tpu.vector_store %arg15[%c2, %c0_64, %c0_65], %152 {strides = array<i32>} : memref<4x16x1xf32, #tpu.memory_space<vmem>>, vector<1x16x1xf32>,
      %c3_i32_66 = arith.constant 3 : i32
      %153 = vector.broadcast %c3_i32_66 : i32 to vector<16x4xi32>
      %154 = arith.cmpi eq, %125, %153 : vector<16x4xi32>
      %cst_67 = arith.constant 0.000000e+00 : f32
      %155 = vector.broadcast %cst_67 : f32 to vector<16x4xf32>
      %156 = arith.select %154, %124, %155 : vector<16x4xi1>, vector<16x4xf32>
      %cst_68 = arith.constant dense<0.000000e+00> : vector<16xf32>
      %157 = vector.multi_reduction <add>, %156, %cst_68 [1] : vector<16x4xf32> to vector<16xf32>
      %158 = vector.shape_cast %157 : vector<16xf32> to vector<16x1xf32>
      %c3 = arith.constant 3 : index
      %c0_69 = arith.constant 0 : index
      %c0_70 = arith.constant 0 : index
      %159 = vector.load %arg15[%c3, %c0_69, %c0_70] : memref<4x16x1xf32, #tpu.memory_space<vmem>>, vector<1x16x1xf32>
      %160 = vector.shape_cast %159 : vector<1x16x1xf32> to vector<16x1xf32>
      %161 = vector.shape_cast %158 : vector<16x1xf32> to vector<1x16x1xf32>
      tpu.vector_store %arg15[%c3, %c0_69, %c0_70], %161 {strides = array<i32>} : memref<4x16x1xf32, #tpu.memory_space<vmem>>, vector<1x16x1xf32>,
      %cst_71 = arith.constant 0.000000e+00 : f32
      %162 = vector.broadcast %cst_71 : f32 to vector<16x128xf32>
      %c0_72 = arith.constant 0 : index
      %c0_73 = arith.constant 0 : index
      %163 = vector.load %arg16[%c0_72, %c0_73] : memref<16x128xf32, #tpu.memory_space<vmem>>, vector<16x128xf32>
      tpu.vector_store %arg16[%c0_72, %c0_73], %162 {strides = array<i32>} : memref<16x128xf32, #tpu.memory_space<vmem>>, vector<16x128xf32>,
    } else {
    }
    %3 = arith.index_cast %arg2 : i32 to index
    %c0 = arith.constant 0 : index
    %c0_1 = arith.constant 0 : index
    %4 = vector.load %arg11[%3, %c0, %c0_1] : memref<4x128x128xf32, #tpu.memory_space<vmem>>, vector<1x128x128xf32>
    %5 = vector.shape_cast %4 : vector<1x128x128xf32> to vector<128x128xf32>
    %6 = arith.index_cast %arg2 : i32 to index
    %c0_2 = arith.constant 0 : index
    %c0_3 = arith.constant 0 : index
    %7 = vector.load %arg12[%6, %c0_2, %c0_3] : memref<4x1x128xf32, #tpu.memory_space<vmem>>, vector<1x1x128xf32>
    %8 = vector.shape_cast %7 : vector<1x1x128xf32> to vector<1x128xf32>
    %c0_4 = arith.constant 0 : index
    %c0_5 = arith.constant 0 : index
    %9 = vector.load %arg14[%c0_4, %c0_5] : memref<16x128xf32, #tpu.memory_space<vmem>>, vector<16x128xf32>
    %cst = arith.constant dense<0.000000e+00> : vector<16x128xf32>
    %10 = tpu.matmul %9, %5, %cst {dimension_numbers = #tpu.dot_dimension_numbers<[1], [0], [0], [1], [0, 0, 1, 1], [], []>} : vector<16x128xf32>, vector<128x128xf32>, vector<16x128xf32> -> vector<16x128xf32>
    %11 = vector.broadcast %8 : vector<1x128xf32> to vector<16x128xf32>
    %12 = arith.addf %10, %11 : vector<16x128xf32>
    %c0_6 = arith.constant 0 : index
    %c0_7 = arith.constant 0 : index
    %13 = vector.load %arg16[%c0_6, %c0_7] : memref<16x128xf32, #tpu.memory_space<vmem>>, vector<16x128xf32>
    %14 = arith.index_cast %arg2 : i32 to index
    %c0_8 = arith.constant 0 : index
    %c0_9 = arith.constant 0 : index
    %15 = vector.load %arg15[%14, %c0_8, %c0_9] : memref<4x16x1xf32, #tpu.memory_space<vmem>>, vector<1x16x1xf32>
    %16 = vector.shape_cast %15 : vector<1x16x1xf32> to vector<16x1xf32>
    %17 = vector.broadcast %16 : vector<16x1xf32> to vector<16x128xf32>
    %18 = arith.mulf %17, %12 : vector<16x128xf32>
    %19 = arith.addf %13, %18 : vector<16x128xf32>
    %c0_10 = arith.constant 0 : index
    %c0_11 = arith.constant 0 : index
    %20 = vector.load %arg16[%c0_10, %c0_11] : memref<16x128xf32, #tpu.memory_space<vmem>>, vector<16x128xf32>
    tpu.vector_store %arg16[%c0_10, %c0_11], %19 {strides = array<i32>} : memref<16x128xf32, #tpu.memory_space<vmem>>, vector<16x128xf32>,
    %c3_i32 = arith.constant 3 : i32
    %21 = arith.cmpi eq, %arg2, %c3_i32 : i32
    %22 = arith.extui %21 : i1 to i32
    %c0_i32_12 = arith.constant 0 : i32
    %23 = arith.cmpi ne, %22, %c0_i32_12 : i32
    scf.if %23 {
      %c0_13 = arith.constant 0 : index
      %c0_14 = arith.constant 0 : index
      %24 = vector.load %arg16[%c0_13, %c0_14] : memref<16x128xf32, #tpu.memory_space<vmem>>, vector<16x128xf32>
      %c0_15 = arith.constant 0 : index
      %c0_16 = arith.constant 0 : index
      %c0_17 = arith.constant 0 : index
      %25 = vector.load %arg13[%c0_15, %c0_16, %c0_17] : memref<1x16x128xf32, #tpu.memory_space<vmem>>, vector<1x16x128xf32>
      %26 = vector.shape_cast %25 : vector<1x16x128xf32> to vector<16x128xf32>
      %27 = vector.shape_cast %24 : vector<16x128xf32> to vector<1x16x128xf32>
      tpu.vector_store %arg13[%c0_15, %c0_16, %c0_17], %27 {strides = array<i32>} : memref<1x16x128xf32, #tpu.memory_space<vmem>>, vector<1x16x128xf32>,
    } else {
    }
    return
  }
  func.func @transform_0(%arg0: i32, %arg1: i32, %arg2: i32) -> (i32, i32, i32) {
    %c0_i32 = arith.constant 0 : i32
    %c0_i32_0 = arith.constant 0 : i32
    return %arg0, %arg1, %c0_i32 : i32, i32, i32
  }
  func.func @transform_1(%arg0: i32, %arg1: i32, %arg2: i32) -> (i32, i32) {
    %c0_i32 = arith.constant 0 : i32
    %c0_i32_0 = arith.constant 0 : i32
    %c0_i32_1 = arith.constant 0 : i32
    return %c0_i32, %c0_i32_0 : i32, i32
  }
  func.func @transform_2(%arg0: i32, %arg1: i32, %arg2: i32) -> (i32, i32) {
    %c0_i32 = arith.constant 0 : i32
    %c0_i32_0 = arith.constant 0 : i32
    %c0_i32_1 = arith.constant 0 : i32
    return %c0_i32, %c0_i32_0 : i32, i32
  }
  func.func @transform_3(%arg0: i32, %arg1: i32, %arg2: i32) -> (i32, i32) {
    %c0_i32 = arith.constant 0 : i32
    %c0_i32_0 = arith.constant 0 : i32
    %c0_i32_1 = arith.constant 0 : i32
    return %c0_i32, %c0_i32_0 : i32, i32
  }
  func.func @transform_4(%arg0: i32, %arg1: i32, %arg2: i32) -> (i32, i32) {
    %c0_i32 = arith.constant 0 : i32
    %c0_i32_0 = arith.constant 0 : i32
    %c0_i32_1 = arith.constant 0 : i32
    return %c0_i32, %c0_i32_0 : i32, i32
  }
  func.func @transform_5(%arg0: i32, %arg1: i32, %arg2: i32) -> (i32, i32) {
    %c0_i32 = arith.constant 0 : i32
    %c0_i32_0 = arith.constant 0 : i32
    %c0_i32_1 = arith.constant 0 : i32
    return %c0_i32, %c0_i32_0 : i32, i32
  }
  func.func @transform_6(%arg0: i32, %arg1: i32, %arg2: i32) -> (i32, i32) {
    %c0_i32 = arith.constant 0 : i32
    %c0_i32_0 = arith.constant 0 : i32
    %c0_i32_1 = arith.constant 0 : i32
    return %c0_i32, %c0_i32_0 : i32, i32
  }
  func.func @transform_7(%arg0: i32, %arg1: i32, %arg2: i32) -> (i32, i32) {
    %c0_i32 = arith.constant 0 : i32
    %c0_i32_0 = arith.constant 0 : i32
    %c0_i32_1 = arith.constant 0 : i32
    return %c0_i32, %c0_i32_0 : i32, i32
  }
  func.func @transform_8(%arg0: i32, %arg1: i32, %arg2: i32) -> (i32, i32, i32) {
    %c0_i32 = arith.constant 0 : i32
    %c0_i32_0 = arith.constant 0 : i32
    %c0_i32_1 = arith.constant 0 : i32
    %c0_i32_2 = arith.constant 0 : i32
    return %c0_i32, %c0_i32_0, %c0_i32_1 : i32, i32, i32
  }
  func.func @transform_9(%arg0: i32, %arg1: i32, %arg2: i32) -> (i32, i32, i32) {
    %c0_i32 = arith.constant 0 : i32
    %c0_i32_0 = arith.constant 0 : i32
    %c0_i32_1 = arith.constant 0 : i32
    %c0_i32_2 = arith.constant 0 : i32
    return %c0_i32, %c0_i32_0, %c0_i32_1 : i32, i32, i32
  }
  func.func @transform_10(%arg0: i32, %arg1: i32, %arg2: i32) -> (i32, i32, i32) {
    %c0_i32 = arith.constant 0 : i32
    %c0_i32_0 = arith.constant 0 : i32
    return %arg0, %arg1, %c0_i32 : i32, i32, i32
  }
}

</mosaic_0001>

<llo_original>
// kernel: tpu_custom_call.1
$region0: #{tpu_custom_call.1}
  #allocation0 [shape = 'u32[]', space=smem, size = 0x4, offset = 0x4, fixed_abs, tag = 'smem constant byte address 0x4 - core index']
  #allocation1 [shape = 'u32[72,128]{1,0:T(1,128)}', space=vmem, size = 0x9000, scoped, tag = 'internal scratch']
  #allocation2 [shape = 'f32[16,128]{1,0:T(8,128)}', space=vmem, size = 0x2000, scoped, tag = 'scratch operand']
  #allocation3 [shape = 'f32[4,16,1]{2,1,0:T(8,128)}', space=vmem, size = 0x8000, scoped, tag = 'scratch operand']
  #allocation4 [shape = 'f32[16,128]{1,0:T(8,128)}', space=vmem, size = 0x2000, scoped, tag = 'scratch operand']
  %s0 = inlined_call_operand.hbm [shape: f32[2,16,128], index: 0, kind: input, shape index: {}]
  %s1 = inlined_call_operand.hbm [shape: f32[128,384], index: 1, kind: input, shape index: {}]
  %s2 = inlined_call_operand.hbm [shape: f32[1,384], index: 2, kind: input, shape index: {}]
  %s3 = inlined_call_operand.vmem [shape: f32[128,128], index: 3, kind: input, shape index: {}]
  %s4 = inlined_call_operand.vmem [shape: f32[1,128], index: 4, kind: input, shape index: {}]
  %s5 = inlined_call_operand.vmem [shape: f32[1,128], index: 5, kind: input, shape index: {}]
  %s6 = inlined_call_operand.hbm [shape: f32[1,128], index: 6, kind: input, shape index: {}]
  %s7 = inlined_call_operand.vmem [shape: f32[128,4], index: 7, kind: input, shape index: {}]
  %s8 = inlined_call_operand.hbm [shape: f32[4,128,128], index: 8, kind: input, shape index: {}]
  %s9 = inlined_call_operand.vmem [shape: f32[4,1,128], index: 9, kind: input, shape index: {}]
  %s10 = inlined_call_operand.hbm [shape: f32[2,16,128], index: 10, kind: output, shape index: {}]
  %s11 = sld [smem:[#allocation0]]
  $region101: #{tpu_custom_call.1} parent=0
    _
  %s13 = ssub.s32 1, %s11
  %s14 = scalar_select 0, %s13, %s11
  $region1: #{tpu_custom_call.1} parent=0
    #allocation5 [shape = 'u8[16384]{0}', space=vmem, size = 0x4000, scoped, tag = 'input window, operand 0']
    #allocation6 [shape = 's32[2]{0}', space=sflag, size = 0x8, scoped, tag = 'scoped memory for tpu_custom_call.1']
    #allocation7 [shape = 's32[2]{0}', space=sflag, size = 0x8, scoped, tag = 'scoped memory for tpu_custom_call.1']
    #allocation8 [shape = 'u8[196608]{0}', space=vmem, size = 0x30000, scoped, tag = 'input window, operand 1, single buffered']
    #allocation9 [shape = 's32[1]{0}', space=sflag, size = 0x4, scoped, tag = 'scoped memory for tpu_custom_call.1']
    #allocation10 [shape = 'u8[1536]{0}', space=vmem, size = 0x800, scoped, tag = 'input window, operand 2, single buffered']
    #allocation11 [shape = 'u8[512]{0}', space=vmem, size = 0x400, scoped, tag = 'input window, operand 6, single buffered']
    #allocation12 [shape = 's32[1]{0}', space=sflag, size = 0x4, scoped, tag = 'scoped memory for tpu_custom_call.1']
    #allocation13 [shape = 'u8[262144]{0}', space=vmem, size = 0x40000, scoped, tag = 'input window, operand 8, single buffered']
    #allocation14 [shape = 'u8[16384]{0}', space=vmem, size = 0x4000, scoped, tag = 'output window, operand 0']
    %15 = vsyncpa [#allocation6], 0
    %s16 = scalar_lea.sflag [#allocation6], 1
    %17 = vsyncpa %s16, 0
    %18 = vsyncpa [#allocation9], 0
    %19 = vsyncpa [#allocation12], 0
    %20 = vsyncpa [#allocation7], 0
    %s21 = scalar_lea.sflag [#allocation7], 1
    %22 = vsyncpa %s21, 0
    loop: start=0, step=1, limit=10
    $region2: #{tpu_custom_call.1} parent=1 // loop_pre_header
      _
    $region3: #{tpu_custom_call.1} parent=1 // loop_header
      %s24 = sphi 0, %s28
      %p25 = scmp.ge.s32.totalorder %s24, 10
      %s31 = sphi 0, %s50
      %s32 = sphi 0, %s46
      %s33 = sphi 0, %s42
      %s34 = sphi 0, %s31
      %s35 = sphi 0, %s32
      %s36 = sphi 0, %s33
      %s37 = sphi 0, %s34
      %s38 = sphi 0, %s35
      %s39 = sphi 0, %s36
      %s55 = sphi 0, %s57
      %s58 = sphi 0, %s55
      %s59 = sphi 0, %s58
      %s75 = sphi 0, %s59
      %s79 = sphi 0, %s79
      %s81 = sphi 0, %s79
      %s82 = sphi 0, %s81
      %s96 = sphi 0, %s82
      %s100 = sphi 0, %s100
      %s102 = sphi 0, %s100
      %s103 = sphi 0, %s102
      %s117 = sphi 0, %s103
      %s121 = sphi 0, %s121
      %s123 = sphi 0, %s121
      %s124 = sphi 0, %s123
      %s138 = sphi 0, %s124
      %s142 = sphi 0, %s142
      %s144 = sphi 0, %s142
      %s145 = sphi 0, %s144
      %s159 = sphi 0, %s145
      %s163 = sphi 0, %s163
      %s165 = sphi 0, %s163
      %s166 = sphi 0, %s165
      %s180 = sphi 0, %s166
      %s184 = sphi 0, %s184
      %s186 = sphi 0, %s184
      %s187 = sphi 0, %s186
      %s201 = sphi 0, %s187
      %s205 = sphi 0, %s205
      %s207 = sphi 0, %s205
      %s208 = sphi 0, %s207
      %s222 = sphi 0, %s208
      %s226 = sphi 0, %s226
      %s228 = sphi 0, %s226
      %s229 = sphi 0, %s228
      %s243 = sphi 0, %s229
      %s247 = sphi 0, %s247
      %s249 = sphi 0, %s247
      %s250 = sphi 0, %s249
      %s264 = sphi 0, %s250
      %s272 = sphi 0, %s274
      %s275 = sphi 0, %s272
      %s276 = sphi 0, %s275
      %s292 = sphi 0, %s276
    $region4: #{tpu_custom_call.1} parent=1 // loop_header_branch
      %27 = sbr.rel (%p25) target = $region8
    $region5: #{tpu_custom_call.1} parent=1 // loop_body
      %s29 = ssub.s32 %s24, 1
      %s30 = ssub.s32 %s24, 2
      %s40 = sadd.s32 1, %s33
      %p41 = scmp.ge.s32.totalorder %s40, 4
      %s42 = scalar_select %p41, 0, %s40
      %s43 = sadd.s32 1, %s32
      %s44 = scalar_select %p41, %s43, %s32
      %p45 = scmp.ge.s32.totalorder %s44, 1
      %s46 = scalar_select %p45, 0, %s44
      %s47 = sadd.s32 1, %s31
      %s48 = scalar_select %p45, %s47, %s31
      %p49 = scmp.ge.s32.totalorder %s48, 2
      %s50 = scalar_select %p49, 0, %s48
      %s51 = ssub.s32 %s31, %s50
      %s52 = ssub.s32 %s32, %s46
      %s53 = sor.u32 %s51, %s52
      %p54 = scmp.eq.s32.totalorder %s53, 0
      %s56 = sadd.s32 %s55, 1
      %s57 = scalar_select %p54, %s55, %s56
      %p60 = pneg %p54
      %p61 = scmp.eq.s32.totalorder %s24, 7
      %p62 = por %p60, %p61
      %p63 = scmp.ne.s32.totalorder %s55, %s58
      %p64 = scmp.eq.s32.totalorder %s24, 0
      %p65 = por %p63, %p64
      %p66 = scmp.ne.s32.totalorder %s55, %s58
      %p67 = scmp.eq.s32.totalorder %s29, 7
      %p68 = por %p66, %p67
      %p69 = scmp.ne.s32.totalorder %s58, %s59
      %p70 = scmp.eq.s32.totalorder %s29, 0
      %p71 = por %p69, %p70
      %p72 = scmp.ne.s32.totalorder %s58, %s59
      %p73 = scmp.eq.s32.totalorder %s30, 7
      %p74 = por %p72, %p73
      %p76 = scmp.ne.s32.totalorder %s59, %s75
      %p77 = scmp.eq.s32.totalorder %s30, 0
      %p78 = por %p76, %p77
      %s80 = sadd.s32 %s79, 1
      %p83 = scmp.eq.s32.totalorder %s24, 7
      %p84 = scmp.ne.s32.totalorder %s79, %s81
      %p85 = scmp.eq.s32.totalorder %s24, 0
      %p86 = por %p84, %p85
      %p87 = scmp.ne.s32.totalorder %s79, %s81
      %p88 = scmp.eq.s32.totalorder %s29, 7
      %p89 = por %p87, %p88
      %p90 = scmp.ne.s32.totalorder %s81, %s82
      %p91 = scmp.eq.s32.totalorder %s29, 0
      %p92 = por %p90, %p91
      %p93 = scmp.ne.s32.totalorder %s81, %s82
      %p94 = scmp.eq.s32.totalorder %s30, 7
      %p95 = por %p93, %p94
      %p97 = scmp.ne.s32.totalorder %s82, %s96
      %p98 = scmp.eq.s32.totalorder %s30, 0
      %p99 = por %p97, %p98
      %s101 = sadd.s32 %s100, 1
      %p104 = scmp.eq.s32.totalorder %s24, 7
      %p105 = scmp.ne.s32.totalorder %s100, %s102
      %p106 = scmp.eq.s32.totalorder %s24, 0
      %p107 = por %p105, %p106
      %p108 = scmp.ne.s32.totalorder %s100, %s102
      %p109 = scmp.eq.s32.totalorder %s29, 7
      %p110 = por %p108, %p109
      %p111 = scmp.ne.s32.totalorder %s102, %s103
      %p112 = scmp.eq.s32.totalorder %s29, 0
      %p113 = por %p111, %p112
      %p114 = scmp.ne.s32.totalorder %s102, %s103
      %p115 = scmp.eq.s32.totalorder %s30, 7
      %p116 = por %p114, %p115
      %p118 = scmp.ne.s32.totalorder %s103, %s117
      %p119 = scmp.eq.s32.totalorder %s30, 0
      %p120 = por %p118, %p119
      %s122 = sadd.s32 %s121, 1
      %p125 = scmp.eq.s32.totalorder %s24, 7
      %p126 = scmp.ne.s32.totalorder %s121, %s123
      %p127 = scmp.eq.s32.totalorder %s24, 0
      %p128 = por %p126, %p127
      %p129 = scmp.ne.s32.totalorder %s121, %s123
      %p130 = scmp.eq.s32.totalorder %s29, 7
      %p131 = por %p129, %p130
      %p132 = scmp.ne.s32.totalorder %s123, %s124
      %p133 = scmp.eq.s32.totalorder %s29, 0
      %p134 = por %p132, %p133
      %p135 = scmp.ne.s32.totalorder %s123, %s124
      %p136 = scmp.eq.s32.totalorder %s30, 7
      %p137 = por %p135, %p136
      %p139 = scmp.ne.s32.totalorder %s124, %s138
      %p140 = scmp.eq.s32.totalorder %s30, 0
      %p141 = por %p139, %p140
      %s143 = sadd.s32 %s142, 1
      %p146 = scmp.eq.s32.totalorder %s24, 7
      %p147 = scmp.ne.s32.totalorder %s142, %s144
      %p148 = scmp.eq.s32.totalorder %s24, 0
      %p149 = por %p147, %p148
      %p150 = scmp.ne.s32.totalorder %s142, %s144
      %p151 = scmp.eq.s32.totalorder %s29, 7
      %p152 = por %p150, %p151
      %p153 = scmp.ne.s32.totalorder %s144, %s145
      %p154 = scmp.eq.s32.totalorder %s29, 0
      %p155 = por %p153, %p154
      %p156 = scmp.ne.s32.totalorder %s144, %s145
      %p157 = scmp.eq.s32.totalorder %s30, 7
      %p158 = por %p156, %p157
      %p160 = scmp.ne.s32.totalorder %s145, %s159
      %p161 = scmp.eq.s32.totalorder %s30, 0
      %p162 = por %p160, %p161
      %s164 = sadd.s32 %s163, 1
      %p167 = scmp.eq.s32.totalorder %s24, 7
      %p168 = scmp.ne.s32.totalorder %s163, %s165
      %p169 = scmp.eq.s32.totalorder %s24, 0
      %p170 = por %p168, %p169
      %p171 = scmp.ne.s32.totalorder %s163, %s165
      %p172 = scmp.eq.s32.totalorder %s29, 7
      %p173 = por %p171, %p172
      %p174 = scmp.ne.s32.totalorder %s165, %s166
      %p175 = scmp.eq.s32.totalorder %s29, 0
      %p176 = por %p174, %p175
      %p177 = scmp.ne.s32.totalorder %s165, %s166
      %p178 = scmp.eq.s32.totalorder %s30, 7
      %p179 = por %p177, %p178
      %p181 = scmp.ne.s32.totalorder %s166, %s180
      %p182 = scmp.eq.s32.totalorder %s30, 0
      %p183 = por %p181, %p182
      %s185 = sadd.s32 %s184, 1
      %p188 = scmp.eq.s32.totalorder %s24, 7
      %p189 = scmp.ne.s32.totalorder %s184, %s186
      %p190 = scmp.eq.s32.totalorder %s24, 0
      %p191 = por %p189, %p190
      %p192 = scmp.ne.s32.totalorder %s184, %s186
      %p193 = scmp.eq.s32.totalorder %s29, 7
      %p194 = por %p192, %p193
      %p195 = scmp.ne.s32.totalorder %s186, %s187
      %p196 = scmp.eq.s32.totalorder %s29, 0
      %p197 = por %p195, %p196
      %p198 = scmp.ne.s32.totalorder %s186, %s187
      %p199 = scmp.eq.s32.totalorder %s30, 7
      %p200 = por %p198, %p199
      %p202 = scmp.ne.s32.totalorder %s187, %s201
      %p203 = scmp.eq.s32.totalorder %s30, 0
      %p204 = por %p202, %p203
      %s206 = sadd.s32 %s205, 1
      %p209 = scmp.eq.s32.totalorder %s24, 7
      %p210 = scmp.ne.s32.totalorder %s205, %s207
      %p211 = scmp.eq.s32.totalorder %s24, 0
      %p212 = por %p210, %p211
      %p213 = scmp.ne.s32.totalorder %s205, %s207
      %p214 = scmp.eq.s32.totalorder %s29, 7
      %p215 = por %p213, %p214
      %p216 = scmp.ne.s32.totalorder %s207, %s208
      %p217 = scmp.eq.s32.totalorder %s29, 0
      %p218 = por %p216, %p217
      %p219 = scmp.ne.s32.totalorder %s207, %s208
      %p220 = scmp.eq.s32.totalorder %s30, 7
      %p221 = por %p219, %p220
      %p223 = scmp.ne.s32.totalorder %s208, %s222
      %p224 = scmp.eq.s32.totalorder %s30, 0
      %p225 = por %p223, %p224
      %s227 = sadd.s32 %s226, 1
      %p230 = scmp.eq.s32.totalorder %s24, 7
      %p231 = scmp.ne.s32.totalorder %s226, %s228
      %p232 = scmp.eq.s32.totalorder %s24, 0
      %p233 = por %p231, %p232
      %p234 = scmp.ne.s32.totalorder %s226, %s228
      %p235 = scmp.eq.s32.totalorder %s29, 7
      %p236 = por %p234, %p235
      %p237 = scmp.ne.s32.totalorder %s228, %s229
      %p238 = scmp.eq.s32.totalorder %s29, 0
      %p239 = por %p237, %p238
      %p240 = scmp.ne.s32.totalorder %s228, %s229
      %p241 = scmp.eq.s32.totalorder %s30, 7
      %p242 = por %p240, %p241
      %p244 = scmp.ne.s32.totalorder %s229, %s243
      %p245 = scmp.eq.s32.totalorder %s30, 0
      %p246 = por %p244, %p245
      %s248 = sadd.s32 %s247, 1
      %p251 = scmp.eq.s32.totalorder %s24, 7
      %p252 = scmp.ne.s32.totalorder %s247, %s249
      %p253 = scmp.eq.s32.totalorder %s24, 0
      %p254 = por %p252, %p253
      %p255 = scmp.ne.s32.totalorder %s247, %s249
      %p256 = scmp.eq.s32.totalorder %s29, 7
      %p257 = por %p255, %p256
      %p258 = scmp.ne.s32.totalorder %s249, %s250
      %p259 = scmp.eq.s32.totalorder %s29, 0
      %p260 = por %p258, %p259
      %p261 = scmp.ne.s32.totalorder %s249, %s250
      %p262 = scmp.eq.s32.totalorder %s30, 7
      %p263 = por %p261, %p262
      %p265 = scmp.ne.s32.totalorder %s250, %s264
      %p266 = scmp.eq.s32.totalorder %s30, 0
      %p267 = por %p265, %p266
      %s268 = ssub.s32 %s31, %s50
      %s269 = ssub.s32 %s32, %s46
      %s270 = sor.u32 %s268, %s269
      %p271 = scmp.eq.s32.totalorder %s270, 0
      %s273 = sadd.s32 %s272, 1
      %s274 = scalar_select %p271, %s272, %s273
      %p277 = pneg %p271
      %p278 = scmp.eq.s32.totalorder %s24, 7
      %p279 = por %p277, %p278
      %p280 = scmp.ne.s32.totalorder %s272, %s275
      %p281 = scmp.eq.s32.totalorder %s24, 0
      %p282 = por %p280, %p281
      %p283 = scmp.ne.s32.totalorder %s272, %s275
      %p284 = scmp.eq.s32.totalorder %s29, 7
      %p285 = por %p283, %p284
      %p286 = scmp.ne.s32.totalorder %s275, %s276
      %p287 = scmp.eq.s32.totalorder %s29, 0
      %p288 = por %p286, %p287
      %p289 = scmp.ne.s32.totalorder %s275, %s276
      %p290 = scmp.eq.s32.totalorder %s30, 7
      %p291 = por %p289, %p290
      %p293 = scmp.ne.s32.totalorder %s276, %s292
      %p294 = scmp.eq.s32.totalorder %s30, 0
      %p295 = por %p293, %p294
      %p296 = scmp.le.s32.totalorder 1, %s24
      %p297 = scmp.lt.s32.totalorder %s24, 9
      %p298 = pnand %p296, %p297
      %p299 = pneg %p298
      // Predicated region
      $region9: #{tpu_custom_call.1} parent=5 // pred_check
        _
      $region10: #{tpu_custom_call.1} parent=5 // pred_check_branch
        %301 = sbr.rel (%p298) target = $region12
      $region11: #{tpu_custom_call.1} parent=5 // pred_region
        %s302 = ssub.s32 %s24, 1
        // Predicated region
        $region13: #{tpu_custom_call.1} parent=11 // pred_check
          %p303 = pneg %p92
        $region14: #{tpu_custom_call.1} parent=11 // pred_check_branch
          %305 = sbr.rel (%p303) target = $region16
        $region15: #{tpu_custom_call.1} parent=11 // pred_region
          %307 = vsyncadd [#allocation9], 0
          %s308 = sshll.u32 %s1, 4
          %s309 = int_to_ptr.hbm [resolvable:$true] %s308
          %s310 = sshll.u32 [#allocation8], 4
          %s311 = int_to_ptr.vmem [resolvable:$true] %s310
          %316 = dma.hbm_to_vmem [thread:$0]  %s309, 6144, %s311, [#allocation9], 384, 384, 24
        $region16: #{tpu_custom_call.1} parent=11 // pred_fallthru
          _
        // Predicated region
        $region17: #{tpu_custom_call.1} parent=11 // pred_check
          %p317 = pneg %p113
        $region18: #{tpu_custom_call.1} parent=11 // pred_check_branch
          %319 = sbr.rel (%p317) target = $region20
        $region19: #{tpu_custom_call.1} parent=11 // pred_region
          %321 = vsyncadd [#allocation9], 0
          %s323 = sshll.u32 %s2, 4
          %s324 = int_to_ptr.hbm [resolvable:$true] %s323
          %s325 = sshll.u32 [#allocation10], 4
          %s326 = int_to_ptr.vmem [resolvable:$true] %s325
          %328 = dma.hbm_to_vmem [thread:$0]  %s324, 48, %s326, [#allocation9]
        $region20: #{tpu_custom_call.1} parent=11 // pred_fallthru
          _
        // Predicated region
        $region21: #{tpu_custom_call.1} parent=11 // pred_check
          %p329 = pneg %p134
        $region22: #{tpu_custom_call.1} parent=11 // pred_check_branch
          %331 = sbr.rel (%p329) target = $region24
        $region23: #{tpu_custom_call.1} parent=11 // pred_region
          _
        $region24: #{tpu_custom_call.1} parent=11 // pred_fallthru
          _
        // Predicated region
        $region25: #{tpu_custom_call.1} parent=11 // pred_check
          %p332 = pneg %p155
        $region26: #{tpu_custom_call.1} parent=11 // pred_check_branch
          %334 = sbr.rel (%p332) target = $region28
        $region27: #{tpu_custom_call.1} parent=11 // pred_region
          _
        $region28: #{tpu_custom_call.1} parent=11 // pred_fallthru
          _
        // Predicated region
        $region29: #{tpu_custom_call.1} parent=11 // pred_check
          %p335 = pneg %p176
        $region30: #{tpu_custom_call.1} parent=11 // pred_check_branch
          %337 = sbr.rel (%p335) target = $region32
        $region31: #{tpu_custom_call.1} parent=11 // pred_region
          _
        $region32: #{tpu_custom_call.1} parent=11 // pred_fallthru
          _
        // Predicated region
        $region33: #{tpu_custom_call.1} parent=11 // pred_check
          %p338 = pneg %p197
        $region34: #{tpu_custom_call.1} parent=11 // pred_check_branch
          %340 = sbr.rel (%p338) target = $region36
        $region35: #{tpu_custom_call.1} parent=11 // pred_region
          %342 = vsyncadd [#allocation12], 0
          %s344 = sshll.u32 %s6, 4
          %s345 = int_to_ptr.hbm [resolvable:$true] %s344
          %s346 = sshll.u32 [#allocation11], 4
          %s347 = int_to_ptr.vmem [resolvable:$true] %s346
          %349 = dma.hbm_to_vmem [thread:$0]  %s345, 16, %s347, [#allocation12]
        $region36: #{tpu_custom_call.1} parent=11 // pred_fallthru
          _
        // Predicated region
        $region37: #{tpu_custom_call.1} parent=11 // pred_check
          %p350 = pneg %p218
        $region38: #{tpu_custom_call.1} parent=11 // pred_check_branch
          %352 = sbr.rel (%p350) target = $region40
        $region39: #{tpu_custom_call.1} parent=11 // pred_region
          _
        $region40: #{tpu_custom_call.1} parent=11 // pred_fallthru
          _
        // Predicated region
        $region41: #{tpu_custom_call.1} parent=11 // pred_check
          %p353 = pneg %p239
        $region42: #{tpu_custom_call.1} parent=11 // pred_check_branch
          %355 = sbr.rel (%p353) target = $region44
        $region43: #{tpu_custom_call.1} parent=11 // pred_region
          %357 = vsyncadd [#allocation12], 0
          %s358 = sshll.u32 %s8, 4
          %s359 = int_to_ptr.hbm [resolvable:$true] %s358
          %s360 = sshll.u32 [#allocation13], 4
          %s361 = int_to_ptr.vmem [resolvable:$true] %s360
          %366 = dma.hbm_to_vmem [thread:$0]  %s359, 8192, %s361, [#allocation12], 128, 128, 8
        $region44: #{tpu_custom_call.1} parent=11 // pred_fallthru
          _
        // Predicated region
        $region45: #{tpu_custom_call.1} parent=11 // pred_check
          %p367 = pneg %p260
        $region46: #{tpu_custom_call.1} parent=11 // pred_check_branch
          %369 = sbr.rel (%p367) target = $region48
        $region47: #{tpu_custom_call.1} parent=11 // pred_region
          _
        $region48: #{tpu_custom_call.1} parent=11 // pred_fallthru
          _
      $region12: #{tpu_custom_call.1} parent=5 // pred_fallthru
        _
      %p370 = scmp.lt.s32.totalorder %s24, 8
      // Predicated region
      $region49: #{tpu_custom_call.1} parent=5 // pred_check
        %p371 = pneg %p370
      $region50: #{tpu_custom_call.1} parent=5 // pred_check_branch
        %373 = sbr.rel (%p371) target = $region52
      $region51: #{tpu_custom_call.1} parent=5 // pred_region
        // Predicated region
        $region53: #{tpu_custom_call.1} parent=51 // pred_check
          %p374 = pneg %p65
        $region54: #{tpu_custom_call.1} parent=51 // pred_check_branch
          %376 = sbr.rel (%p374) target = $region56
        $region55: #{tpu_custom_call.1} parent=51 // pred_region
          %s377 = sand.u32 %s55, 1
          %s378 = scalar_lea.sflag [#allocation6], %s377
          %s379 = sand.u32 %s55, 1
          %s380 = smul.addr %s379, 16
          %s381 = scalar_lea.vmem [#allocation5], %s380
          %s382 = smul.u32 2, %s32
          %384 = vsyncadd %s378, 0
          %s385 = smul.addr %s31, 2
          %s386 = sadd.s32 %s382, %s385
          %s387 = smul.addr %s386, 8
          %s388 = scalar_lea.hbm %s0, %s387
          %s389 = sshll.u32 %s388, 4
          %s390 = int_to_ptr.hbm [resolvable:$true] %s389
          %s391 = sshll.u32 %s381, 4
          %s392 = int_to_ptr.vmem [resolvable:$true] %s391
          %397 = dma.hbm_to_vmem [thread:$0]  %s390, 256, %s392, %s378, 128, 128, 8
        $region56: #{tpu_custom_call.1} parent=51 // pred_fallthru
          _
      $region52: #{tpu_custom_call.1} parent=5 // pred_fallthru
        _
      %p398 = scmp.le.s32.totalorder 1, %s24
      %p399 = scmp.lt.s32.totalorder %s24, 9
      %p400 = pnand %p398, %p399
      %p401 = pneg %p400
      // Predicated region
      $region57: #{tpu_custom_call.1} parent=5 // pred_check
        _
      $region58: #{tpu_custom_call.1} parent=5 // pred_check_branch
        %403 = sbr.rel (%p400) target = $region60
      $region59: #{tpu_custom_call.1} parent=5 // pred_region
        %s404 = ssub.s32 %s24, 1
        %s405 = sand.u32 %s58, 1
        %s406 = scalar_lea.sflag [#allocation6], %s405
        %s407 = sand.u32 %s58, 1
        %s408 = smul.addr %s407, 16
        %s409 = scalar_lea.vmem [#allocation5], %s408
        // Predicated region
        $region61: #{tpu_custom_call.1} parent=59 // pred_check
          %p410 = pneg %p71
        $region62: #{tpu_custom_call.1} parent=59 // pred_check_branch
          %412 = sbr.rel (%p410) target = $region64
        $region63: #{tpu_custom_call.1} parent=59 // pred_region
          %414 = dma.done %s406, 256
        $region64: #{tpu_custom_call.1} parent=59 // pred_fallthru
          _
        // Predicated region
        $region65: #{tpu_custom_call.1} parent=59 // pred_check
          %p415 = pneg %p92
        $region66: #{tpu_custom_call.1} parent=59 // pred_check_branch
          %417 = sbr.rel (%p415) target = $region68
        $region67: #{tpu_custom_call.1} parent=59 // pred_region
          %419 = dma.done [#allocation9], 6144
        $region68: #{tpu_custom_call.1} parent=59 // pred_fallthru
          _
        // Predicated region
        $region69: #{tpu_custom_call.1} parent=59 // pred_check
          %p420 = pneg %p113
        $region70: #{tpu_custom_call.1} parent=59 // pred_check_branch
          %422 = sbr.rel (%p420) target = $region72
        $region71: #{tpu_custom_call.1} parent=59 // pred_region
          %424 = dma.done [#allocation9], 48
        $region72: #{tpu_custom_call.1} parent=59 // pred_fallthru
          _
        // Predicated region
        $region73: #{tpu_custom_call.1} parent=59 // pred_check
          %p425 = pneg %p197
        $region74: #{tpu_custom_call.1} parent=59 // pred_check_branch
          %427 = sbr.rel (%p425) target = $region76
        $region75: #{tpu_custom_call.1} parent=59 // pred_region
          %429 = dma.done [#allocation12], 16
        $region76: #{tpu_custom_call.1} parent=59 // pred_fallthru
          _
        // Predicated region
        $region77: #{tpu_custom_call.1} parent=59 // pred_check
          %p430 = pneg %p239
        $region78: #{tpu_custom_call.1} parent=59 // pred_check_branch
          %432 = sbr.rel (%p430) target = $region80
        $region79: #{tpu_custom_call.1} parent=59 // pred_region
          %434 = dma.done [#allocation12], 8192
        $region80: #{tpu_custom_call.1} parent=59 // pred_fallthru
          _
        %s435 = sand.u32 %s58, 1
        %s436 = scalar_lea.sflag [#allocation6], %s435
        %s437 = sand.u32 %s58, 1
        %s438 = smul.addr %s437, 16
        %s439 = scalar_lea.vmem [#allocation5], %s438
        %p440 = pneg %p71
        %p441 = pneg %p68
        %p442 = pneg %p92
        %p443 = pneg %p89
        %p444 = pneg %p113
        %p445 = pneg %p110
        %p446 = pneg %p134
        %p447 = pneg %p131
        %p448 = pneg %p155
        %p449 = pneg %p152
        %p450 = pneg %p176
        %p451 = pneg %p173
        %p452 = pneg %p197
        %p453 = pneg %p194
        %p454 = pneg %p218
        %p455 = pneg %p215
        %p456 = pneg %p239
        %p457 = pneg %p236
        %p458 = pneg %p260
        %p459 = pneg %p257
        %p460 = pneg %p288
        %p461 = pneg %p285
        %s462 = sand.u32 %s275, 1
        %s463 = scalar_lea.sflag [#allocation7], %s462
        %s464 = sand.u32 %s275, 1
        %s465 = smul.addr %s464, 16
        %s466 = scalar_lea.vmem [#allocation14], %s465
        %s467 = smul.u32 2, %s35
        %s468 = smul.u32 2, %s35
        %p469 = scmp.eq.s32.totalorder %s36, 0
        // Predicated region
        $region81: #{tpu_custom_call.1} parent=59 // pred_check
          %p470 = pneg %p469
        $region82: #{tpu_custom_call.1} parent=59 // pred_check_branch
          %472 = sbr.rel (%p470) target = $region84
        $region83: #{tpu_custom_call.1} parent=59 // pred_region
          %v473 = vld [vmem:[%s409] sm:$0xff]
          %v474 = vld [vmem:[%s409 + $0x8] sm:$0xff]
          %v475 = vld [vmem:[#allocation8] sm:$0xff]
          %v476 = vld [vmem:[#allocation8 + $0x8] sm:$0xff]
          %v477 = vld [vmem:[#allocation8 + $0x10] sm:$0xff]
          %v478 = vld [vmem:[#allocation8 + $0x18] sm:$0xff]
          %v479 = vld [vmem:[#allocation8 + $0x20] sm:$0xff]
          %v480 = vld [vmem:[#allocation8 + $0x28] sm:$0xff]
          %v481 = vld [vmem:[#allocation8 + $0x30] sm:$0xff]
          %v482 = vld [vmem:[#allocation8 + $0x38] sm:$0xff]
          %v483 = vld [vmem:[#allocation8 + $0x40] sm:$0xff]
          %v484 = vld [vmem:[#allocation8 + $0x48] sm:$0xff]
          %v485 = vld [vmem:[#allocation8 + $0x50] sm:$0xff]
          %v486 = vld [vmem:[#allocation8 + $0x58] sm:$0xff]
          %v487 = vld [vmem:[#allocation8 + $0x60] sm:$0xff]
          %v488 = vld [vmem:[#allocation8 + $0x68] sm:$0xff]
          %v489 = vld [vmem:[#allocation8 + $0x70] sm:$0xff]
          %v490 = vld [vmem:[#allocation8 + $0x78] sm:$0xff]
          %v491 = vld [vmem:[#allocation8 + $0x80] sm:$0xff]
          %v492 = vld [vmem:[#allocation8 + $0x88] sm:$0xff]
          %v493 = vld [vmem:[#allocation8 + $0x90] sm:$0xff]
          %v494 = vld [vmem:[#allocation8 + $0x98] sm:$0xff]
          %v495 = vld [vmem:[#allocation8 + $0xa0] sm:$0xff]
          %v496 = vld [vmem:[#allocation8 + $0xa8] sm:$0xff]
          %v497 = vld [vmem:[#allocation8 + $0xb0] sm:$0xff]
          %v498 = vld [vmem:[#allocation8 + $0xb8] sm:$0xff]
          %v499 = vld [vmem:[#allocation8 + $0xc0] sm:$0xff]
          %v500 = vld [vmem:[#allocation8 + $0xc8] sm:$0xff]
          %v501 = vld [vmem:[#allocation8 + $0xd0] sm:$0xff]
          %v502 = vld [vmem:[#allocation8 + $0xd8] sm:$0xff]
          %v503 = vld [vmem:[#allocation8 + $0xe0] sm:$0xff]
          %v504 = vld [vmem:[#allocation8 + $0xe8] sm:$0xff]
          %v505 = vld [vmem:[#allocation8 + $0xf0] sm:$0xff]
          %v506 = vld [vmem:[#allocation8 + $0xf8] sm:$0xff]
          %v507 = vld [vmem:[#allocation8 + $0x100] sm:$0xff]
          %v508 = vld [vmem:[#allocation8 + $0x108] sm:$0xff]
          %v509 = vld [vmem:[#allocation8 + $0x110] sm:$0xff]
          %v510 = vld [vmem:[#allocation8 + $0x118] sm:$0xff]
          %v511 = vld [vmem:[#allocation8 + $0x120] sm:$0xff]
          %v512 = vld [vmem:[#allocation8 + $0x128] sm:$0xff]
          %v513 = vld [vmem:[#allocation8 + $0x130] sm:$0xff]
          %v514 = vld [vmem:[#allocation8 + $0x138] sm:$0xff]
          %v515 = vld [vmem:[#allocation8 + $0x140] sm:$0xff]
          %v516 = vld [vmem:[#allocation8 + $0x148] sm:$0xff]
          %v517 = vld [vmem:[#allocation8 + $0x150] sm:$0xff]
          %v518 = vld [vmem:[#allocation8 + $0x158] sm:$0xff]
          %v519 = vld [vmem:[#allocation8 + $0x160] sm:$0xff]
          %v520 = vld [vmem:[#allocation8 + $0x168] sm:$0xff]
          %v521 = vld [vmem:[#allocation8 + $0x170] sm:$0xff]
          %v522 = vld [vmem:[#allocation8 + $0x178] sm:$0xff]
          %v523 = vld [vmem:[#allocation10] sm:$0x7]
          %v525 = vperm.slane %v523, 0
          %v526 = vperm.slane %v523, 1
          %v527 = vperm.slane %v523, 2
          %531 = vmatpush.msra.mxu0 %v520
          %532 = vmatpush.msra.mxu0 %v517
          %533 = vmatpush.msra.mxu0 %v514
          %534 = vmatpush.msra.mxu0 %v511
          %535 = vmatpush.msra.mxu0 %v508
          %536 = vmatpush.msra.mxu0 %v505
          %537 = vmatpush.msra.mxu0 %v502
          %538 = vmatpush.msra.mxu0 %v499
          %539 = vmatpush.msra.mxu0 %v496
          %540 = vmatpush.msra.mxu0 %v493
          %541 = vmatpush.msra.mxu0 %v490
          %542 = vmatpush.msra.mxu0 %v487
          %543 = vmatpush.msra.mxu0 %v484
          %544 = vmatpush.msra.mxu0 %v481
          %545 = vmatpush.msra.mxu0 %v478
          %546 = vmatpush.msra.mxu0 %v475
          %547 = vmatmul.f32.gmra.mxu0 %v473
          %v548 = vpop.f32.mrf.mxu0
          %v549 = vadd.f32 %v525, %v548
          %550 = vmatmul.f32.gmra.mxu0 %v474
          %v551 = vpop.f32.mrf.mxu0
          %v552 = vadd.f32 %v525, %v551
          %553 = vdwg.mxu0
          %554 = vmatpush.msra.mxu0 %v521
          %555 = vmatpush.msra.mxu0 %v518
          %556 = vmatpush.msra.mxu0 %v515
          %557 = vmatpush.msra.mxu0 %v512
          %558 = vmatpush.msra.mxu0 %v509
          %559 = vmatpush.msra.mxu0 %v506
          %560 = vmatpush.msra.mxu0 %v503
          %561 = vmatpush.msra.mxu0 %v500
          %562 = vmatpush.msra.mxu0 %v497
          %563 = vmatpush.msra.mxu0 %v494
          %564 = vmatpush.msra.mxu0 %v491
          %565 = vmatpush.msra.mxu0 %v488
          %566 = vmatpush.msra.mxu0 %v485
          %567 = vmatpush.msra.mxu0 %v482
          %568 = vmatpush.msra.mxu0 %v479
          %569 = vmatpush.msra.mxu0 %v476
          %570 = vmatmul.f32.gmra.mxu0 %v473
          %v571 = vpop.f32.mrf.mxu0
          %v572 = vadd.f32 %v526, %v571
          %573 = vmatmul.f32.gmra.mxu0 %v474
          %v574 = vpop.f32.mrf.mxu0
          %v575 = vadd.f32 %v526, %v574
          %576 = vdwg.mxu0
          %577 = vmatpush.msra.mxu0 %v522
          %578 = vmatpush.msra.mxu0 %v519
          %579 = vmatpush.msra.mxu0 %v516
          %580 = vmatpush.msra.mxu0 %v513
          %581 = vmatpush.msra.mxu0 %v510
          %582 = vmatpush.msra.mxu0 %v507
          %583 = vmatpush.msra.mxu0 %v504
          %584 = vmatpush.msra.mxu0 %v501
          %585 = vmatpush.msra.mxu0 %v498
          %586 = vmatpush.msra.mxu0 %v495
          %587 = vmatpush.msra.mxu0 %v492
          %588 = vmatpush.msra.mxu0 %v489
          %589 = vmatpush.msra.mxu0 %v486
          %590 = vmatpush.msra.mxu0 %v483
          %591 = vmatpush.msra.mxu0 %v480
          %592 = vmatpush.msra.mxu0 %v477
          %593 = vmatmul.f32.gmra.mxu0 %v473
          %v594 = vpop.f32.mrf.mxu0
          %v595 = vadd.f32 %v527, %v594
          %596 = vmatmul.f32.gmra.mxu0 %v474
          %v597 = vpop.f32.mrf.mxu0
          %v598 = vadd.f32 %v527, %v597
          %599 = vdwg.mxu0
          %601 = vrot.lane.b32.xlu0 %v549, 96
          %v602 = vpop.permute.xlu0 %601
          %604 = vrot.lane.b32.xlu0 %v549, 64
          %v605 = vpop.permute.xlu0 %604
          %607 = vrot.lane.b32.xlu0 %v549, 32
          %v608 = vpop.permute.xlu0 %607
          %v610 = vrot.slane %v605, 4
          %vm611 = vcmask 1047556
          %v612 = vsel %vm611, %v610, %v549
          %v613 = vrot.slane %v549, 4
          %v614 = vsel %vm611, %v605, %v613
          %v616 = vunpack.c.l.s4 1983009808
          %v617 = vunpack.c.0.s8 %v616
          %v618 = vperm.slane %v612, %v617
          %v620 = vunpack.c.l.s4 1983009808
          %v621 = vunpack.c.0.s8 %v620
          %v622 = vperm.slane %v614, %v621
          %v623 = vrot.slane %v608, 4
          %v624 = vsel %vm611, %v623, %v602
          %v625 = vrot.slane %v602, 4
          %v626 = vsel %vm611, %v608, %v625
          %v628 = vunpack.c.l.s4 1983009808
          %v629 = vunpack.c.0.s8 %v628
          %v630 = vperm.slane %v624, %v629
          %v632 = vunpack.c.l.s4 1983009808
          %v633 = vunpack.c.0.s8 %v632
          %v634 = vperm.slane %v626, %v633
          %v635 = vrot.slane %v630, 4
          %v636 = vsel %vm611, %v635, %v618
          %v637 = vrot.slane %v618, 4
          %v638 = vsel %vm611, %v630, %v637
          %v640 = vunpack.c.l.s4 1934713408
          %v641 = vunpack.c.0.s8 %v640
          %v642 = vperm.slane %v636, %v641
          %v644 = vunpack.c.l.s4 1934713408
          %v645 = vunpack.c.0.s8 %v644
          %v646 = vperm.slane %v638, %v645
          %v647 = vrot.slane %v634, 4
          %v648 = vsel %vm611, %v647, %v622
          %v649 = vrot.slane %v622, 4
          %v650 = vsel %vm611, %v634, %v649
          %v652 = vunpack.c.l.s4 1934713408
          %v653 = vunpack.c.0.s8 %v652
          %v654 = vperm.slane %v648, %v653
          %v656 = vunpack.c.l.s4 1934713408
          %v657 = vunpack.c.0.s8 %v656
          %v658 = vperm.slane %v650, %v657
          %v659 = vrot.slane %v642, 4
          %v660 = vsel %vm611, 0.0, %v659
          %v661 = vrot.slane %v646, 4
          %v662 = vsel %vm611, 0.0, %v661
          %v663 = vrot.slane %v654, 4
          %v664 = vsel %vm611, 0.0, %v663
          %v665 = vrot.slane %v658, 4
          %v666 = vsel %vm611, 0.0, %v665
          %v667 = vsel %vm611, %v661, %v642
          %v669 = vunpack.c.l.s4 1983009808
          %v670 = vunpack.c.0.s8 %v669
          %v671 = vperm.slane %v667, %v670
          %v672 = vrot.slane %v662, 4
          %v673 = vsel %vm611, %v672, %v660
          %v675 = vunpack.c.l.s4 1983009808
          %v676 = vunpack.c.0.s8 %v675
          %v677 = vperm.slane %v673, %v676
          %v678 = vsel %vm611, %v665, %v654
          %v680 = vunpack.c.l.s4 1983009808
          %v681 = vunpack.c.0.s8 %v680
          %v682 = vperm.slane %v678, %v681
          %v683 = vrot.slane %v666, 4
          %v684 = vsel %vm611, %v683, %v664
          %v686 = vunpack.c.l.s4 1983009808
          %v687 = vunpack.c.0.s8 %v686
          %v688 = vperm.slane %v684, %v687
          %v689 = vrot.slane %v677, 4
          %v690 = vsel %vm611, %v689, %v671
          %v691 = vrot.slane %v671, 4
          %v692 = vsel %vm611, %v677, %v691
          %v694 = vunpack.c.l.s4 1934713408
          %v695 = vunpack.c.0.s8 %v694
          %v696 = vperm.slane %v690, %v695
          %v698 = vunpack.c.l.s4 1934713408
          %v699 = vunpack.c.0.s8 %v698
          %v700 = vperm.slane %v692, %v699
          %v701 = vrot.slane %v688, 4
          %v702 = vsel %vm611, %v701, %v682
          %v703 = vrot.slane %v682, 4
          %v704 = vsel %vm611, %v688, %v703
          %v706 = vunpack.c.l.s4 1934713408
          %v707 = vunpack.c.0.s8 %v706
          %v708 = vperm.slane %v702, %v707
          %v710 = vunpack.c.l.s4 1934713408
          %v711 = vunpack.c.0.s8 %v710
          %v712 = vperm.slane %v704, %v711
          %v713 = vrot.slane %v708, 4
          %v714 = vsel %vm611, %v713, %v696
          %v715 = vrot.slane %v696, 4
          %v716 = vsel %vm611, %v708, %v715
          %v717 = vrot.slane %v712, 4
          %v718 = vsel %vm611, %v717, %v700
          %v719 = vrot.slane %v700, 4
          %v720 = vsel %vm611, %v712, %v719
          %722 = vrot.lane.b32.xlu0 %v572, 96
          %v723 = vpop.permute.xlu0 %722
          %725 = vrot.lane.b32.xlu0 %v572, 64
          %v726 = vpop.permute.xlu0 %725
          %728 = vrot.lane.b32.xlu0 %v572, 32
          %v729 = vpop.permute.xlu0 %728
          %v731 = vrot.slane %v726, 4
          %v732 = vsel %vm611, %v731, %v572
          %v733 = vrot.slane %v572, 4
          %v734 = vsel %vm611, %v726, %v733
          %v736 = vunpack.c.l.s4 1983009808
          %v737 = vunpack.c.0.s8 %v736
          %v738 = vperm.slane %v732, %v737
          %v740 = vunpack.c.l.s4 1983009808
          %v741 = vunpack.c.0.s8 %v740
          %v742 = vperm.slane %v734, %v741
          %v743 = vrot.slane %v729, 4
          %v744 = vsel %vm611, %v743, %v723
          %v745 = vrot.slane %v723, 4
          %v746 = vsel %vm611, %v729, %v745
          %v748 = vunpack.c.l.s4 1983009808
          %v749 = vunpack.c.0.s8 %v748
          %v750 = vperm.slane %v744, %v749
          %v752 = vunpack.c.l.s4 1983009808
          %v753 = vunpack.c.0.s8 %v752
          %v754 = vperm.slane %v746, %v753
          %v755 = vrot.slane %v750, 4
          %v756 = vsel %vm611, %v755, %v738
          %v757 = vrot.slane %v738, 4
          %v758 = vsel %vm611, %v750, %v757
          %v760 = vunpack.c.l.s4 1934713408
          %v761 = vunpack.c.0.s8 %v760
          %v762 = vperm.slane %v756, %v761
          %v764 = vunpack.c.l.s4 1934713408
          %v765 = vunpack.c.0.s8 %v764
          %v766 = vperm.slane %v758, %v765
          %v767 = vrot.slane %v754, 4
          %v768 = vsel %vm611, %v767, %v742
          %v769 = vrot.slane %v742, 4
          %v770 = vsel %vm611, %v754, %v769
          %v772 = vunpack.c.l.s4 1934713408
          %v773 = vunpack.c.0.s8 %v772
          %v774 = vperm.slane %v768, %v773
          %v776 = vunpack.c.l.s4 1934713408
          %v777 = vunpack.c.0.s8 %v776
          %v778 = vperm.slane %v770, %v777
          %v779 = vrot.slane %v762, 4
          %v780 = vsel %vm611, 0.0, %v779
          %v781 = vrot.slane %v766, 4
          %v782 = vsel %vm611, 0.0, %v781
          %v783 = vrot.slane %v774, 4
          %v784 = vsel %vm611, 0.0, %v783
          %v785 = vrot.slane %v778, 4
          %v786 = vsel %vm611, 0.0, %v785
          %v787 = vsel %vm611, %v781, %v762
          %v789 = vunpack.c.l.s4 1983009808
          %v790 = vunpack.c.0.s8 %v789
          %v791 = vperm.slane %v787, %v790
          %v792 = vrot.slane %v782, 4
          %v793 = vsel %vm611, %v792, %v780
          %v795 = vunpack.c.l.s4 1983009808
          %v796 = vunpack.c.0.s8 %v795
          %v797 = vperm.slane %v793, %v796
          %v798 = vsel %vm611, %v785, %v774
          %v800 = vunpack.c.l.s4 1983009808
          %v801 = vunpack.c.0.s8 %v800
          %v802 = vperm.slane %v798, %v801
          %v803 = vrot.slane %v786, 4
          %v804 = vsel %vm611, %v803, %v784
          %v806 = vunpack.c.l.s4 1983009808
          %v807 = vunpack.c.0.s8 %v806
          %v808 = vperm.slane %v804, %v807
          %v809 = vrot.slane %v797, 4
          %v810 = vsel %vm611, %v809, %v791
          %v811 = vrot.slane %v791, 4
          %v812 = vsel %vm611, %v797, %v811
          %v814 = vunpack.c.l.s4 1934713408
          %v815 = vunpack.c.0.s8 %v814
          %v816 = vperm.slane %v810, %v815
          %v818 = vunpack.c.l.s4 1934713408
          %v819 = vunpack.c.0.s8 %v818
          %v820 = vperm.slane %v812, %v819
          %v821 = vrot.slane %v808, 4
          %v822 = vsel %vm611, %v821, %v802
          %v823 = vrot.slane %v802, 4
          %v824 = vsel %vm611, %v808, %v823
          %v826 = vunpack.c.l.s4 1934713408
          %v827 = vunpack.c.0.s8 %v826
          %v828 = vperm.slane %v822, %v827
          %v830 = vunpack.c.l.s4 1934713408
          %v831 = vunpack.c.0.s8 %v830
          %v832 = vperm.slane %v824, %v831
          %v833 = vrot.slane %v828, 4
          %v834 = vsel %vm611, %v833, %v816
          %v835 = vrot.slane %v816, 4
          %v836 = vsel %vm611, %v828, %v835
          %v837 = vrot.slane %v832, 4
          %v838 = vsel %vm611, %v837, %v820
          %v839 = vrot.slane %v820, 4
          %v840 = vsel %vm611, %v832, %v839
          %842 = vrot.lane.b32.xlu0 %v595, 96
          %v843 = vpop.permute.xlu0 %842
          %845 = vrot.lane.b32.xlu0 %v595, 64
          %v846 = vpop.permute.xlu0 %845
          %848 = vrot.lane.b32.xlu0 %v595, 32
          %v849 = vpop.permute.xlu0 %848
          %v851 = vrot.slane %v846, 4
          %v852 = vsel %vm611, %v851, %v595
          %v853 = vrot.slane %v595, 4
          %v854 = vsel %vm611, %v846, %v853
          %v856 = vunpack.c.l.s4 1983009808
          %v857 = vunpack.c.0.s8 %v856
          %v858 = vperm.slane %v852, %v857
          %v860 = vunpack.c.l.s4 1983009808
          %v861 = vunpack.c.0.s8 %v860
          %v862 = vperm.slane %v854, %v861
          %v863 = vrot.slane %v849, 4
          %v864 = vsel %vm611, %v863, %v843
          %v865 = vrot.slane %v843, 4
          %v866 = vsel %vm611, %v849, %v865
          %v868 = vunpack.c.l.s4 1983009808
          %v869 = vunpack.c.0.s8 %v868
          %v870 = vperm.slane %v864, %v869
          %v872 = vunpack.c.l.s4 1983009808
          %v873 = vunpack.c.0.s8 %v872
          %v874 = vperm.slane %v866, %v873
          %v875 = vrot.slane %v870, 4
          %v876 = vsel %vm611, %v875, %v858
          %v877 = vrot.slane %v858, 4
          %v878 = vsel %vm611, %v870, %v877
          %v880 = vunpack.c.l.s4 1934713408
          %v881 = vunpack.c.0.s8 %v880
          %v882 = vperm.slane %v876, %v881
          %v884 = vunpack.c.l.s4 1934713408
          %v885 = vunpack.c.0.s8 %v884
          %v886 = vperm.slane %v878, %v885
          %v887 = vrot.slane %v874, 4
          %v888 = vsel %vm611, %v887, %v862
          %v889 = vrot.slane %v862, 4
          %v890 = vsel %vm611, %v874, %v889
          %v892 = vunpack.c.l.s4 1934713408
          %v893 = vunpack.c.0.s8 %v892
          %v894 = vperm.slane %v888, %v893
          %v896 = vunpack.c.l.s4 1934713408
          %v897 = vunpack.c.0.s8 %v896
          %v898 = vperm.slane %v890, %v897
          %v899 = vrot.slane %v882, 4
          %v900 = vsel %vm611, 0.0, %v899
          %v901 = vrot.slane %v886, 4
          %v902 = vsel %vm611, 0.0, %v901
          %v903 = vrot.slane %v894, 4
          %v904 = vsel %vm611, 0.0, %v903
          %v905 = vrot.slane %v898, 4
          %v906 = vsel %vm611, 0.0, %v905
          %v907 = vsel %vm611, %v901, %v882
          %v909 = vunpack.c.l.s4 1983009808
          %v910 = vunpack.c.0.s8 %v909
          %v911 = vperm.slane %v907, %v910
          %v912 = vrot.slane %v902, 4
          %v913 = vsel %vm611, %v912, %v900
          %v915 = vunpack.c.l.s4 1983009808
          %v916 = vunpack.c.0.s8 %v915
          %v917 = vperm.slane %v913, %v916
          %v918 = vsel %vm611, %v905, %v894
          %v920 = vunpack.c.l.s4 1983009808
          %v921 = vunpack.c.0.s8 %v920
          %v922 = vperm.slane %v918, %v921
          %v923 = vrot.slane %v906, 4
          %v924 = vsel %vm611, %v923, %v904
          %v926 = vunpack.c.l.s4 1983009808
          %v927 = vunpack.c.0.s8 %v926
          %v928 = vperm.slane %v924, %v927
          %v929 = vrot.slane %v917, 4
          %v930 = vsel %vm611, %v929, %v911
          %v931 = vrot.slane %v911, 4
          %v932 = vsel %vm611, %v917, %v931
          %v934 = vunpack.c.l.s4 1934713408
          %v935 = vunpack.c.0.s8 %v934
          %v936 = vperm.slane %v930, %v935
          %v938 = vunpack.c.l.s4 1934713408
          %v939 = vunpack.c.0.s8 %v938
          %v940 = vperm.slane %v932, %v939
          %v941 = vrot.slane %v928, 4
          %v942 = vsel %vm611, %v941, %v922
          %v943 = vrot.slane %v922, 4
          %v944 = vsel %vm611, %v928, %v943
          %v946 = vunpack.c.l.s4 1934713408
          %v947 = vunpack.c.0.s8 %v946
          %v948 = vperm.slane %v942, %v947
          %v950 = vunpack.c.l.s4 1934713408
          %v951 = vunpack.c.0.s8 %v950
          %v952 = vperm.slane %v944, %v951
          %v953 = vrot.slane %v948, 4
          %v954 = vsel %vm611, %v953, %v936
          %v955 = vrot.slane %v936, 4
          %v956 = vsel %vm611, %v948, %v955
          %v957 = vrot.slane %v952, 4
          %v958 = vsel %vm611, %v957, %v940
          %v959 = vrot.slane %v940, 4
          %v960 = vsel %vm611, %v952, %v959
          %vm961 = vcmask 261120
          %v963 = vsel %vm961, %v714, 0
          %v966 = vsel %vm961, %v834, 0
          %968 = vmatpush.xpose.msra.mxu0 0.0
          %969 = vmatpush.xpose.msra.mxu0 0.0
          %970 = vmatpush.xpose.msra.mxu0 0.0
          %971 = vmatpush.xpose.msra.mxu0 0.0
          %972 = vmatpush.xpose.msra.mxu0 0.0
          %973 = vmatpush.xpose.msra.mxu0 0.0
          %974 = vmatpush.xpose.msra.mxu0 0.0
          %975 = vmatpush.xpose.msra.mxu0 0.0
          %976 = vmatpush.xpose.msra.mxu0 0.0
          %977 = vmatpush.xpose.msra.mxu0 0.0
          %978 = vmatpush.xpose.msra.mxu0 0.0
          %979 = vmatpush.xpose.msra.mxu0 0.0
          %980 = vmatpush.xpose.msra.mxu0 0.0
          %981 = vmatpush.xpose.msra.mxu0 0.0
          %982 = vmatpush.xpose.msra.mxu0 0.0
          %983 = vmatpush.xpose.msra.mxu0 %v966
          %984 = vmatmul.f32.gmra.mxu0 %v963
          %v985 = vpop.f32.mrf.mxu0
          %v986 = vadd.f32 0.0, %v985
          %987 = vdwg.mxu0
          %v989 = vsel %vm961, %v716, 0
          %v992 = vsel %vm961, %v836, 0
          %994 = vmatpush.xpose.msra.mxu0 0.0
          %995 = vmatpush.xpose.msra.mxu0 0.0
          %996 = vmatpush.xpose.msra.mxu0 0.0
          %997 = vmatpush.xpose.msra.mxu0 0.0
          %998 = vmatpush.xpose.msra.mxu0 0.0
          %999 = vmatpush.xpose.msra.mxu0 0.0
          %1000 = vmatpush.xpose.msra.mxu0 0.0
          %1001 = vmatpush.xpose.msra.mxu0 0.0
          %1002 = vmatpush.xpose.msra.mxu0 0.0
          %1003 = vmatpush.xpose.msra.mxu0 0.0
          %1004 = vmatpush.xpose.msra.mxu0 0.0
          %1005 = vmatpush.xpose.msra.mxu0 0.0
          %1006 = vmatpush.xpose.msra.mxu0 0.0
          %1007 = vmatpush.xpose.msra.mxu0 0.0
          %1008 = vmatpush.xpose.msra.mxu0 0.0
          %1009 = vmatpush.xpose.msra.mxu0 %v992
          %1010 = vmatmul.f32.gmra.mxu0 %v989
          %v1011 = vpop.f32.mrf.mxu0
          %v1012 = vadd.f32 0.0, %v1011
          %1013 = vdwg.mxu0
          %v1015 = vsel %vm961, %v718, 0
          %v1018 = vsel %vm961, %v838, 0
          %1020 = vmatpush.xpose.msra.mxu0 0.0
          %1021 = vmatpush.xpose.msra.mxu0 0.0
          %1022 = vmatpush.xpose.msra.mxu0 0.0
          %1023 = vmatpush.xpose.msra.mxu0 0.0
          %1024 = vmatpush.xpose.msra.mxu0 0.0
          %1025 = vmatpush.xpose.msra.mxu0 0.0
          %1026 = vmatpush.xpose.msra.mxu0 0.0
          %1027 = vmatpush.xpose.msra.mxu0 0.0
          %1028 = vmatpush.xpose.msra.mxu0 0.0
          %1029 = vmatpush.xpose.msra.mxu0 0.0
          %1030 = vmatpush.xpose.msra.mxu0 0.0
          %1031 = vmatpush.xpose.msra.mxu0 0.0
          %1032 = vmatpush.xpose.msra.mxu0 0.0
          %1033 = vmatpush.xpose.msra.mxu0 0.0
          %1034 = vmatpush.xpose.msra.mxu0 0.0
          %1035 = vmatpush.xpose.msra.mxu0 %v1018
          %1036 = vmatmul.f32.gmra.mxu0 %v1015
          %v1037 = vpop.f32.mrf.mxu0
          %v1038 = vadd.f32 0.0, %v1037
          %1039 = vdwg.mxu0
          %v1041 = vsel %vm961, %v720, 0
          %v1044 = vsel %vm961, %v840, 0
          %1046 = vmatpush.xpose.msra.mxu0 0.0
          %1047 = vmatpush.xpose.msra.mxu0 0.0
          %1048 = vmatpush.xpose.msra.mxu0 0.0
          %1049 = vmatpush.xpose.msra.mxu0 0.0
          %1050 = vmatpush.xpose.msra.mxu0 0.0
          %1051 = vmatpush.xpose.msra.mxu0 0.0
          %1052 = vmatpush.xpose.msra.mxu0 0.0
          %1053 = vmatpush.xpose.msra.mxu0 0.0
          %1054 = vmatpush.xpose.msra.mxu0 0.0
          %1055 = vmatpush.xpose.msra.mxu0 0.0
          %1056 = vmatpush.xpose.msra.mxu0 0.0
          %1057 = vmatpush.xpose.msra.mxu0 0.0
          %1058 = vmatpush.xpose.msra.mxu0 0.0
          %1059 = vmatpush.xpose.msra.mxu0 0.0
          %1060 = vmatpush.xpose.msra.mxu0 0.0
          %1061 = vmatpush.xpose.msra.mxu0 %v1044
          %1062 = vmatmul.f32.gmra.mxu0 %v1041
          %v1063 = vpop.f32.mrf.mxu0
          %v1064 = vadd.f32 0.0, %v1063
          %1065 = vdwg.mxu0
          %v1066 = vmul.f32 %v986, 0.17677669
          %v1067 = vmul.f32 %v1012, 0.17677669
          %v1068 = vmul.f32 %v1038, 0.17677669
          %v1069 = vmul.f32 %v1064, 0.17677669
          %vm1070 = vcmask 64512
          %v1071 = vsel %vm1070, %v1066, -inf
          %1072 = vmax.xlane.f32.xlu0 %v1071
          %v1073 = vpop.xlane.xlu0 %1072
          %v1074 = vsel %vm1070, %v1067, -inf
          %1075 = vmax.xlane.f32.xlu0 %v1074
          %v1076 = vpop.xlane.xlu0 %1075
          %v1077 = vsel %vm1070, %v1068, -inf
          %1078 = vmax.xlane.f32.xlu0 %v1077
          %v1079 = vpop.xlane.xlu0 %1078
          %v1080 = vsel %vm1070, %v1069, -inf
          %1081 = vmax.xlane.f32.xlu0 %v1080
          %v1082 = vpop.xlane.xlu0 %1081
          %v1083 = vsub.f32 %v1066, %v1073
          %v1084 = vsub.f32 %v1067, %v1076
          %v1085 = vsub.f32 %v1068, %v1079
          %v1086 = vsub.f32 %v1069, %v1082
          %v1087 = vmul.f32 %v1083, 1.442695
          %v1088 = vpow.pop %v1087
          %v1089 = vmul.f32 %v1084, 1.442695
          %v1090 = vpow.pop %v1089
          %v1091 = vmul.f32 %v1085, 1.442695
          %v1092 = vpow.pop %v1091
          %v1093 = vmul.f32 %v1086, 1.442695
          %v1094 = vpow.pop %v1093
          %v1095 = vsel %vm1070, %v1088, 0.0
          %1096 = vadd.xlane.f32.xlu0 %v1095
          %v1097 = vpop.xlane.xlu0 %1096
          %v1098 = vsel %vm1070, %v1090, 0.0
          %1099 = vadd.xlane.f32.xlu0 %v1098
          %v1100 = vpop.xlane.xlu0 %1099
          %v1101 = vsel %vm1070, %v1092, 0.0
          %1102 = vadd.xlane.f32.xlu0 %v1101
          %v1103 = vpop.xlane.xlu0 %1102
          %v1104 = vsel %vm1070, %v1094, 0.0
          %1105 = vadd.xlane.f32.xlu0 %v1104
          %v1106 = vpop.xlane.xlu0 %1105
          %v1107 = vrcp.pop %v1097
          %v1108 = vrcp.pop %v1100
          %v1109 = vrcp.pop %v1103
          %v1110 = vrcp.pop %v1106
          %v1111 = vmul.f32 %v1088, %v1107
          %v1112 = vmul.f32 %v1090, %v1108
          %v1113 = vmul.f32 %v1092, %v1109
          %v1114 = vmul.f32 %v1094, %v1110
          %v1116 = vsel %vm1070, %v1111, 0
          %1118 = vmatpush.msra.mxu0 0.0
          %1119 = vmatpush.msra.mxu0 0.0
          %1120 = vmatpush.msra.mxu0 0.0
          %1121 = vmatpush.msra.mxu0 0.0
          %1122 = vmatpush.msra.mxu0 0.0
          %1123 = vmatpush.msra.mxu0 0.0
          %1124 = vmatpush.msra.mxu0 0.0
          %1125 = vmatpush.msra.mxu0 0.0
          %1126 = vmatpush.msra.mxu0 0.0
          %1127 = vmatpush.msra.mxu0 0.0
          %1128 = vmatpush.msra.mxu0 0.0
          %1129 = vmatpush.msra.mxu0 0.0
          %1130 = vmatpush.msra.mxu0 0.0
          %1131 = vmatpush.msra.mxu0 0.0
          %1132 = vmatpush.msra.mxu0 0.0
          %1133 = vmatpush.msra.mxu0 %v954
          %1134 = vmatmul.f32.gmra.mxu0 %v1116
          %v1135 = vpop.f32.mrf.mxu0
          %v1136 = vadd.f32 0.0, %v1135
          %1137 = vdwg.mxu0
          %v1139 = vsel %vm1070, %v1112, 0
          %1141 = vmatpush.msra.mxu0 0.0
          %1142 = vmatpush.msra.mxu0 0.0
          %1143 = vmatpush.msra.mxu0 0.0
          %1144 = vmatpush.msra.mxu0 0.0
          %1145 = vmatpush.msra.mxu0 0.0
          %1146 = vmatpush.msra.mxu0 0.0
          %1147 = vmatpush.msra.mxu0 0.0
          %1148 = vmatpush.msra.mxu0 0.0
          %1149 = vmatpush.msra.mxu0 0.0
          %1150 = vmatpush.msra.mxu0 0.0
          %1151 = vmatpush.msra.mxu0 0.0
          %1152 = vmatpush.msra.mxu0 0.0
          %1153 = vmatpush.msra.mxu0 0.0
          %1154 = vmatpush.msra.mxu0 0.0
          %1155 = vmatpush.msra.mxu0 0.0
          %1156 = vmatpush.msra.mxu0 %v956
          %1157 = vmatmul.f32.gmra.mxu0 %v1139
          %v1158 = vpop.f32.mrf.mxu0
          %v1159 = vadd.f32 0.0, %v1158
          %1160 = vdwg.mxu0
          %v1162 = vsel %vm1070, %v1113, 0
          %1164 = vmatpush.msra.mxu0 0.0
          %1165 = vmatpush.msra.mxu0 0.0
          %1166 = vmatpush.msra.mxu0 0.0
          %1167 = vmatpush.msra.mxu0 0.0
          %1168 = vmatpush.msra.mxu0 0.0
          %1169 = vmatpush.msra.mxu0 0.0
          %1170 = vmatpush.msra.mxu0 0.0
          %1171 = vmatpush.msra.mxu0 0.0
          %1172 = vmatpush.msra.mxu0 0.0
          %1173 = vmatpush.msra.mxu0 0.0
          %1174 = vmatpush.msra.mxu0 0.0
          %1175 = vmatpush.msra.mxu0 0.0
          %1176 = vmatpush.msra.mxu0 0.0
          %1177 = vmatpush.msra.mxu0 0.0
          %1178 = vmatpush.msra.mxu0 0.0
          %1179 = vmatpush.msra.mxu0 %v958
          %1180 = vmatmul.f32.gmra.mxu0 %v1162
          %v1181 = vpop.f32.mrf.mxu0
          %v1182 = vadd.f32 0.0, %v1181
          %1183 = vdwg.mxu0
          %v1185 = vsel %vm1070, %v1114, 0
          %1187 = vmatpush.msra.mxu0 0.0
          %1188 = vmatpush.msra.mxu0 0.0
          %1189 = vmatpush.msra.mxu0 0.0
          %1190 = vmatpush.msra.mxu0 0.0
          %1191 = vmatpush.msra.mxu0 0.0
          %1192 = vmatpush.msra.mxu0 0.0
          %1193 = vmatpush.msra.mxu0 0.0
          %1194 = vmatpush.msra.mxu0 0.0
          %1195 = vmatpush.msra.mxu0 0.0
          %1196 = vmatpush.msra.mxu0 0.0
          %1197 = vmatpush.msra.mxu0 0.0
          %1198 = vmatpush.msra.mxu0 0.0
          %1199 = vmatpush.msra.mxu0 0.0
          %1200 = vmatpush.msra.mxu0 0.0
          %1201 = vmatpush.msra.mxu0 0.0
          %1202 = vmatpush.msra.mxu0 %v960
          %1203 = vmatmul.f32.gmra.mxu0 %v1185
          %v1204 = vpop.f32.mrf.mxu0
          %v1205 = vadd.f32 0.0, %v1204
          %1206 = vdwg.mxu0
          %v1207 = vrot.slane %v1182, 4
          %v1208 = vsel %vm611, %v1207, %v1136
          %v1209 = vrot.slane %v1136, 4
          %v1210 = vsel %vm611, %v1182, %v1209
          %v1212 = vunpack.c.l.s4 1983009808
          %v1213 = vunpack.c.0.s8 %v1212
          %v1214 = vperm.slane %v1208, %v1213
          %v1216 = vunpack.c.l.s4 1983009808
          %v1217 = vunpack.c.0.s8 %v1216
          %v1218 = vperm.slane %v1210, %v1217
          %v1219 = vrot.slane %v1205, 4
          %v1220 = vsel %vm611, %v1219, %v1159
          %v1221 = vrot.slane %v1159, 4
          %v1222 = vsel %vm611, %v1205, %v1221
          %v1224 = vunpack.c.l.s4 1983009808
          %v1225 = vunpack.c.0.s8 %v1224
          %v1226 = vperm.slane %v1220, %v1225
          %v1228 = vunpack.c.l.s4 1983009808
          %v1229 = vunpack.c.0.s8 %v1228
          %v1230 = vperm.slane %v1222, %v1229
          %v1231 = vrot.slane %v1226, 4
          %v1232 = vsel %vm611, %v1231, %v1214
          %v1233 = vrot.slane %v1214, 4
          %v1234 = vsel %vm611, %v1226, %v1233
          %v1236 = vunpack.c.l.s4 1934713408
          %v1237 = vunpack.c.0.s8 %v1236
          %v1238 = vperm.slane %v1232, %v1237
          %v1240 = vunpack.c.l.s4 1934713408
          %v1241 = vunpack.c.0.s8 %v1240
          %v1242 = vperm.slane %v1234, %v1241
          %v1243 = vrot.slane %v1230, 4
          %v1244 = vsel %vm611, %v1243, %v1218
          %v1245 = vrot.slane %v1218, 4
          %v1246 = vsel %vm611, %v1230, %v1245
          %v1248 = vunpack.c.l.s4 1934713408
          %v1249 = vunpack.c.0.s8 %v1248
          %v1250 = vperm.slane %v1244, %v1249
          %v1252 = vunpack.c.l.s4 1934713408
          %v1253 = vunpack.c.0.s8 %v1252
          %v1254 = vperm.slane %v1246, %v1253
          %v1255 = vrot.slane %v1238, 4
          %v1256 = vsel %vm611, 0.0, %v1255
          %v1257 = vrot.slane %v1242, 4
          %v1258 = vsel %vm611, 0.0, %v1257
          %v1259 = vrot.slane %v1250, 4
          %v1260 = vsel %vm611, 0.0, %v1259
          %v1261 = vrot.slane %v1254, 4
          %v1262 = vsel %vm611, 0.0, %v1261
          %v1263 = vsel %vm611, %v1257, %v1238
          %v1265 = vunpack.c.l.s4 1983009808
          %v1266 = vunpack.c.0.s8 %v1265
          %v1267 = vperm.slane %v1263, %v1266
          %v1268 = vrot.slane %v1258, 4
          %v1269 = vsel %vm611, %v1268, %v1256
          %v1271 = vunpack.c.l.s4 1983009808
          %v1272 = vunpack.c.0.s8 %v1271
          %v1273 = vperm.slane %v1269, %v1272
          %v1274 = vsel %vm611, %v1261, %v1250
          %v1276 = vunpack.c.l.s4 1983009808
          %v1277 = vunpack.c.0.s8 %v1276
          %v1278 = vperm.slane %v1274, %v1277
          %v1279 = vrot.slane %v1262, 4
          %v1280 = vsel %vm611, %v1279, %v1260
          %v1282 = vunpack.c.l.s4 1983009808
          %v1283 = vunpack.c.0.s8 %v1282
          %v1284 = vperm.slane %v1280, %v1283
          %v1285 = vrot.slane %v1273, 4
          %v1286 = vsel %vm611, %v1285, %v1267
          %v1287 = vrot.slane %v1267, 4
          %v1288 = vsel %vm611, %v1273, %v1287
          %v1290 = vunpack.c.l.s4 1934713408
          %v1291 = vunpack.c.0.s8 %v1290
          %v1292 = vperm.slane %v1286, %v1291
          %v1294 = vunpack.c.l.s4 1934713408
          %v1295 = vunpack.c.0.s8 %v1294
          %v1296 = vperm.slane %v1288, %v1295
          %v1297 = vrot.slane %v1284, 4
          %v1298 = vsel %vm611, %v1297, %v1278
          %v1299 = vrot.slane %v1278, 4
          %v1300 = vsel %vm611, %v1284, %v1299
          %v1302 = vunpack.c.l.s4 1934713408
          %v1303 = vunpack.c.0.s8 %v1302
          %v1304 = vperm.slane %v1298, %v1303
          %v1306 = vunpack.c.l.s4 1934713408
          %v1307 = vunpack.c.0.s8 %v1306
          %v1308 = vperm.slane %v1300, %v1307
          %v1309 = vrot.slane %v1304, 4
          %v1310 = vsel %vm611, %v1309, %v1292
          %v1311 = vrot.slane %v1292, 4
          %v1312 = vsel %vm611, %v1304, %v1311
          %v1313 = vrot.slane %v1308, 4
          %v1314 = vsel %vm611, %v1313, %v1296
          %v1315 = vrot.slane %v1296, 4
          %v1316 = vsel %vm611, %v1308, %v1315
          %1318 = vrot.lane.b32.xlu0 %v1312, 32
          %v1319 = vpop.permute.xlu0 %1318
          %1322 = vrot.lane.b32.xlu0 %v1314, 64
          %v1323 = vpop.permute.xlu0 %1322
          %1326 = vrot.lane.b32.xlu0 %v1316, 96
          %v1327 = vpop.permute.xlu0 %1326
          %v1329 = vsel %vm961, %v1310, %v1319
          %vm1330 = vcmask 523264
          %v1331 = vsel %vm1330, %v1329, %v1323
          %vm1332 = vcmask 785408
          %v1333 = vsel %vm1332, %v1331, %v1327
          %1335 = vrot.lane.b32.xlu0 %v552, 96
          %v1336 = vpop.permute.xlu0 %1335
          %1338 = vrot.lane.b32.xlu0 %v552, 64
          %v1339 = vpop.permute.xlu0 %1338
          %1341 = vrot.lane.b32.xlu0 %v552, 32
          %v1342 = vpop.permute.xlu0 %1341
          %v1344 = vrot.slane %v1339, 4
          %v1345 = vsel %vm611, %v1344, %v552
          %v1346 = vrot.slane %v552, 4
          %v1347 = vsel %vm611, %v1339, %v1346
          %v1349 = vunpack.c.l.s4 1983009808
          %v1350 = vunpack.c.0.s8 %v1349
          %v1351 = vperm.slane %v1345, %v1350
          %v1353 = vunpack.c.l.s4 1983009808
          %v1354 = vunpack.c.0.s8 %v1353
          %v1355 = vperm.slane %v1347, %v1354
          %v1356 = vrot.slane %v1342, 4
          %v1357 = vsel %vm611, %v1356, %v1336
          %v1358 = vrot.slane %v1336, 4
          %v1359 = vsel %vm611, %v1342, %v1358
          %v1361 = vunpack.c.l.s4 1983009808
          %v1362 = vunpack.c.0.s8 %v1361
          %v1363 = vperm.slane %v1357, %v1362
          %v1365 = vunpack.c.l.s4 1983009808
          %v1366 = vunpack.c.0.s8 %v1365
          %v1367 = vperm.slane %v1359, %v1366
          %v1368 = vrot.slane %v1363, 4
          %v1369 = vsel %vm611, %v1368, %v1351
          %v1370 = vrot.slane %v1351, 4
          %v1371 = vsel %vm611, %v1363, %v1370
          %v1373 = vunpack.c.l.s4 1934713408
          %v1374 = vunpack.c.0.s8 %v1373
          %v1375 = vperm.slane %v1369, %v1374
          %v1377 = vunpack.c.l.s4 1934713408
          %v1378 = vunpack.c.0.s8 %v1377
          %v1379 = vperm.slane %v1371, %v1378
          %v1380 = vrot.slane %v1367, 4
          %v1381 = vsel %vm611, %v1380, %v1355
          %v1382 = vrot.slane %v1355, 4
          %v1383 = vsel %vm611, %v1367, %v1382
          %v1385 = vunpack.c.l.s4 1934713408
          %v1386 = vunpack.c.0.s8 %v1385
          %v1387 = vperm.slane %v1381, %v1386
          %v1389 = vunpack.c.l.s4 1934713408
          %v1390 = vunpack.c.0.s8 %v1389
          %v1391 = vperm.slane %v1383, %v1390
          %v1392 = vrot.slane %v1375, 4
          %v1393 = vsel %vm611, 0.0, %v1392
          %v1394 = vrot.slane %v1379, 4
          %v1395 = vsel %vm611, 0.0, %v1394
          %v1396 = vrot.slane %v1387, 4
          %v1397 = vsel %vm611, 0.0, %v1396
          %v1398 = vrot.slane %v1391, 4
          %v1399 = vsel %vm611, 0.0, %v1398
          %v1400 = vsel %vm611, %v1394, %v1375
          %v1402 = vunpack.c.l.s4 1983009808
          %v1403 = vunpack.c.0.s8 %v1402
          %v1404 = vperm.slane %v1400, %v1403
          %v1405 = vrot.slane %v1395, 4
          %v1406 = vsel %vm611, %v1405, %v1393
          %v1408 = vunpack.c.l.s4 1983009808
          %v1409 = vunpack.c.0.s8 %v1408
          %v1410 = vperm.slane %v1406, %v1409
          %v1411 = vsel %vm611, %v1398, %v1387
          %v1413 = vunpack.c.l.s4 1983009808
          %v1414 = vunpack.c.0.s8 %v1413
          %v1415 = vperm.slane %v1411, %v1414
          %v1416 = vrot.slane %v1399, 4
          %v1417 = vsel %vm611, %v1416, %v1397
          %v1419 = vunpack.c.l.s4 1983009808
          %v1420 = vunpack.c.0.s8 %v1419
          %v1421 = vperm.slane %v1417, %v1420
          %v1422 = vrot.slane %v1410, 4
          %v1423 = vsel %vm611, %v1422, %v1404
          %v1424 = vrot.slane %v1404, 4
          %v1425 = vsel %vm611, %v1410, %v1424
          %v1427 = vunpack.c.l.s4 1934713408
          %v1428 = vunpack.c.0.s8 %v1427
          %v1429 = vperm.slane %v1423, %v1428
          %v1431 = vunpack.c.l.s4 1934713408
          %v1432 = vunpack.c.0.s8 %v1431
          %v1433 = vperm.slane %v1425, %v1432
          %v1434 = vrot.slane %v1421, 4
          %v1435 = vsel %vm611, %v1434, %v1415
          %v1436 = vrot.slane %v1415, 4
          %v1437 = vsel %vm611, %v1421, %v1436
          %v1439 = vunpack.c.l.s4 1934713408
          %v1440 = vunpack.c.0.s8 %v1439
          %v1441 = vperm.slane %v1435, %v1440
          %v1443 = vunpack.c.l.s4 1934713408
          %v1444 = vunpack.c.0.s8 %v1443
          %v1445 = vperm.slane %v1437, %v1444
          %v1446 = vrot.slane %v1441, 4
          %v1447 = vsel %vm611, %v1446, %v1429
          %v1448 = vrot.slane %v1429, 4
          %v1449 = vsel %vm611, %v1441, %v1448
          %v1450 = vrot.slane %v1445, 4
          %v1451 = vsel %vm611, %v1450, %v1433
          %v1452 = vrot.slane %v1433, 4
          %v1453 = vsel %vm611, %v1445, %v1452
          %1455 = vrot.lane.b32.xlu0 %v575, 96
          %v1456 = vpop.permute.xlu0 %1455
          %1458 = vrot.lane.b32.xlu0 %v575, 64
          %v1459 = vpop.permute.xlu0 %1458
          %1461 = vrot.lane.b32.xlu0 %v575, 32
          %v1462 = vpop.permute.xlu0 %1461
          %v1464 = vrot.slane %v1459, 4
          %v1465 = vsel %vm611, %v1464, %v575
          %v1466 = vrot.slane %v575, 4
          %v1467 = vsel %vm611, %v1459, %v1466
          %v1469 = vunpack.c.l.s4 1983009808
          %v1470 = vunpack.c.0.s8 %v1469
          %v1471 = vperm.slane %v1465, %v1470
          %v1473 = vunpack.c.l.s4 1983009808
          %v1474 = vunpack.c.0.s8 %v1473
          %v1475 = vperm.slane %v1467, %v1474
          %v1476 = vrot.slane %v1462, 4
          %v1477 = vsel %vm611, %v1476, %v1456
          %v1478 = vrot.slane %v1456, 4
          %v1479 = vsel %vm611, %v1462, %v1478
          %v1481 = vunpack.c.l.s4 1983009808
          %v1482 = vunpack.c.0.s8 %v1481
          %v1483 = vperm.slane %v1477, %v1482
          %v1485 = vunpack.c.l.s4 1983009808
          %v1486 = vunpack.c.0.s8 %v1485
          %v1487 = vperm.slane %v1479, %v1486
          %v1488 = vrot.slane %v1483, 4
          %v1489 = vsel %vm611, %v1488, %v1471
          %v1490 = vrot.slane %v1471, 4
          %v1491 = vsel %vm611, %v1483, %v1490
          %v1493 = vunpack.c.l.s4 1934713408
          %v1494 = vunpack.c.0.s8 %v1493
          %v1495 = vperm.slane %v1489, %v1494
          %v1497 = vunpack.c.l.s4 1934713408
          %v1498 = vunpack.c.0.s8 %v1497
          %v1499 = vperm.slane %v1491, %v1498
          %v1500 = vrot.slane %v1487, 4
          %v1501 = vsel %vm611, %v1500, %v1475
          %v1502 = vrot.slane %v1475, 4
          %v1503 = vsel %vm611, %v1487, %v1502
          %v1505 = vunpack.c.l.s4 1934713408
          %v1506 = vunpack.c.0.s8 %v1505
          %v1507 = vperm.slane %v1501, %v1506
          %v1509 = vunpack.c.l.s4 1934713408
          %v1510 = vunpack.c.0.s8 %v1509
          %v1511 = vperm.slane %v1503, %v1510
          %v1512 = vrot.slane %v1495, 4
          %v1513 = vsel %vm611, 0.0, %v1512
          %v1514 = vrot.slane %v1499, 4
          %v1515 = vsel %vm611, 0.0, %v1514
          %v1516 = vrot.slane %v1507, 4
          %v1517 = vsel %vm611, 0.0, %v1516
          %v1518 = vrot.slane %v1511, 4
          %v1519 = vsel %vm611, 0.0, %v1518
          %v1520 = vsel %vm611, %v1514, %v1495
          %v1522 = vunpack.c.l.s4 1983009808
          %v1523 = vunpack.c.0.s8 %v1522
          %v1524 = vperm.slane %v1520, %v1523
          %v1525 = vrot.slane %v1515, 4
          %v1526 = vsel %vm611, %v1525, %v1513
          %v1528 = vunpack.c.l.s4 1983009808
          %v1529 = vunpack.c.0.s8 %v1528
          %v1530 = vperm.slane %v1526, %v1529
          %v1531 = vsel %vm611, %v1518, %v1507
          %v1533 = vunpack.c.l.s4 1983009808
          %v1534 = vunpack.c.0.s8 %v1533
          %v1535 = vperm.slane %v1531, %v1534
          %v1536 = vrot.slane %v1519, 4
          %v1537 = vsel %vm611, %v1536, %v1517
          %v1539 = vunpack.c.l.s4 1983009808
          %v1540 = vunpack.c.0.s8 %v1539
          %v1541 = vperm.slane %v1537, %v1540
          %v1542 = vrot.slane %v1530, 4
          %v1543 = vsel %vm611, %v1542, %v1524
          %v1544 = vrot.slane %v1524, 4
          %v1545 = vsel %vm611, %v1530, %v1544
          %v1547 = vunpack.c.l.s4 1934713408
          %v1548 = vunpack.c.0.s8 %v1547
          %v1549 = vperm.slane %v1543, %v1548
          %v1551 = vunpack.c.l.s4 1934713408
          %v1552 = vunpack.c.0.s8 %v1551
          %v1553 = vperm.slane %v1545, %v1552
          %v1554 = vrot.slane %v1541, 4
          %v1555 = vsel %vm611, %v1554, %v1535
          %v1556 = vrot.slane %v1535, 4
          %v1557 = vsel %vm611, %v1541, %v1556
          %v1559 = vunpack.c.l.s4 1934713408
          %v1560 = vunpack.c.0.s8 %v1559
          %v1561 = vperm.slane %v1555, %v1560
          %v1563 = vunpack.c.l.s4 1934713408
          %v1564 = vunpack.c.0.s8 %v1563
          %v1565 = vperm.slane %v1557, %v1564
          %v1566 = vrot.slane %v1561, 4
          %v1567 = vsel %vm611, %v1566, %v1549
          %v1568 = vrot.slane %v1549, 4
          %v1569 = vsel %vm611, %v1561, %v1568
          %v1570 = vrot.slane %v1565, 4
          %v1571 = vsel %vm611, %v1570, %v1553
          %v1572 = vrot.slane %v1553, 4
          %v1573 = vsel %vm611, %v1565, %v1572
          %1575 = vrot.lane.b32.xlu0 %v598, 96
          %v1576 = vpop.permute.xlu0 %1575
          %1578 = vrot.lane.b32.xlu0 %v598, 64
          %v1579 = vpop.permute.xlu0 %1578
          %1581 = vrot.lane.b32.xlu0 %v598, 32
          %v1582 = vpop.permute.xlu0 %1581
          %v1584 = vrot.slane %v1579, 4
          %v1585 = vsel %vm611, %v1584, %v598
          %v1586 = vrot.slane %v598, 4
          %v1587 = vsel %vm611, %v1579, %v1586
          %v1589 = vunpack.c.l.s4 1983009808
          %v1590 = vunpack.c.0.s8 %v1589
          %v1591 = vperm.slane %v1585, %v1590
          %v1593 = vunpack.c.l.s4 1983009808
          %v1594 = vunpack.c.0.s8 %v1593
          %v1595 = vperm.slane %v1587, %v1594
          %v1596 = vrot.slane %v1582, 4
          %v1597 = vsel %vm611, %v1596, %v1576
          %v1598 = vrot.slane %v1576, 4
          %v1599 = vsel %vm611, %v1582, %v1598
          %v1601 = vunpack.c.l.s4 1983009808
          %v1602 = vunpack.c.0.s8 %v1601
          %v1603 = vperm.slane %v1597, %v1602
          %v1605 = vunpack.c.l.s4 1983009808
          %v1606 = vunpack.c.0.s8 %v1605
          %v1607 = vperm.slane %v1599, %v1606
          %v1608 = vrot.slane %v1603, 4
          %v1609 = vsel %vm611, %v1608, %v1591
          %v1610 = vrot.slane %v1591, 4
          %v1611 = vsel %vm611, %v1603, %v1610
          %v1613 = vunpack.c.l.s4 1934713408
          %v1614 = vunpack.c.0.s8 %v1613
          %v1615 = vperm.slane %v1609, %v1614
          %v1617 = vunpack.c.l.s4 1934713408
          %v1618 = vunpack.c.0.s8 %v1617
          %v1619 = vperm.slane %v1611, %v1618
          %v1620 = vrot.slane %v1607, 4
          %v1621 = vsel %vm611, %v1620, %v1595
          %v1622 = vrot.slane %v1595, 4
          %v1623 = vsel %vm611, %v1607, %v1622
          %v1625 = vunpack.c.l.s4 1934713408
          %v1626 = vunpack.c.0.s8 %v1625
          %v1627 = vperm.slane %v1621, %v1626
          %v1629 = vunpack.c.l.s4 1934713408
          %v1630 = vunpack.c.0.s8 %v1629
          %v1631 = vperm.slane %v1623, %v1630
          %v1632 = vrot.slane %v1615, 4
          %v1633 = vsel %vm611, 0.0, %v1632
          %v1634 = vrot.slane %v1619, 4
          %v1635 = vsel %vm611, 0.0, %v1634
          %v1636 = vrot.slane %v1627, 4
          %v1637 = vsel %vm611, 0.0, %v1636
          %v1638 = vrot.slane %v1631, 4
          %v1639 = vsel %vm611, 0.0, %v1638
          %v1640 = vsel %vm611, %v1634, %v1615
          %v1642 = vunpack.c.l.s4 1983009808
          %v1643 = vunpack.c.0.s8 %v1642
          %v1644 = vperm.slane %v1640, %v1643
          %v1645 = vrot.slane %v1635, 4
          %v1646 = vsel %vm611, %v1645, %v1633
          %v1648 = vunpack.c.l.s4 1983009808
          %v1649 = vunpack.c.0.s8 %v1648
          %v1650 = vperm.slane %v1646, %v1649
          %v1651 = vsel %vm611, %v1638, %v1627
          %v1653 = vunpack.c.l.s4 1983009808
          %v1654 = vunpack.c.0.s8 %v1653
          %v1655 = vperm.slane %v1651, %v1654
          %v1656 = vrot.slane %v1639, 4
          %v1657 = vsel %vm611, %v1656, %v1637
          %v1659 = vunpack.c.l.s4 1983009808
          %v1660 = vunpack.c.0.s8 %v1659
          %v1661 = vperm.slane %v1657, %v1660
          %v1662 = vrot.slane %v1650, 4
          %v1663 = vsel %vm611, %v1662, %v1644
          %v1664 = vrot.slane %v1644, 4
          %v1665 = vsel %vm611, %v1650, %v1664
          %v1667 = vunpack.c.l.s4 1934713408
          %v1668 = vunpack.c.0.s8 %v1667
          %v1669 = vperm.slane %v1663, %v1668
          %v1671 = vunpack.c.l.s4 1934713408
          %v1672 = vunpack.c.0.s8 %v1671
          %v1673 = vperm.slane %v1665, %v1672
          %v1674 = vrot.slane %v1661, 4
          %v1675 = vsel %vm611, %v1674, %v1655
          %v1676 = vrot.slane %v1655, 4
          %v1677 = vsel %vm611, %v1661, %v1676
          %v1679 = vunpack.c.l.s4 1934713408
          %v1680 = vunpack.c.0.s8 %v1679
          %v1681 = vperm.slane %v1675, %v1680
          %v1683 = vunpack.c.l.s4 1934713408
          %v1684 = vunpack.c.0.s8 %v1683
          %v1685 = vperm.slane %v1677, %v1684
          %v1686 = vrot.slane %v1681, 4
          %v1687 = vsel %vm611, %v1686, %v1669
          %v1688 = vrot.slane %v1669, 4
          %v1689 = vsel %vm611, %v1681, %v1688
          %v1690 = vrot.slane %v1685, 4
          %v1691 = vsel %vm611, %v1690, %v1673
          %v1692 = vrot.slane %v1673, 4
          %v1693 = vsel %vm611, %v1685, %v1692
          %v1695 = vsel %vm961, %v1447, 0
          %v1698 = vsel %vm961, %v1567, 0
          %1700 = vmatpush.xpose.msra.mxu0 0.0
          %1701 = vmatpush.xpose.msra.mxu0 0.0
          %1702 = vmatpush.xpose.msra.mxu0 0.0
          %1703 = vmatpush.xpose.msra.mxu0 0.0
          %1704 = vmatpush.xpose.msra.mxu0 0.0
          %1705 = vmatpush.xpose.msra.mxu0 0.0
          %1706 = vmatpush.xpose.msra.mxu0 0.0
          %1707 = vmatpush.xpose.msra.mxu0 0.0
          %1708 = vmatpush.xpose.msra.mxu0 0.0
          %1709 = vmatpush.xpose.msra.mxu0 0.0
          %1710 = vmatpush.xpose.msra.mxu0 0.0
          %1711 = vmatpush.xpose.msra.mxu0 0.0
          %1712 = vmatpush.xpose.msra.mxu0 0.0
          %1713 = vmatpush.xpose.msra.mxu0 0.0
          %1714 = vmatpush.xpose.msra.mxu0 0.0
          %1715 = vmatpush.xpose.msra.mxu0 %v1698
          %1716 = vmatmul.f32.gmra.mxu0 %v1695
          %v1717 = vpop.f32.mrf.mxu0
          %v1718 = vadd.f32 0.0, %v1717
          %1719 = vdwg.mxu0
          %v1721 = vsel %vm961, %v1449, 0
          %v1724 = vsel %vm961, %v1569, 0
          %1726 = vmatpush.xpose.msra.mxu0 0.0
          %1727 = vmatpush.xpose.msra.mxu0 0.0
          %1728 = vmatpush.xpose.msra.mxu0 0.0
          %1729 = vmatpush.xpose.msra.mxu0 0.0
          %1730 = vmatpush.xpose.msra.mxu0 0.0
          %1731 = vmatpush.xpose.msra.mxu0 0.0
          %1732 = vmatpush.xpose.msra.mxu0 0.0
          %1733 = vmatpush.xpose.msra.mxu0 0.0
          %1734 = vmatpush.xpose.msra.mxu0 0.0
          %1735 = vmatpush.xpose.msra.mxu0 0.0
          %1736 = vmatpush.xpose.msra.mxu0 0.0
          %1737 = vmatpush.xpose.msra.mxu0 0.0
          %1738 = vmatpush.xpose.msra.mxu0 0.0
          %1739 = vmatpush.xpose.msra.mxu0 0.0
          %1740 = vmatpush.xpose.msra.mxu0 0.0
          %1741 = vmatpush.xpose.msra.mxu0 %v1724
          %1742 = vmatmul.f32.gmra.mxu0 %v1721
          %v1743 = vpop.f32.mrf.mxu0
          %v1744 = vadd.f32 0.0, %v1743
          %1745 = vdwg.mxu0
          %v1747 = vsel %vm961, %v1451, 0
          %v1750 = vsel %vm961, %v1571, 0
          %1752 = vmatpush.xpose.msra.mxu0 0.0
          %1753 = vmatpush.xpose.msra.mxu0 0.0
          %1754 = vmatpush.xpose.msra.mxu0 0.0
          %1755 = vmatpush.xpose.msra.mxu0 0.0
          %1756 = vmatpush.xpose.msra.mxu0 0.0
          %1757 = vmatpush.xpose.msra.mxu0 0.0
          %1758 = vmatpush.xpose.msra.mxu0 0.0
          %1759 = vmatpush.xpose.msra.mxu0 0.0
          %1760 = vmatpush.xpose.msra.mxu0 0.0
          %1761 = vmatpush.xpose.msra.mxu0 0.0
          %1762 = vmatpush.xpose.msra.mxu0 0.0
          %1763 = vmatpush.xpose.msra.mxu0 0.0
          %1764 = vmatpush.xpose.msra.mxu0 0.0
          %1765 = vmatpush.xpose.msra.mxu0 0.0
          %1766 = vmatpush.xpose.msra.mxu0 0.0
          %1767 = vmatpush.xpose.msra.mxu0 %v1750
          %1768 = vmatmul.f32.gmra.mxu0 %v1747
          %v1769 = vpop.f32.mrf.mxu0
          %v1770 = vadd.f32 0.0, %v1769
          %1771 = vdwg.mxu0
          %v1773 = vsel %vm961, %v1453, 0
          %v1776 = vsel %vm961, %v1573, 0
          %1778 = vmatpush.xpose.msra.mxu0 0.0
          %1779 = vmatpush.xpose.msra.mxu0 0.0
          %1780 = vmatpush.xpose.msra.mxu0 0.0
          %1781 = vmatpush.xpose.msra.mxu0 0.0
          %1782 = vmatpush.xpose.msra.mxu0 0.0
          %1783 = vmatpush.xpose.msra.mxu0 0.0
          %1784 = vmatpush.xpose.msra.mxu0 0.0
          %1785 = vmatpush.xpose.msra.mxu0 0.0
          %1786 = vmatpush.xpose.msra.mxu0 0.0
          %1787 = vmatpush.xpose.msra.mxu0 0.0
          %1788 = vmatpush.xpose.msra.mxu0 0.0
          %1789 = vmatpush.xpose.msra.mxu0 0.0
          %1790 = vmatpush.xpose.msra.mxu0 0.0
          %1791 = vmatpush.xpose.msra.mxu0 0.0
          %1792 = vmatpush.xpose.msra.mxu0 0.0
          %1793 = vmatpush.xpose.msra.mxu0 %v1776
          %1794 = vmatmul.f32.gmra.mxu0 %v1773
          %v1795 = vpop.f32.mrf.mxu0
          %v1796 = vadd.f32 0.0, %v1795
          %1797 = vdwg.mxu0
          %v1798 = vmul.f32 %v1718, 0.17677669
          %v1799 = vmul.f32 %v1744, 0.17677669
          %v1800 = vmul.f32 %v1770, 0.17677669
          %v1801 = vmul.f32 %v1796, 0.17677669
          %v1802 = vsel %vm1070, %v1798, -inf
          %1803 = vmax.xlane.f32.xlu0 %v1802
          %v1804 = vpop.xlane.xlu0 %1803
          %v1805 = vsel %vm1070, %v1799, -inf
          %1806 = vmax.xlane.f32.xlu0 %v1805
          %v1807 = vpop.xlane.xlu0 %1806
          %v1808 = vsel %vm1070, %v1800, -inf
          %1809 = vmax.xlane.f32.xlu0 %v1808
          %v1810 = vpop.xlane.xlu0 %1809
          %v1811 = vsel %vm1070, %v1801, -inf
          %1812 = vmax.xlane.f32.xlu0 %v1811
          %v1813 = vpop.xlane.xlu0 %1812
          %v1814 = vsub.f32 %v1798, %v1804
          %v1815 = vsub.f32 %v1799, %v1807
          %v1816 = vsub.f32 %v1800, %v1810
          %v1817 = vsub.f32 %v1801, %v1813
          %v1818 = vmul.f32 %v1814, 1.442695
          %v1819 = vpow.pop %v1818
          %v1820 = vmul.f32 %v1815, 1.442695
          %v1821 = vpow.pop %v1820
          %v1822 = vmul.f32 %v1816, 1.442695
          %v1823 = vpow.pop %v1822
          %v1824 = vmul.f32 %v1817, 1.442695
          %v1825 = vpow.pop %v1824
          %v1826 = vsel %vm1070, %v1819, 0.0
          %1827 = vadd.xlane.f32.xlu0 %v1826
          %v1828 = vpop.xlane.xlu0 %1827
          %v1829 = vsel %vm1070, %v1821, 0.0
          %1830 = vadd.xlane.f32.xlu0 %v1829
          %v1831 = vpop.xlane.xlu0 %1830
          %v1832 = vsel %vm1070, %v1823, 0.0
          %1833 = vadd.xlane.f32.xlu0 %v1832
          %v1834 = vpop.xlane.xlu0 %1833
          %v1835 = vsel %vm1070, %v1825, 0.0
          %1836 = vadd.xlane.f32.xlu0 %v1835
          %v1837 = vpop.xlane.xlu0 %1836
          %v1838 = vrcp.pop %v1828
          %v1839 = vrcp.pop %v1831
          %v1840 = vrcp.pop %v1834
          %v1841 = vrcp.pop %v1837
          %v1842 = vmul.f32 %v1819, %v1838
          %v1843 = vmul.f32 %v1821, %v1839
          %v1844 = vmul.f32 %v1823, %v1840
          %v1845 = vmul.f32 %v1825, %v1841
          %v1847 = vsel %vm1070, %v1842, 0
          %1849 = vmatpush.msra.mxu0 0.0
          %1850 = vmatpush.msra.mxu0 0.0
          %1851 = vmatpush.msra.mxu0 0.0
          %1852 = vmatpush.msra.mxu0 0.0
          %1853 = vmatpush.msra.mxu0 0.0
          %1854 = vmatpush.msra.mxu0 0.0
          %1855 = vmatpush.msra.mxu0 0.0
          %1856 = vmatpush.msra.mxu0 0.0
          %1857 = vmatpush.msra.mxu0 0.0
          %1858 = vmatpush.msra.mxu0 0.0
          %1859 = vmatpush.msra.mxu0 0.0
          %1860 = vmatpush.msra.mxu0 0.0
          %1861 = vmatpush.msra.mxu0 0.0
          %1862 = vmatpush.msra.mxu0 0.0
          %1863 = vmatpush.msra.mxu0 0.0
          %1864 = vmatpush.msra.mxu0 %v1687
          %1865 = vmatmul.f32.gmra.mxu0 %v1847
          %v1866 = vpop.f32.mrf.mxu0
          %v1867 = vadd.f32 0.0, %v1866
          %1868 = vdwg.mxu0
          %v1870 = vsel %vm1070, %v1843, 0
          %1872 = vmatpush.msra.mxu0 0.0
          %1873 = vmatpush.msra.mxu0 0.0
          %1874 = vmatpush.msra.mxu0 0.0
          %1875 = vmatpush.msra.mxu0 0.0
          %1876 = vmatpush.msra.mxu0 0.0
          %1877 = vmatpush.msra.mxu0 0.0
          %1878 = vmatpush.msra.mxu0 0.0
          %1879 = vmatpush.msra.mxu0 0.0
          %1880 = vmatpush.msra.mxu0 0.0
          %1881 = vmatpush.msra.mxu0 0.0
          %1882 = vmatpush.msra.mxu0 0.0
          %1883 = vmatpush.msra.mxu0 0.0
          %1884 = vmatpush.msra.mxu0 0.0
          %1885 = vmatpush.msra.mxu0 0.0
          %1886 = vmatpush.msra.mxu0 0.0
          %1887 = vmatpush.msra.mxu0 %v1689
          %1888 = vmatmul.f32.gmra.mxu0 %v1870
          %v1889 = vpop.f32.mrf.mxu0
          %v1890 = vadd.f32 0.0, %v1889
          %1891 = vdwg.mxu0
          %v1893 = vsel %vm1070, %v1844, 0
          %1895 = vmatpush.msra.mxu0 0.0
          %1896 = vmatpush.msra.mxu0 0.0
          %1897 = vmatpush.msra.mxu0 0.0
          %1898 = vmatpush.msra.mxu0 0.0
          %1899 = vmatpush.msra.mxu0 0.0
          %1900 = vmatpush.msra.mxu0 0.0
          %1901 = vmatpush.msra.mxu0 0.0
          %1902 = vmatpush.msra.mxu0 0.0
          %1903 = vmatpush.msra.mxu0 0.0
          %1904 = vmatpush.msra.mxu0 0.0
          %1905 = vmatpush.msra.mxu0 0.0
          %1906 = vmatpush.msra.mxu0 0.0
          %1907 = vmatpush.msra.mxu0 0.0
          %1908 = vmatpush.msra.mxu0 0.0
          %1909 = vmatpush.msra.mxu0 0.0
          %1910 = vmatpush.msra.mxu0 %v1691
          %1911 = vmatmul.f32.gmra.mxu0 %v1893
          %v1912 = vpop.f32.mrf.mxu0
          %v1913 = vadd.f32 0.0, %v1912
          %1914 = vdwg.mxu0
          %v1916 = vsel %vm1070, %v1845, 0
          %1918 = vmatpush.msra.mxu0 0.0
          %1919 = vmatpush.msra.mxu0 0.0
          %1920 = vmatpush.msra.mxu0 0.0
          %1921 = vmatpush.msra.mxu0 0.0
          %1922 = vmatpush.msra.mxu0 0.0
          %1923 = vmatpush.msra.mxu0 0.0
          %1924 = vmatpush.msra.mxu0 0.0
          %1925 = vmatpush.msra.mxu0 0.0
          %1926 = vmatpush.msra.mxu0 0.0
          %1927 = vmatpush.msra.mxu0 0.0
          %1928 = vmatpush.msra.mxu0 0.0
          %1929 = vmatpush.msra.mxu0 0.0
          %1930 = vmatpush.msra.mxu0 0.0
          %1931 = vmatpush.msra.mxu0 0.0
          %1932 = vmatpush.msra.mxu0 0.0
          %1933 = vmatpush.msra.mxu0 %v1693
          %1934 = vmatmul.f32.gmra.mxu0 %v1916
          %v1935 = vpop.f32.mrf.mxu0
          %v1936 = vadd.f32 0.0, %v1935
          %1937 = vdwg.mxu0
          %v1938 = vrot.slane %v1913, 4
          %v1939 = vsel %vm611, %v1938, %v1867
          %v1940 = vrot.slane %v1867, 4
          %v1941 = vsel %vm611, %v1913, %v1940
          %v1943 = vunpack.c.l.s4 1983009808
          %v1944 = vunpack.c.0.s8 %v1943
          %v1945 = vperm.slane %v1939, %v1944
          %v1947 = vunpack.c.l.s4 1983009808
          %v1948 = vunpack.c.0.s8 %v1947
          %v1949 = vperm.slane %v1941, %v1948
          %v1950 = vrot.slane %v1936, 4
          %v1951 = vsel %vm611, %v1950, %v1890
          %v1952 = vrot.slane %v1890, 4
          %v1953 = vsel %vm611, %v1936, %v1952
          %v1955 = vunpack.c.l.s4 1983009808
          %v1956 = vunpack.c.0.s8 %v1955
          %v1957 = vperm.slane %v1951, %v1956
          %v1959 = vunpack.c.l.s4 1983009808
          %v1960 = vunpack.c.0.s8 %v1959
          %v1961 = vperm.slane %v1953, %v1960
          %v1962 = vrot.slane %v1957, 4
          %v1963 = vsel %vm611, %v1962, %v1945
          %v1964 = vrot.slane %v1945, 4
          %v1965 = vsel %vm611, %v1957, %v1964
          %v1967 = vunpack.c.l.s4 1934713408
          %v1968 = vunpack.c.0.s8 %v1967
          %v1969 = vperm.slane %v1963, %v1968
          %v1971 = vunpack.c.l.s4 1934713408
          %v1972 = vunpack.c.0.s8 %v1971
          %v1973 = vperm.slane %v1965, %v1972
          %v1974 = vrot.slane %v1961, 4
          %v1975 = vsel %vm611, %v1974, %v1949
          %v1976 = vrot.slane %v1949, 4
          %v1977 = vsel %vm611, %v1961, %v1976
          %v1979 = vunpack.c.l.s4 1934713408
          %v1980 = vunpack.c.0.s8 %v1979
          %v1981 = vperm.slane %v1975, %v1980
          %v1983 = vunpack.c.l.s4 1934713408
          %v1984 = vunpack.c.0.s8 %v1983
          %v1985 = vperm.slane %v1977, %v1984
          %v1986 = vrot.slane %v1969, 4
          %v1987 = vsel %vm611, 0.0, %v1986
          %v1988 = vrot.slane %v1973, 4
          %v1989 = vsel %vm611, 0.0, %v1988
          %v1990 = vrot.slane %v1981, 4
          %v1991 = vsel %vm611, 0.0, %v1990
          %v1992 = vrot.slane %v1985, 4
          %v1993 = vsel %vm611, 0.0, %v1992
          %v1994 = vsel %vm611, %v1988, %v1969
          %v1996 = vunpack.c.l.s4 1983009808
          %v1997 = vunpack.c.0.s8 %v1996
          %v1998 = vperm.slane %v1994, %v1997
          %v1999 = vrot.slane %v1989, 4
          %v2000 = vsel %vm611, %v1999, %v1987
          %v2002 = vunpack.c.l.s4 1983009808
          %v2003 = vunpack.c.0.s8 %v2002
          %v2004 = vperm.slane %v2000, %v2003
          %v2005 = vsel %vm611, %v1992, %v1981
          %v2007 = vunpack.c.l.s4 1983009808
          %v2008 = vunpack.c.0.s8 %v2007
          %v2009 = vperm.slane %v2005, %v2008
          %v2010 = vrot.slane %v1993, 4
          %v2011 = vsel %vm611, %v2010, %v1991
          %v2013 = vunpack.c.l.s4 1983009808
          %v2014 = vunpack.c.0.s8 %v2013
          %v2015 = vperm.slane %v2011, %v2014
          %v2016 = vrot.slane %v2004, 4
          %v2017 = vsel %vm611, %v2016, %v1998
          %v2018 = vrot.slane %v1998, 4
          %v2019 = vsel %vm611, %v2004, %v2018
          %v2021 = vunpack.c.l.s4 1934713408
          %v2022 = vunpack.c.0.s8 %v2021
          %v2023 = vperm.slane %v2017, %v2022
          %v2025 = vunpack.c.l.s4 1934713408
          %v2026 = vunpack.c.0.s8 %v2025
          %v2027 = vperm.slane %v2019, %v2026
          %v2028 = vrot.slane %v2015, 4
          %v2029 = vsel %vm611, %v2028, %v2009
          %v2030 = vrot.slane %v2009, 4
          %v2031 = vsel %vm611, %v2015, %v2030
          %v2033 = vunpack.c.l.s4 1934713408
          %v2034 = vunpack.c.0.s8 %v2033
          %v2035 = vperm.slane %v2029, %v2034
          %v2037 = vunpack.c.l.s4 1934713408
          %v2038 = vunpack.c.0.s8 %v2037
          %v2039 = vperm.slane %v2031, %v2038
          %v2040 = vrot.slane %v2035, 4
          %v2041 = vsel %vm611, %v2040, %v2023
          %v2042 = vrot.slane %v2023, 4
          %v2043 = vsel %vm611, %v2035, %v2042
          %v2044 = vrot.slane %v2039, 4
          %v2045 = vsel %vm611, %v2044, %v2027
          %v2046 = vrot.slane %v2027, 4
          %v2047 = vsel %vm611, %v2039, %v2046
          %2049 = vrot.lane.b32.xlu0 %v2043, 32
          %v2050 = vpop.permute.xlu0 %2049
          %2053 = vrot.lane.b32.xlu0 %v2045, 64
          %v2054 = vpop.permute.xlu0 %2053
          %2057 = vrot.lane.b32.xlu0 %v2047, 96
          %v2058 = vpop.permute.xlu0 %2057
          %v2060 = vsel %vm961, %v2041, %v2050
          %v2061 = vsel %vm1330, %v2060, %v2054
          %v2062 = vsel %vm1332, %v2061, %v2058
          %v2063 = vld [vmem:[%s3] sm:$0xff]
          %v2064 = vld [vmem:[%s3 + $0x8] sm:$0xff]
          %v2065 = vld [vmem:[%s3 + $0x10] sm:$0xff]
          %v2066 = vld [vmem:[%s3 + $0x18] sm:$0xff]
          %v2067 = vld [vmem:[%s3 + $0x20] sm:$0xff]
          %v2068 = vld [vmem:[%s3 + $0x28] sm:$0xff]
          %v2069 = vld [vmem:[%s3 + $0x30] sm:$0xff]
          %v2070 = vld [vmem:[%s3 + $0x38] sm:$0xff]
          %v2071 = vld [vmem:[%s3 + $0x40] sm:$0xff]
          %v2072 = vld [vmem:[%s3 + $0x48] sm:$0xff]
          %v2073 = vld [vmem:[%s3 + $0x50] sm:$0xff]
          %v2074 = vld [vmem:[%s3 + $0x58] sm:$0xff]
          %v2075 = vld [vmem:[%s3 + $0x60] sm:$0xff]
          %v2076 = vld [vmem:[%s3 + $0x68] sm:$0xff]
          %v2077 = vld [vmem:[%s3 + $0x70] sm:$0xff]
          %v2078 = vld [vmem:[%s3 + $0x78] sm:$0xff]
          %v2079 = vld [vmem:[%s4] sm:$0x1]
          %v2081 = vperm.slane %v2079, 0
          %2083 = vmatpush.msra.mxu0 %v2078
          %2084 = vmatpush.msra.mxu0 %v2077
          %2085 = vmatpush.msra.mxu0 %v2076
          %2086 = vmatpush.msra.mxu0 %v2075
          %2087 = vmatpush.msra.mxu0 %v2074
          %2088 = vmatpush.msra.mxu0 %v2073
          %2089 = vmatpush.msra.mxu0 %v2072
          %2090 = vmatpush.msra.mxu0 %v2071
          %2091 = vmatpush.msra.mxu0 %v2070
          %2092 = vmatpush.msra.mxu0 %v2069
          %2093 = vmatpush.msra.mxu0 %v2068
          %2094 = vmatpush.msra.mxu0 %v2067
          %2095 = vmatpush.msra.mxu0 %v2066
          %2096 = vmatpush.msra.mxu0 %v2065
          %2097 = vmatpush.msra.mxu0 %v2064
          %2098 = vmatpush.msra.mxu0 %v2063
          %2099 = vmatmul.f32.gmra.mxu0 %v1333
          %v2100 = vpop.f32.mrf.mxu0
          %v2101 = vadd.f32 %v2081, %v2100
          %2102 = vmatmul.f32.gmra.mxu0 %v2062
          %v2103 = vpop.f32.mrf.mxu0
          %v2104 = vadd.f32 %v2081, %v2103
          %2105 = vdwg.mxu0
          %v2106 = vadd.f32 %v2101, %v473
          %v2107 = vadd.f32 %v2104, %v474
          %2108 = vadd.xlane.f32.xlu0 %v2106
          %v2109 = vpop.xlane.xlu0 %2108
          %2110 = vadd.xlane.f32.xlu0 %v2107
          %v2111 = vpop.xlane.xlu0 %2110
          %v2112 = vrcp.pop 128.0
          %v2113 = vmul.f32 128.0, %v2112
          %v2114 = vsub.f32 1.0, %v2113
          %v2115 = vmul.f32 %v2112, %v2114
          %v2116 = vadd.f32 %v2112, %v2115
          %vm2117 = vweird.f32 %v2112
          %v2118 = vsel %vm2117, %v2112, %v2116
          %v2119 = vmul.f32 %v2109, %v2118
          %v2120 = vmul.f32 %v2111, %v2118
          %v2121 = vsub.f32 %v2106, %v2119
          %v2122 = vsub.f32 %v2107, %v2120
          %v2123 = vmul.f32 %v2121, %v2121
          %v2124 = vmul.f32 %v2122, %v2122
          %2125 = vadd.xlane.f32.xlu0 %v2123
          %v2126 = vpop.xlane.xlu0 %2125
          %2127 = vadd.xlane.f32.xlu0 %v2124
          %v2128 = vpop.xlane.xlu0 %2127
          %v2129 = vmul.f32 %v2126, %v2118
          %v2130 = vmul.f32 %v2128, %v2118
          %v2131 = vadd.f32 %v2129, 1e-05
          %v2132 = vadd.f32 %v2130, 1e-05
          %v2133 = vrsqrt.pop %v2131
          %v2134 = vmul.f32 %v2133, %v2131
          %v2135 = vmul.f32 %v2134, %v2133
          %v2136 = vmul.f32 0.5, %v2135
          %v2137 = vsub.f32 1.5, %v2136
          %v2138 = vmul.f32 %v2133, %v2137
          %vm2139 = vweird.f32 %v2131
          %vm2140 = vweird.f32 %v2133
          %vm2141 = vmor %vm2139, %vm2140
          %v2142 = vsel %vm2141, %v2133, %v2138
          %v2143 = vrsqrt.pop %v2132
          %v2144 = vmul.f32 %v2143, %v2132
          %v2145 = vmul.f32 %v2144, %v2143
          %v2146 = vmul.f32 0.5, %v2145
          %v2147 = vsub.f32 1.5, %v2146
          %v2148 = vmul.f32 %v2143, %v2147
          %vm2149 = vweird.f32 %v2132
          %vm2150 = vweird.f32 %v2143
          %vm2151 = vmor %vm2149, %vm2150
          %v2152 = vsel %vm2151, %v2143, %v2148
          %v2153 = vmul.f32 %v2121, %v2142
          %v2154 = vmul.f32 %v2122, %v2152
          %v2155 = vld [vmem:[%s5] sm:$0x1]
          %v2157 = vperm.slane %v2155, 0
          %v2159 = vmul.f32 %v2153, %v2157
          %v2160 = vmul.f32 %v2154, %v2157
          %v2161 = vld [vmem:[#allocation11] sm:$0x1]
          %v2163 = vperm.slane %v2161, 0
          %v2165 = vadd.f32 %v2159, %v2163
          %v2166 = vadd.f32 %v2160, %v2163
          %2167 = vst [vmem:[#allocation2] sm:$0xff] %v2165
          %2168 = vst [vmem:[#allocation2 + $0x8] sm:$0xff] %v2166
          %v2169 = vld [vmem:[%s7] sm:$0xff]
          %v2170 = vld [vmem:[%s7 + $0x8] sm:$0xff]
          %v2171 = vld [vmem:[%s7 + $0x10] sm:$0xff]
          %v2172 = vld [vmem:[%s7 + $0x18] sm:$0xff]
          %v2173 = vld [vmem:[%s7 + $0x20] sm:$0xff]
          %v2174 = vld [vmem:[%s7 + $0x28] sm:$0xff]
          %v2175 = vld [vmem:[%s7 + $0x30] sm:$0xff]
          %v2176 = vld [vmem:[%s7 + $0x38] sm:$0xff]
          %v2177 = vld [vmem:[%s7 + $0x40] sm:$0xff]
          %v2178 = vld [vmem:[%s7 + $0x48] sm:$0xff]
          %v2179 = vld [vmem:[%s7 + $0x50] sm:$0xff]
          %v2180 = vld [vmem:[%s7 + $0x58] sm:$0xff]
          %v2181 = vld [vmem:[%s7 + $0x60] sm:$0xff]
          %v2182 = vld [vmem:[%s7 + $0x68] sm:$0xff]
          %v2183 = vld [vmem:[%s7 + $0x70] sm:$0xff]
          %v2184 = vld [vmem:[%s7 + $0x78] sm:$0xff]
          %2185 = vmatpush.msra.mxu0 %v2184
          %2186 = vmatpush.msra.mxu0 %v2183
          %2187 = vmatpush.msra.mxu0 %v2182
          %2188 = vmatpush.msra.mxu0 %v2181
          %2189 = vmatpush.msra.mxu0 %v2180
          %2190 = vmatpush.msra.mxu0 %v2179
          %2191 = vmatpush.msra.mxu0 %v2178
          %2192 = vmatpush.msra.mxu0 %v2177
          %2193 = vmatpush.msra.mxu0 %v2176
          %2194 = vmatpush.msra.mxu0 %v2175
          %2195 = vmatpush.msra.mxu0 %v2174
          %2196 = vmatpush.msra.mxu0 %v2173
          %2197 = vmatpush.msra.mxu0 %v2172
          %2198 = vmatpush.msra.mxu0 %v2171
          %2199 = vmatpush.msra.mxu0 %v2170
          %2200 = vmatpush.msra.mxu0 %v2169
          %2201 = vmatmul.f32.gmra.mxu0 %v2165
          %v2202 = vpop.f32.mrf.mxu0
          %v2203 = vadd.f32 0.0, %v2202
          %2204 = vmatmul.f32.gmra.mxu0 %v2166
          %v2205 = vpop.f32.mrf.mxu0
          %v2206 = vadd.f32 0.0, %v2205
          %2207 = vdwg.mxu0
          %vm2208 = vcmask 31744
          %v2209 = vsel %vm2208, %v2203, -inf
          %2210 = vmax.xlane.f32.xlu0 %v2209
          %v2211 = vpop.xlane.xlu0 %2210
          %v2212 = vsel %vm2208, %v2206, -inf
          %2213 = vmax.xlane.f32.xlu0 %v2212
          %v2214 = vpop.xlane.xlu0 %2213
          %v2215 = vsub.f32 %v2203, %v2211
          %v2216 = vsub.f32 %v2206, %v2214
          %v2217 = vmul.f32 %v2215, 1.442695
          %v2218 = vpow.pop %v2217
          %v2219 = vmul.f32 %v2216, 1.442695
          %v2220 = vpow.pop %v2219
          %v2221 = vsel %vm2208, %v2218, 0.0
          %2222 = vadd.xlane.f32.xlu0 %v2221
          %v2223 = vpop.xlane.xlu0 %2222
          %v2224 = vsel %vm2208, %v2220, 0.0
          %2225 = vadd.xlane.f32.xlu0 %v2224
          %v2226 = vpop.xlane.xlu0 %2225
          %v2227 = vrcp.pop %v2223
          %v2228 = vrcp.pop %v2226
          %v2229 = vmul.f32 %v2218, %v2227
          %v2230 = vmul.f32 %v2220, %v2228
          %v2231 = vlaneseq
          %v2232 = vand.u32 %v2231, 127
          %vm2233 = vcmp.eq.s32.totalorder %v2232, 0
          %v2234 = vsel %vm2233, %v2229, 0.0
          %v2235 = vsel %vm2233, %v2230, 0.0
          %v2236 = vsel %vm2208, %v2234, 0.0
          %2237 = vadd.xlane.f32.xlu0 %v2236
          %v2238 = vpop.xlane.xlu0 %2237
          %v2239 = vsel %vm2208, %v2235, 0.0
          %2240 = vadd.xlane.f32.xlu0 %v2239
          %v2241 = vpop.xlane.xlu0 %2240
          %vm2242 = vcmask 7168
          %2243 = vst.msk [vmem:[#allocation3] sm:$0xff] %vm2242, %v2238
          %2244 = vst.msk [vmem:[#allocation3 + $0x8] sm:$0xff] %vm2242, %v2241
          %vm2245 = vcmp.eq.s32.totalorder %v2232, 1
          %v2246 = vsel %vm2245, %v2229, 0.0
          %v2247 = vsel %vm2245, %v2230, 0.0
          %v2248 = vsel %vm2208, %v2246, 0.0
          %2249 = vadd.xlane.f32.xlu0 %v2248
          %v2250 = vpop.xlane.xlu0 %2249
          %v2251 = vsel %vm2208, %v2247, 0.0
          %2252 = vadd.xlane.f32.xlu0 %v2251
          %v2253 = vpop.xlane.xlu0 %2252
          %s2254 = scalar_lea.vmem [#allocation3], 16
          %2255 = vst.msk [vmem:[%s2254] sm:$0xff] %vm2242, %v2250
          %2256 = vst.msk [vmem:[%s2254 + $0x8] sm:$0xff] %vm2242, %v2253
          %vm2257 = vcmp.eq.s32.totalorder %v2232, 2
          %v2258 = vsel %vm2257, %v2229, 0.0
          %v2259 = vsel %vm2257, %v2230, 0.0
          %v2260 = vsel %vm2208, %v2258, 0.0
          %2261 = vadd.xlane.f32.xlu0 %v2260
          %v2262 = vpop.xlane.xlu0 %2261
          %v2263 = vsel %vm2208, %v2259, 0.0
          %2264 = vadd.xlane.f32.xlu0 %v2263
          %v2265 = vpop.xlane.xlu0 %2264
          %s2266 = scalar_lea.vmem [#allocation3], 32
          %2267 = vst.msk [vmem:[%s2266] sm:$0xff] %vm2242, %v2262
          %2268 = vst.msk [vmem:[%s2266 + $0x8] sm:$0xff] %vm2242, %v2265
          %vm2269 = vcmp.eq.s32.totalorder %v2232, 3
          %v2270 = vsel %vm2269, %v2229, 0.0
          %v2271 = vsel %vm2269, %v2230, 0.0
          %v2272 = vsel %vm2208, %v2270, 0.0
          %2273 = vadd.xlane.f32.xlu0 %v2272
          %v2274 = vpop.xlane.xlu0 %2273
          %v2275 = vsel %vm2208, %v2271, 0.0
          %2276 = vadd.xlane.f32.xlu0 %v2275
          %v2277 = vpop.xlane.xlu0 %2276
          %s2278 = scalar_lea.vmem [#allocation3], 48
          %2279 = vst.msk [vmem:[%s2278] sm:$0xff] %vm2242, %v2274
          %2280 = vst.msk [vmem:[%s2278 + $0x8] sm:$0xff] %vm2242, %v2277
          %2281 = vst [vmem:[#allocation4] sm:$0xff] 0.0
          %2282 = vst [vmem:[#allocation4 + $0x8] sm:$0xff] 0.0
        $region84: #{tpu_custom_call.1} parent=59 // pred_fallthru
          _
        %s2283 = smul.u32 %s36, 128
        %s2284 = scalar_lea.vmem [#allocation13], %s2283
        %v2285 = vld [vmem:[%s2284] sm:$0xff]
        %v2286 = vld [vmem:[%s2284 + $0x8] sm:$0xff]
        %v2287 = vld [vmem:[%s2284 + $0x10] sm:$0xff]
        %v2288 = vld [vmem:[%s2284 + $0x18] sm:$0xff]
        %v2289 = vld [vmem:[%s2284 + $0x20] sm:$0xff]
        %v2290 = vld [vmem:[%s2284 + $0x28] sm:$0xff]
        %v2291 = vld [vmem:[%s2284 + $0x30] sm:$0xff]
        %v2292 = vld [vmem:[%s2284 + $0x38] sm:$0xff]
        %v2293 = vld [vmem:[%s2284 + $0x40] sm:$0xff]
        %v2294 = vld [vmem:[%s2284 + $0x48] sm:$0xff]
        %v2295 = vld [vmem:[%s2284 + $0x50] sm:$0xff]
        %v2296 = vld [vmem:[%s2284 + $0x58] sm:$0xff]
        %v2297 = vld [vmem:[%s2284 + $0x60] sm:$0xff]
        %v2298 = vld [vmem:[%s2284 + $0x68] sm:$0xff]
        %v2299 = vld [vmem:[%s2284 + $0x70] sm:$0xff]
        %v2300 = vld [vmem:[%s2284 + $0x78] sm:$0xff]
        %s2301 = scalar_lea.vmem %s9, %s36
        %v2302 = vld [vmem:[%s2301] sm:$0x1]
        %v2303 = vld [vmem:[#allocation2] sm:$0xff]
        %v2304 = vld [vmem:[#allocation2 + $0x8] sm:$0xff]
        %v2306 = vperm.slane %v2302, 0
        %2308 = vmatpush.msra.mxu0 %v2300
        %2309 = vmatpush.msra.mxu0 %v2299
        %2310 = vmatpush.msra.mxu0 %v2298
        %2311 = vmatpush.msra.mxu0 %v2297
        %2312 = vmatpush.msra.mxu0 %v2296
        %2313 = vmatpush.msra.mxu0 %v2295
        %2314 = vmatpush.msra.mxu0 %v2294
        %2315 = vmatpush.msra.mxu0 %v2293
        %2316 = vmatpush.msra.mxu0 %v2292
        %2317 = vmatpush.msra.mxu0 %v2291
        %2318 = vmatpush.msra.mxu0 %v2290
        %2319 = vmatpush.msra.mxu0 %v2289
        %2320 = vmatpush.msra.mxu0 %v2288
        %2321 = vmatpush.msra.mxu0 %v2287
        %2322 = vmatpush.msra.mxu0 %v2286
        %2323 = vmatpush.msra.mxu0 %v2285
        %2324 = vmatmul.f32.gmra.mxu0 %v2303
        %v2325 = vpop.f32.mrf.mxu0
        %v2326 = vadd.f32 %v2306, %v2325
        %2327 = vmatmul.f32.gmra.mxu0 %v2304
        %v2328 = vpop.f32.mrf.mxu0
        %v2329 = vadd.f32 %v2306, %v2328
        %2330 = vdwg.mxu0
        %v2331 = vld [vmem:[#allocation4] sm:$0xff]
        %v2332 = vld [vmem:[#allocation4 + $0x8] sm:$0xff]
        %s2333 = smul.u32 %s36, 16
        %s2334 = scalar_lea.vmem [#allocation3], %s2333
        %v2335 = vld [vmem:[%s2334] sm:$0xff]
        %v2336 = vld [vmem:[%s2334 + $0x8] sm:$0xff]
        %2338 = vset.pattern.permute.xlu0 0
        %2339 = vperm.xlu0 %2338, %v2335
        %v2340 = vpop.permute.xlu0 %2339
        %2343 = vset.pattern.permute.xlu0 0
        %2344 = vperm.xlu0 %2343, %v2336
        %v2345 = vpop.permute.xlu0 %2344
        %v2347 = vmul.f32 %v2340, %v2326
        %v2348 = vmul.f32 %v2345, %v2329
        %v2349 = vadd.f32 %v2331, %v2347
        %v2350 = vadd.f32 %v2332, %v2348
        %2351 = vst [vmem:[#allocation4] sm:$0xff] %v2349
        %2352 = vst [vmem:[#allocation4 + $0x8] sm:$0xff] %v2350
        %p2353 = scmp.eq.s32.totalorder %s36, 3
        // Predicated region
        $region85: #{tpu_custom_call.1} parent=59 // pred_check
          %p2354 = pneg %p2353
        $region86: #{tpu_custom_call.1} parent=59 // pred_check_branch
          %2356 = sbr.rel (%p2354) target = $region88
        $region87: #{tpu_custom_call.1} parent=59 // pred_region
          %v2357 = vld [vmem:[#allocation4] sm:$0xff]
          %v2358 = vld [vmem:[#allocation4 + $0x8] sm:$0xff]
          %2359 = vst [vmem:[%s466] sm:$0xff] %v2357
          %2360 = vst [vmem:[%s466 + $0x8] sm:$0xff] %v2358
        $region88: #{tpu_custom_call.1} parent=59 // pred_fallthru
          _
        %s2361 = sand.u32 %s275, 1
        %s2362 = scalar_lea.sflag [#allocation7], %s2361
        %s2363 = sand.u32 %s275, 1
        %s2364 = smul.addr %s2363, 16
        %s2365 = scalar_lea.vmem [#allocation14], %s2364
        // Predicated region
        $region89: #{tpu_custom_call.1} parent=59 // pred_check
          %p2366 = pneg %p285
        $region90: #{tpu_custom_call.1} parent=59 // pred_check_branch
          %2368 = sbr.rel (%p2366) target = $region92
        $region91: #{tpu_custom_call.1} parent=59 // pred_region
          %s2369 = smul.u32 2, %s35
          %2371 = vsyncadd %s2362, 0
          %s2372 = smul.addr %s34, 2
          %s2373 = sadd.s32 %s2369, %s2372
          %s2374 = smul.addr %s2373, 8
          %s2375 = scalar_lea.hbm %s10, %s2374
          %s2376 = sshll.u32 %s2365, 4
          %s2377 = int_to_ptr.vmem [resolvable:$true] %s2376
          %s2378 = sshll.u32 %s2375, 4
          %s2379 = int_to_ptr.hbm [resolvable:$true] %s2378
          %2384 = dma.vmem_to_hbm [thread:$0]  %s2377, 256, %s2379, %s2362, 128, 128, 8
        $region92: #{tpu_custom_call.1} parent=59 // pred_fallthru
          _
      $region60: #{tpu_custom_call.1} parent=5 // pred_fallthru
        _
      %p2385 = scmp.le.s32.totalorder 2, %s24
      // Predicated region
      $region93: #{tpu_custom_call.1} parent=5 // pred_check
        %p2386 = pneg %p2385
      $region94: #{tpu_custom_call.1} parent=5 // pred_check_branch
        %2388 = sbr.rel (%p2386) target = $region96
      $region95: #{tpu_custom_call.1} parent=5 // pred_region
        %s2389 = ssub.s32 %s24, 2
        // Predicated region
        $region97: #{tpu_custom_call.1} parent=95 // pred_check
          %p2390 = pneg %p291
        $region98: #{tpu_custom_call.1} parent=95 // pred_check_branch
          %2392 = sbr.rel (%p2390) target = $region100
        $region99: #{tpu_custom_call.1} parent=95 // pred_region
          %s2393 = sand.u32 %s276, 1
          %s2394 = scalar_lea.sflag [#allocation7], %s2393
          %s2395 = sand.u32 %s276, 1
          %s2396 = smul.addr %s2395, 16
          %s2397 = scalar_lea.vmem [#allocation14], %s2396
          %2399 = dma.done %s2394, 256
        $region100: #{tpu_custom_call.1} parent=95 // pred_fallthru
          _
      $region96: #{tpu_custom_call.1} parent=5 // pred_fallthru
        _
    $region6: #{tpu_custom_call.1} parent=1 // loop_footer
      %s28 = sadd.s32 1, %s24
    $region7: #{tpu_custom_call.1} parent=1 // loop_footer_branch
      %23 = sbr.rel target = $region3
    $region8: #{tpu_custom_call.1} parent=1 // loop_exit
      _
    %2400 = vsyncpa [#allocation6], 1
    %s2401 = scalar_lea.sflag [#allocation6], 1
    %2402 = vsyncpa %s2401, 1
    %2403 = vsyncpa [#allocation9], 1
    %2404 = vsyncpa [#allocation12], 1
    %2405 = vsyncpa [#allocation7], 1
    %s2406 = scalar_lea.sflag [#allocation7], 1
    %2407 = vsyncpa %s2406, 1

// kernel: tpu_custom_call.1
$region0: #{tpu_custom_call.1}
  #allocation0 [shape = 'u32[]', space=smem, size = 0x4, offset = 0x4, fixed_abs, tag = 'smem constant byte address 0x4 - core index']
  #allocation1 [shape = 'u32[72,128]{1,0:T(1,128)}', space=vmem, size = 0x9000, scoped, tag = 'internal scratch']
  #allocation2 [shape = 'f32[16,128]{1,0:T(8,128)}', space=vmem, size = 0x2000, scoped, tag = 'scratch operand']
  #allocation3 [shape = 'f32[4,16,1]{2,1,0:T(8,128)}', space=vmem, size = 0x8000, scoped, tag = 'scratch operand']
  #allocation4 [shape = 'f32[16,128]{1,0:T(8,128)}', space=vmem, size = 0x2000, scoped, tag = 'scratch operand']
  %s0 = inlined_call_operand.hbm [shape: f32[2,16,128], index: 0, kind: input, shape index: {}]
  %s1 = inlined_call_operand.hbm [shape: f32[128,384], index: 1, kind: input, shape index: {}]
  %s2 = inlined_call_operand.hbm [shape: f32[1,384], index: 2, kind: input, shape index: {}]
  %s3 = inlined_call_operand.vmem [shape: f32[128,128], index: 3, kind: input, shape index: {}]
  %s4 = inlined_call_operand.vmem [shape: f32[1,128], index: 4, kind: input, shape index: {}]
  %s5 = inlined_call_operand.vmem [shape: f32[1,128], index: 5, kind: input, shape index: {}]
  %s6 = inlined_call_operand.hbm [shape: f32[1,128], index: 6, kind: input, shape index: {}]
  %s7 = inlined_call_operand.vmem [shape: f32[128,4], index: 7, kind: input, shape index: {}]
  %s8 = inlined_call_operand.hbm [shape: f32[4,128,128], index: 8, kind: input, shape index: {}]
  %s9 = inlined_call_operand.vmem [shape: f32[4,1,128], index: 9, kind: input, shape index: {}]
  %s10 = inlined_call_operand.hbm [shape: f32[2,16,128], index: 10, kind: output, shape index: {}]
  %s11 = sld [smem:[#allocation0]]
  $region101: #{tpu_custom_call.1} parent=0
    _
  %s13 = ssub.s32 1, %s11
  %s14 = scalar_select 0, %s13, %s11
  $region1: #{tpu_custom_call.1} parent=0
    #allocation5 [shape = 'u8[16384]{0}', space=vmem, size = 0x4000, scoped, tag = 'input window, operand 0']
    #allocation6 [shape = 's32[2]{0}', space=sflag, size = 0x8, scoped, tag = 'scoped memory for tpu_custom_call.1']
    #allocation7 [shape = 's32[2]{0}', space=sflag, size = 0x8, scoped, tag = 'scoped memory for tpu_custom_call.1']
    #allocation8 [shape = 'u8[196608]{0}', space=vmem, size = 0x30000, scoped, tag = 'input window, operand 1, single buffered']
    #allocation9 [shape = 's32[1]{0}', space=sflag, size = 0x4, scoped, tag = 'scoped memory for tpu_custom_call.1']
    #allocation10 [shape = 'u8[1536]{0}', space=vmem, size = 0x800, scoped, tag = 'input window, operand 2, single buffered']
    #allocation11 [shape = 'u8[512]{0}', space=vmem, size = 0x400, scoped, tag = 'input window, operand 6, single buffered']
    #allocation12 [shape = 's32[1]{0}', space=sflag, size = 0x4, scoped, tag = 'scoped memory for tpu_custom_call.1']
    #allocation13 [shape = 'u8[262144]{0}', space=vmem, size = 0x40000, scoped, tag = 'input window, operand 8, single buffered']
    #allocation14 [shape = 'u8[16384]{0}', space=vmem, size = 0x4000, scoped, tag = 'output window, operand 0']
    %15 = vsyncpa [#allocation6], 0
    %s16 = scalar_lea.sflag [#allocation6], 1
    %17 = vsyncpa %s16, 0
    %18 = vsyncpa [#allocation9], 0
    %19 = vsyncpa [#allocation12], 0
    %20 = vsyncpa [#allocation7], 0
    %s21 = scalar_lea.sflag [#allocation7], 1
    %22 = vsyncpa %s21, 0
    loop: start=0, step=1, limit=10
    $region2: #{tpu_custom_call.1} parent=1 // loop_pre_header
      _
    $region3: #{tpu_custom_call.1} parent=1 // loop_header
      %s24 = sphi 0, %s28
      %p25 = scmp.ge.s32.totalorder %s24, 10
      %s31 = sphi 0, %s50
      %s32 = sphi 0, %s46
      %s33 = sphi 0, %s42
      %s34 = sphi 0, %s31
      %s35 = sphi 0, %s32
      %s36 = sphi 0, %s33
      %s37 = sphi 0, %s34
      %s38 = sphi 0, %s35
      %s39 = sphi 0, %s36
      %s55 = sphi 0, %s57
      %s58 = sphi 0, %s55
      %s59 = sphi 0, %s58
      %s75 = sphi 0, %s59
      %s79 = sphi 0, %s79
      %s81 = sphi 0, %s79
      %s82 = sphi 0, %s81
      %s96 = sphi 0, %s82
      %s100 = sphi 0, %s100
      %s102 = sphi 0, %s100
      %s103 = sphi 0, %s102
      %s117 = sphi 0, %s103
      %s121 = sphi 0, %s121
      %s123 = sphi 0, %s121
      %s124 = sphi 0, %s123
      %s138 = sphi 0, %s124
      %s142 = sphi 0, %s142
      %s144 = sphi 0, %s142
      %s145 = sphi 0, %s144
      %s159 = sphi 0, %s145
      %s163 = sphi 0, %s163
      %s165 = sphi 0, %s163
      %s166 = sphi 0, %s165
      %s180 = sphi 0, %s166
      %s184 = sphi 0, %s184
      %s186 = sphi 0, %s184
      %s187 = sphi 0, %s186
      %s201 = sphi 0, %s187
      %s205 = sphi 0, %s205
      %s207 = sphi 0, %s205
      %s208 = sphi 0, %s207
      %s222 = sphi 0, %s208
      %s226 = sphi 0, %s226
      %s228 = sphi 0, %s226
      %s229 = sphi 0, %s228
      %s243 = sphi 0, %s229
      %s247 = sphi 0, %s247
      %s249 = sphi 0, %s247
      %s250 = sphi 0, %s249
      %s264 = sphi 0, %s250
      %s272 = sphi 0, %s274
      %s275 = sphi 0, %s272
      %s276 = sphi 0, %s275
      %s292 = sphi 0, %s276
    $region4: #{tpu_custom_call.1} parent=1 // loop_header_branch
      %27 = sbr.rel (%p25) target = $region8
    $region5: #{tpu_custom_call.1} parent=1 // loop_body
      %s29 = ssub.s32 %s24, 1
      %s30 = ssub.s32 %s24, 2
      %s40 = sadd.s32 1, %s33
      %p41 = scmp.ge.s32.totalorder %s40, 4
      %s42 = scalar_select %p41, 0, %s40
      %s43 = sadd.s32 1, %s32
      %s44 = scalar_select %p41, %s43, %s32
      %p45 = scmp.ge.s32.totalorder %s44, 1
      %s46 = scalar_select %p45, 0, %s44
      %s47 = sadd.s32 1, %s31
      %s48 = scalar_select %p45, %s47, %s31
      %p49 = scmp.ge.s32.totalorder %s48, 2
      %s50 = scalar_select %p49, 0, %s48
      %s51 = ssub.s32 %s31, %s50
      %s52 = ssub.s32 %s32, %s46
      %s53 = sor.u32 %s51, %s52
      %p54 = scmp.eq.s32.totalorder %s53, 0
      %s56 = sadd.s32 %s55, 1
      %s57 = scalar_select %p54, %s55, %s56
      %p60 = pneg %p54
      %p61 = scmp.eq.s32.totalorder %s24, 7
      %p62 = por %p60, %p61
      %p63 = scmp.ne.s32.totalorder %s55, %s58
      %p64 = scmp.eq.s32.totalorder %s24, 0
      %p65 = por %p63, %p64
      %p66 = scmp.ne.s32.totalorder %s55, %s58
      %p67 = scmp.eq.s32.totalorder %s29, 7
      %p68 = por %p66, %p67
      %p69 = scmp.ne.s32.totalorder %s58, %s59
      %p70 = scmp.eq.s32.totalorder %s29, 0
      %p71 = por %p69, %p70
      %p72 = scmp.ne.s32.totalorder %s58, %s59
      %p73 = scmp.eq.s32.totalorder %s30, 7
      %p74 = por %p72, %p73
      %p76 = scmp.ne.s32.totalorder %s59, %s75
      %p77 = scmp.eq.s32.totalorder %s30, 0
      %p78 = por %p76, %p77
      %s80 = sadd.s32 %s79, 1
      %p83 = scmp.eq.s32.totalorder %s24, 7
      %p84 = scmp.ne.s32.totalorder %s79, %s81
      %p85 = scmp.eq.s32.totalorder %s24, 0
      %p86 = por %p84, %p85
      %p87 = scmp.ne.s32.totalorder %s79, %s81
      %p88 = scmp.eq.s32.totalorder %s29, 7
      %p89 = por %p87, %p88
      %p90 = scmp.ne.s32.totalorder %s81, %s82
      %p91 = scmp.eq.s32.totalorder %s29, 0
      %p92 = por %p90, %p91
      %p93 = scmp.ne.s32.totalorder %s81, %s82
      %p94 = scmp.eq.s32.totalorder %s30, 7
      %p95 = por %p93, %p94
      %p97 = scmp.ne.s32.totalorder %s82, %s96
      %p98 = scmp.eq.s32.totalorder %s30, 0
      %p99 = por %p97, %p98
      %s101 = sadd.s32 %s100, 1
      %p104 = scmp.eq.s32.totalorder %s24, 7
      %p105 = scmp.ne.s32.totalorder %s100, %s102
      %p106 = scmp.eq.s32.totalorder %s24, 0
      %p107 = por %p105, %p106
      %p108 = scmp.ne.s32.totalorder %s100, %s102
      %p109 = scmp.eq.s32.totalorder %s29, 7
      %p110 = por %p108, %p109
      %p111 = scmp.ne.s32.totalorder %s102, %s103
      %p112 = scmp.eq.s32.totalorder %s29, 0
      %p113 = por %p111, %p112
      %p114 = scmp.ne.s32.totalorder %s102, %s103
      %p115 = scmp.eq.s32.totalorder %s30, 7
      %p116 = por %p114, %p115
      %p118 = scmp.ne.s32.totalorder %s103, %s117
      %p119 = scmp.eq.s32.totalorder %s30, 0
      %p120 = por %p118, %p119
      %s122 = sadd.s32 %s121, 1
      %p125 = scmp.eq.s32.totalorder %s24, 7
      %p126 = scmp.ne.s32.totalorder %s121, %s123
      %p127 = scmp.eq.s32.totalorder %s24, 0
      %p128 = por %p126, %p127
      %p129 = scmp.ne.s32.totalorder %s121, %s123
      %p130 = scmp.eq.s32.totalorder %s29, 7
      %p131 = por %p129, %p130
      %p132 = scmp.ne.s32.totalorder %s123, %s124
      %p133 = scmp.eq.s32.totalorder %s29, 0
      %p134 = por %p132, %p133
      %p135 = scmp.ne.s32.totalorder %s123, %s124
      %p136 = scmp.eq.s32.totalorder %s30, 7
      %p137 = por %p135, %p136
      %p139 = scmp.ne.s32.totalorder %s124, %s138
      %p140 = scmp.eq.s32.totalorder %s30, 0
      %p141 = por %p139, %p140
      %s143 = sadd.s32 %s142, 1
      %p146 = scmp.eq.s32.totalorder %s24, 7
      %p147 = scmp.ne.s32.totalorder %s142, %s144
      %p148 = scmp.eq.s32.totalorder %s24, 0
      %p149 = por %p147, %p148
      %p150 = scmp.ne.s32.totalorder %s142, %s144
      %p151 = scmp.eq.s32.totalorder %s29, 7
      %p152 = por %p150, %p151
      %p153 = scmp.ne.s32.totalorder %s144, %s145
      %p154 = scmp.eq.s32.totalorder %s29, 0
      %p155 = por %p153, %p154
      %p156 = scmp.ne.s32.totalorder %s144, %s145
      %p157 = scmp.eq.s32.totalorder %s30, 7
      %p158 = por %p156, %p157
      %p160 = scmp.ne.s32.totalorder %s145, %s159
      %p161 = scmp.eq.s32.totalorder %s30, 0
      %p162 = por %p160, %p161
      %s164 = sadd.s32 %s163, 1
      %p167 = scmp.eq.s32.totalorder %s24, 7
      %p168 = scmp.ne.s32.totalorder %s163, %s165
      %p169 = scmp.eq.s32.totalorder %s24, 0
      %p170 = por %p168, %p169
      %p171 = scmp.ne.s32.totalorder %s163, %s165
      %p172 = scmp.eq.s32.totalorder %s29, 7
      %p173 = por %p171, %p172
      %p174 = scmp.ne.s32.totalorder %s165, %s166
      %p175 = scmp.eq.s32.totalorder %s29, 0
      %p176 = por %p174, %p175
      %p177 = scmp.ne.s32.totalorder %s165, %s166
      %p178 = scmp.eq.s32.totalorder %s30, 7
      %p179 = por %p177, %p178
      %p181 = scmp.ne.s32.totalorder %s166, %s180
      %p182 = scmp.eq.s32.totalorder %s30, 0
      %p183 = por %p181, %p182
      %s185 = sadd.s32 %s184, 1
      %p188 = scmp.eq.s32.totalorder %s24, 7
      %p189 = scmp.ne.s32.totalorder %s184, %s186
      %p190 = scmp.eq.s32.totalorder %s24, 0
      %p191 = por %p189, %p190
      %p192 = scmp.ne.s32.totalorder %s184, %s186
      %p193 = scmp.eq.s32.totalorder %s29, 7
      %p194 = por %p192, %p193
      %p195 = scmp.ne.s32.totalorder %s186, %s187
      %p196 = scmp.eq.s32.totalorder %s29, 0
      %p197 = por %p195, %p196
      %p198 = scmp.ne.s32.totalorder %s186, %s187
      %p199 = scmp.eq.s32.totalorder %s30, 7
      %p200 = por %p198, %p199
      %p202 = scmp.ne.s32.totalorder %s187, %s201
      %p203 = scmp.eq.s32.totalorder %s30, 0
      %p204 = por %p202, %p203
      %s206 = sadd.s32 %s205, 1
      %p209 = scmp.eq.s32.totalorder %s24, 7
      %p210 = scmp.ne.s32.totalorder %s205, %s207
      %p211 = scmp.eq.s32.totalorder %s24, 0
      %p212 = por %p210, %p211
      %p213 = scmp.ne.s32.totalorder %s205, %s207
      %p214 = scmp.eq.s32.totalorder %s29, 7
      %p215 = por %p213, %p214
      %p216 = scmp.ne.s32.totalorder %s207, %s208
      %p217 = scmp.eq.s32.totalorder %s29, 0
      %p218 = por %p216, %p217
      %p219 = scmp.ne.s32.totalorder %s207, %s208
      %p220 = scmp.eq.s32.totalorder %s30, 7
      %p221 = por %p219, %p220
      %p223 = scmp.ne.s32.totalorder %s208, %s222
      %p224 = scmp.eq.s32.totalorder %s30, 0
      %p225 = por %p223, %p224
      %s227 = sadd.s32 %s226, 1
      %p230 = scmp.eq.s32.totalorder %s24, 7
      %p231 = scmp.ne.s32.totalorder %s226, %s228
      %p232 = scmp.eq.s32.totalorder %s24, 0
      %p233 = por %p231, %p232
      %p234 = scmp.ne.s32.totalorder %s226, %s228
      %p235 = scmp.eq.s32.totalorder %s29, 7
      %p236 = por %p234, %p235
      %p237 = scmp.ne.s32.totalorder %s228, %s229
      %p238 = scmp.eq.s32.totalorder %s29, 0
      %p239 = por %p237, %p238
      %p240 = scmp.ne.s32.totalorder %s228, %s229
      %p241 = scmp.eq.s32.totalorder %s30, 7
      %p242 = por %p240, %p241
      %p244 = scmp.ne.s32.totalorder %s229, %s243
      %p245 = scmp.eq.s32.totalorder %s30, 0
      %p246 = por %p244, %p245
      %s248 = sadd.s32 %s247, 1
      %p251 = scmp.eq.s32.totalorder %s24, 7
      %p252 = scmp.ne.s32.totalorder %s247, %s249
      %p253 = scmp.eq.s32.totalorder %s24, 0
      %p254 = por %p252, %p253
      %p255 = scmp.ne.s32.totalorder %s247, %s249
      %p256 = scmp.eq.s32.totalorder %s29, 7
      %p257 = por %p255, %p256
      %p258 = scmp.ne.s32.totalorder %s249, %s250
      %p259 = scmp.eq.s32.totalorder %s29, 0
      %p260 = por %p258, %p259
      %p261 = scmp.ne.s32.totalorder %s249, %s250
      %p262 = scmp.eq.s32.totalorder %s30, 7
      %p263 = por %p261, %p262
      %p265 = scmp.ne.s32.totalorder %s250, %s264
      %p266 = scmp.eq.s32.totalorder %s30, 0
      %p267 = por %p265, %p266
      %s268 = ssub.s32 %s31, %s50
      %s269 = ssub.s32 %s32, %s46
      %s270 = sor.u32 %s268, %s269
      %p271 = scmp.eq.s32.totalorder %s270, 0
      %s273 = sadd.s32 %s272, 1
      %s274 = scalar_select %p271, %s272, %s273
      %p277 = pneg %p271
      %p278 = scmp.eq.s32.totalorder %s24, 7
      %p279 = por %p277, %p278
      %p280 = scmp.ne.s32.totalorder %s272, %s275
      %p281 = scmp.eq.s32.totalorder %s24, 0
      %p282 = por %p280, %p281
      %p283 = scmp.ne.s32.totalorder %s272, %s275
      %p284 = scmp.eq.s32.totalorder %s29, 7
      %p285 = por %p283, %p284
      %p286 = scmp.ne.s32.totalorder %s275, %s276
      %p287 = scmp.eq.s32.totalorder %s29, 0
      %p288 = por %p286, %p287
      %p289 = scmp.ne.s32.totalorder %s275, %s276
      %p290 = scmp.eq.s32.totalorder %s30, 7
      %p291 = por %p289, %p290
      %p293 = scmp.ne.s32.totalorder %s276, %s292
      %p294 = scmp.eq.s32.totalorder %s30, 0
      %p295 = por %p293, %p294
      %p296 = scmp.le.s32.totalorder 1, %s24
      %p297 = scmp.lt.s32.totalorder %s24, 9
      %p298 = pnand %p296, %p297
      %p299 = pneg %p298
      // Predicated region
      $region9: #{tpu_custom_call.1} parent=5 // pred_check
        _
      $region10: #{tpu_custom_call.1} parent=5 // pred_check_branch
        %301 = sbr.rel (%p298) target = $region12
      $region11: #{tpu_custom_call.1} parent=5 // pred_region
        %s302 = ssub.s32 %s24, 1
        // Predicated region
        $region13: #{tpu_custom_call.1} parent=11 // pred_check
          %p303 = pneg %p92
        $region14: #{tpu_custom_call.1} parent=11 // pred_check_branch
          %305 = sbr.rel (%p303) target = $region16
        $region15: #{tpu_custom_call.1} parent=11 // pred_region
          %307 = vsyncadd [#allocation9], 0
          %s308 = sshll.u32 %s1, 4
          %s309 = int_to_ptr.hbm [resolvable:$true] %s308
          %s310 = sshll.u32 [#allocation8], 4
          %s311 = int_to_ptr.vmem [resolvable:$true] %s310
          %316 = dma.hbm_to_vmem [thread:$0]  %s309, 6144, %s311, [#allocation9], 384, 384, 24
        $region16: #{tpu_custom_call.1} parent=11 // pred_fallthru
          _
        // Predicated region
        $region17: #{tpu_custom_call.1} parent=11 // pred_check
          %p317 = pneg %p113
        $region18: #{tpu_custom_call.1} parent=11 // pred_check_branch
          %319 = sbr.rel (%p317) target = $region20
        $region19: #{tpu_custom_call.1} parent=11 // pred_region
          %321 = vsyncadd [#allocation9], 0
          %s323 = sshll.u32 %s2, 4
          %s324 = int_to_ptr.hbm [resolvable:$true] %s323
          %s325 = sshll.u32 [#allocation10], 4
          %s326 = int_to_ptr.vmem [resolvable:$true] %s325
          %328 = dma.hbm_to_vmem [thread:$0]  %s324, 48, %s326, [#allocation9]
        $region20: #{tpu_custom_call.1} parent=11 // pred_fallthru
          _
        // Predicated region
        $region21: #{tpu_custom_call.1} parent=11 // pred_check
          %p329 = pneg %p134
        $region22: #{tpu_custom_call.1} parent=11 // pred_check_branch
          %331 = sbr.rel (%p329) target = $region24
        $region23: #{tpu_custom_call.1} parent=11 // pred_region
          _
        $region24: #{tpu_custom_call.1} parent=11 // pred_fallthru
          _
        // Predicated region
        $region25: #{tpu_custom_call.1} parent=11 // pred_check
          %p332 = pneg %p155
        $region26: #{tpu_custom_call.1} parent=11 // pred_check_branch
          %334 = sbr.rel (%p332) target = $region28
        $region27: #{tpu_custom_call.1} parent=11 // pred_region
          _
        $region28: #{tpu_custom_call.1} parent=11 // pred_fallthru
          _
        // Predicated region
        $region29: #{tpu_custom_call.1} parent=11 // pred_check
          %p335 = pneg %p176
        $region30: #{tpu_custom_call.1} parent=11 // pred_check_branch
          %337 = sbr.rel (%p335) target = $region32
        $region31: #{tpu_custom_call.1} parent=11 // pred_region
          _
        $region32: #{tpu_custom_call.1} parent=11 // pred_fallthru
          _
        // Predicated region
        $region33: #{tpu_custom_call.1} parent=11 // pred_check
          %p338 = pneg %p197
        $region34: #{tpu_custom_call.1} parent=11 // pred_check_branch
          %340 = sbr.rel (%p338) target = $region36
        $region35: #{tpu_custom_call.1} parent=11 // pred_region
          %342 = vsyncadd [#allocation12], 0
          %s344 = sshll.u32 %s6, 4
          %s345 = int_to_ptr.hbm [resolvable:$true] %s344
          %s346 = sshll.u32 [#allocation11], 4
          %s347 = int_to_ptr.vmem [resolvable:$true] %s346
          %349 = dma.hbm_to_vmem [thread:$0]  %s345, 16, %s347, [#allocation12]
        $region36: #{tpu_custom_call.1} parent=11 // pred_fallthru
          _
        // Predicated region
        $region37: #{tpu_custom_call.1} parent=11 // pred_check
          %p350 = pneg %p218
        $region38: #{tpu_custom_call.1} parent=11 // pred_check_branch
          %352 = sbr.rel (%p350) target = $region40
        $region39: #{tpu_custom_call.1} parent=11 // pred_region
          _
        $region40: #{tpu_custom_call.1} parent=11 // pred_fallthru
          _
        // Predicated region
        $region41: #{tpu_custom_call.1} parent=11 // pred_check
          %p353 = pneg %p239
        $region42: #{tpu_custom_call.1} parent=11 // pred_check_branch
          %355 = sbr.rel (%p353) target = $region44
        $region43: #{tpu_custom_call.1} parent=11 // pred_region
          %357 = vsyncadd [#allocation12], 0
          %s358 = sshll.u32 %s8, 4
          %s359 = int_to_ptr.hbm [resolvable:$true] %s358
          %s360 = sshll.u32 [#allocation13], 4
          %s361 = int_to_ptr.vmem [resolvable:$true] %s360
          %366 = dma.hbm_to_vmem [thread:$0]  %s359, 8192, %s361, [#allocation12], 128, 128, 8
        $region44: #{tpu_custom_call.1} parent=11 // pred_fallthru
          _
        // Predicated region
        $region45: #{tpu_custom_call.1} parent=11 // pred_check
          %p367 = pneg %p260
        $region46: #{tpu_custom_call.1} parent=11 // pred_check_branch
          %369 = sbr.rel (%p367) target = $region48
        $region47: #{tpu_custom_call.1} parent=11 // pred_region
          _
        $region48: #{tpu_custom_call.1} parent=11 // pred_fallthru
          _
      $region12: #{tpu_custom_call.1} parent=5 // pred_fallthru
        _
      %p370 = scmp.lt.s32.totalorder %s24, 8
      // Predicated region
      $region49: #{tpu_custom_call.1} parent=5 // pred_check
        %p371 = pneg %p370
      $region50: #{tpu_custom_call.1} parent=5 // pred_check_branch
        %373 = sbr.rel (%p371) target = $region52
      $region51: #{tpu_custom_call.1} parent=5 // pred_region
        // Predicated region
        $region53: #{tpu_custom_call.1} parent=51 // pred_check
          %p374 = pneg %p65
        $region54: #{tpu_custom_call.1} parent=51 // pred_check_branch
          %376 = sbr.rel (%p374) target = $region56
        $region55: #{tpu_custom_call.1} parent=51 // pred_region
          %s377 = sand.u32 %s55, 1
          %s378 = scalar_lea.sflag [#allocation6], %s377
          %s379 = sand.u32 %s55, 1
          %s380 = smul.addr %s379, 16
          %s381 = scalar_lea.vmem [#allocation5], %s380
          %s382 = smul.u32 2, %s32
          %384 = vsyncadd %s378, 0
          %s385 = smul.addr %s31, 2
          %s386 = sadd.s32 %s382, %s385
          %s387 = smul.addr %s386, 8
          %s388 = scalar_lea.hbm %s0, %s387
          %s389 = sshll.u32 %s388, 4
          %s390 = int_to_ptr.hbm [resolvable:$true] %s389
          %s391 = sshll.u32 %s381, 4
          %s392 = int_to_ptr.vmem [resolvable:$true] %s391
          %397 = dma.hbm_to_vmem [thread:$0]  %s390, 256, %s392, %s378, 128, 128, 8
        $region56: #{tpu_custom_call.1} parent=51 // pred_fallthru
          _
      $region52: #{tpu_custom_call.1} parent=5 // pred_fallthru
        _
      %p398 = scmp.le.s32.totalorder 1, %s24
      %p399 = scmp.lt.s32.totalorder %s24, 9
      %p400 = pnand %p398, %p399
      %p401 = pneg %p400
      // Predicated region
      $region57: #{tpu_custom_call.1} parent=5 // pred_check
        _
      $region58: #{tpu_custom_call.1} parent=5 // pred_check_branch
        %403 = sbr.rel (%p400) target = $region60
      $region59: #{tpu_custom_call.1} parent=5 // pred_region
        %s404 = ssub.s32 %s24, 1
        %s405 = sand.u32 %s58, 1
        %s406 = scalar_lea.sflag [#allocation6], %s405
        %s407 = sand.u32 %s58, 1
        %s408 = smul.addr %s407, 16
        %s409 = scalar_lea.vmem [#allocation5], %s408
        // Predicated region
        $region61: #{tpu_custom_call.1} parent=59 // pred_check
          %p410 = pneg %p71
        $region62: #{tpu_custom_call.1} parent=59 // pred_check_branch
          %412 = sbr.rel (%p410) target = $region64
        $region63: #{tpu_custom_call.1} parent=59 // pred_region
          %414 = dma.done %s406, 256
        $region64: #{tpu_custom_call.1} parent=59 // pred_fallthru
          _
        // Predicated region
        $region65: #{tpu_custom_call.1} parent=59 // pred_check
          %p415 = pneg %p92
        $region66: #{tpu_custom_call.1} parent=59 // pred_check_branch
          %417 = sbr.rel (%p415) target = $region68
        $region67: #{tpu_custom_call.1} parent=59 // pred_region
          %419 = dma.done [#allocation9], 6144
        $region68: #{tpu_custom_call.1} parent=59 // pred_fallthru
          _
        // Predicated region
        $region69: #{tpu_custom_call.1} parent=59 // pred_check
          %p420 = pneg %p113
        $region70: #{tpu_custom_call.1} parent=59 // pred_check_branch
          %422 = sbr.rel (%p420) target = $region72
        $region71: #{tpu_custom_call.1} parent=59 // pred_region
          %424 = dma.done [#allocation9], 48
        $region72: #{tpu_custom_call.1} parent=59 // pred_fallthru
          _
        // Predicated region
        $region73: #{tpu_custom_call.1} parent=59 // pred_check
          %p425 = pneg %p197
        $region74: #{tpu_custom_call.1} parent=59 // pred_check_branch
          %427 = sbr.rel (%p425) target = $region76
        $region75: #{tpu_custom_call.1} parent=59 // pred_region
          %429 = dma.done [#allocation12], 16
        $region76: #{tpu_custom_call.1} parent=59 // pred_fallthru
          _
        // Predicated region
        $region77: #{tpu_custom_call.1} parent=59 // pred_check
          %p430 = pneg %p239
        $region78: #{tpu_custom_call.1} parent=59 // pred_check_branch
          %432 = sbr.rel (%p430) target = $region80
        $region79: #{tpu_custom_call.1} parent=59 // pred_region
          %434 = dma.done [#allocation12], 8192
        $region80: #{tpu_custom_call.1} parent=59 // pred_fallthru
          _
        %s435 = sand.u32 %s58, 1
        %s436 = scalar_lea.sflag [#allocation6], %s435
        %s437 = sand.u32 %s58, 1
        %s438 = smul.addr %s437, 16
        %s439 = scalar_lea.vmem [#allocation5], %s438
        %p440 = pneg %p71
        %p441 = pneg %p68
        %p442 = pneg %p92
        %p443 = pneg %p89
        %p444 = pneg %p113
        %p445 = pneg %p110
        %p446 = pneg %p134
        %p447 = pneg %p131
        %p448 = pneg %p155
        %p449 = pneg %p152
        %p450 = pneg %p176
        %p451 = pneg %p173
        %p452 = pneg %p197
        %p453 = pneg %p194
        %p454 = pneg %p218
        %p455 = pneg %p215
        %p456 = pneg %p239
        %p457 = pneg %p236
        %p458 = pneg %p260
        %p459 = pneg %p257
        %p460 = pneg %p288
        %p461 = pneg %p285
        %s462 = sand.u32 %s275, 1
        %s463 = scalar_lea.sflag [#allocation7], %s462
        %s464 = sand.u32 %s275, 1
        %s465 = smul.addr %s464, 16
        %s466 = scalar_lea.vmem [#allocation14], %s465
        %s467 = smul.u32 2, %s35
        %s468 = smul.u32 2, %s35
        %p469 = scmp.eq.s32.totalorder %s36, 0
        // Predicated region
        $region81: #{tpu_custom_call.1} parent=59 // pred_check
          %p470 = pneg %p469
        $region82: #{tpu_custom_call.1} parent=59 // pred_check_branch
          %472 = sbr.rel (%p470) target = $region84
        $region83: #{tpu_custom_call.1} parent=59 // pred_region
          %v473 = vld [vmem:[%s409] sm:$0xff]
          %v474 = vld [vmem:[%s409 + $0x8] sm:$0xff]
          %v475 = vld [vmem:[#allocation8] sm:$0xff]
          %v476 = vld [vmem:[#allocation8 + $0x8] sm:$0xff]
          %v477 = vld [vmem:[#allocation8 + $0x10] sm:$0xff]
          %v478 = vld [vmem:[#allocation8 + $0x18] sm:$0xff]
          %v479 = vld [vmem:[#allocation8 + $0x20] sm:$0xff]
          %v480 = vld [vmem:[#allocation8 + $0x28] sm:$0xff]
          %v481 = vld [vmem:[#allocation8 + $0x30] sm:$0xff]
          %v482 = vld [vmem:[#allocation8 + $0x38] sm:$0xff]
          %v483 = vld [vmem:[#allocation8 + $0x40] sm:$0xff]
          %v484 = vld [vmem:[#allocation8 + $0x48] sm:$0xff]
          %v485 = vld [vmem:[#allocation8 + $0x50] sm:$0xff]
          %v486 = vld [vmem:[#allocation8 + $0x58] sm:$0xff]
          %v487 = vld [vmem:[#allocation8 + $0x60] sm:$0xff]
          %v488 = vld [vmem:[#allocation8 + $0x68] sm:$0xff]
          %v489 = vld [vmem:[#allocation8 + $0x70] sm:$0xff]
          %v490 = vld [vmem:[#allocation8 + $0x78] sm:$0xff]
          %v491 = vld [vmem:[#allocation8 + $0x80] sm:$0xff]
          %v492 = vld [vmem:[#allocation8 + $0x88] sm:$0xff]
          %v493 = vld [vmem:[#allocation8 + $0x90] sm:$0xff]
          %v494 = vld [vmem:[#allocation8 + $0x98] sm:$0xff]
          %v495 = vld [vmem:[#allocation8 + $0xa0] sm:$0xff]
          %v496 = vld [vmem:[#allocation8 + $0xa8] sm:$0xff]
          %v497 = vld [vmem:[#allocation8 + $0xb0] sm:$0xff]
          %v498 = vld [vmem:[#allocation8 + $0xb8] sm:$0xff]
          %v499 = vld [vmem:[#allocation8 + $0xc0] sm:$0xff]
          %v500 = vld [vmem:[#allocation8 + $0xc8] sm:$0xff]
          %v501 = vld [vmem:[#allocation8 + $0xd0] sm:$0xff]
          %v502 = vld [vmem:[#allocation8 + $0xd8] sm:$0xff]
          %v503 = vld [vmem:[#allocation8 + $0xe0] sm:$0xff]
          %v504 = vld [vmem:[#allocation8 + $0xe8] sm:$0xff]
          %v505 = vld [vmem:[#allocation8 + $0xf0] sm:$0xff]
          %v506 = vld [vmem:[#allocation8 + $0xf8] sm:$0xff]
          %v507 = vld [vmem:[#allocation8 + $0x100] sm:$0xff]
          %v508 = vld [vmem:[#allocation8 + $0x108] sm:$0xff]
          %v509 = vld [vmem:[#allocation8 + $0x110] sm:$0xff]
          %v510 = vld [vmem:[#allocation8 + $0x118] sm:$0xff]
          %v511 = vld [vmem:[#allocation8 + $0x120] sm:$0xff]
          %v512 = vld [vmem:[#allocation8 + $0x128] sm:$0xff]
          %v513 = vld [vmem:[#allocation8 + $0x130] sm:$0xff]
          %v514 = vld [vmem:[#allocation8 + $0x138] sm:$0xff]
          %v515 = vld [vmem:[#allocation8 + $0x140] sm:$0xff]
          %v516 = vld [vmem:[#allocation8 + $0x148] sm:$0xff]
          %v517 = vld [vmem:[#allocation8 + $0x150] sm:$0xff]
          %v518 = vld [vmem:[#allocation8 + $0x158] sm:$0xff]
          %v519 = vld [vmem:[#allocation8 + $0x160] sm:$0xff]
          %v520 = vld [vmem:[#allocation8 + $0x168] sm:$0xff]
          %v521 = vld [vmem:[#allocation8 + $0x170] sm:$0xff]
          %v522 = vld [vmem:[#allocation8 + $0x178] sm:$0xff]
          %v523 = vld [vmem:[#allocation10] sm:$0x7]
          %v525 = vperm.slane %v523, 0
          %v526 = vperm.slane %v523, 1
          %v527 = vperm.slane %v523, 2
          %531 = vmatpush.msra.mxu0 %v520
          %532 = vmatpush.msra.mxu0 %v517
          %533 = vmatpush.msra.mxu0 %v514
          %534 = vmatpush.msra.mxu0 %v511
          %535 = vmatpush.msra.mxu0 %v508
          %536 = vmatpush.msra.mxu0 %v505
          %537 = vmatpush.msra.mxu0 %v502
          %538 = vmatpush.msra.mxu0 %v499
          %539 = vmatpush.msra.mxu0 %v496
          %540 = vmatpush.msra.mxu0 %v493
          %541 = vmatpush.msra.mxu0 %v490
          %542 = vmatpush.msra.mxu0 %v487
          %543 = vmatpush.msra.mxu0 %v484
          %544 = vmatpush.msra.mxu0 %v481
          %545 = vmatpush.msra.mxu0 %v478
          %546 = vmatpush.msra.mxu0 %v475
          %547 = vmatmul.f32.gmra.mxu0 %v473
          %v548 = vpop.f32.mrf.mxu0
          %v549 = vadd.f32 %v525, %v548
          %550 = vmatmul.f32.gmra.mxu0 %v474
          %v551 = vpop.f32.mrf.mxu0
          %v552 = vadd.f32 %v525, %v551
          %553 = vdwg.mxu0
          %554 = vmatpush.msra.mxu0 %v521
          %555 = vmatpush.msra.mxu0 %v518
          %556 = vmatpush.msra.mxu0 %v515
          %557 = vmatpush.msra.mxu0 %v512
          %558 = vmatpush.msra.mxu0 %v509
          %559 = vmatpush.msra.mxu0 %v506
          %560 = vmatpush.msra.mxu0 %v503
          %561 = vmatpush.msra.mxu0 %v500
          %562 = vmatpush.msra.mxu0 %v497
          %563 = vmatpush.msra.mxu0 %v494
          %564 = vmatpush.msra.mxu0 %v491
          %565 = vmatpush.msra.mxu0 %v488
          %566 = vmatpush.msra.mxu0 %v485
          %567 = vmatpush.msra.mxu0 %v482
          %568 = vmatpush.msra.mxu0 %v479
          %569 = vmatpush.msra.mxu0 %v476
          %570 = vmatmul.f32.gmra.mxu0 %v473
          %v571 = vpop.f32.mrf.mxu0
          %v572 = vadd.f32 %v526, %v571
          %573 = vmatmul.f32.gmra.mxu0 %v474
          %v574 = vpop.f32.mrf.mxu0
          %v575 = vadd.f32 %v526, %v574
          %576 = vdwg.mxu0
          %577 = vmatpush.msra.mxu0 %v522
          %578 = vmatpush.msra.mxu0 %v519
          %579 = vmatpush.msra.mxu0 %v516
          %580 = vmatpush.msra.mxu0 %v513
          %581 = vmatpush.msra.mxu0 %v510
          %582 = vmatpush.msra.mxu0 %v507
          %583 = vmatpush.msra.mxu0 %v504
          %584 = vmatpush.msra.mxu0 %v501
          %585 = vmatpush.msra.mxu0 %v498
          %586 = vmatpush.msra.mxu0 %v495
          %587 = vmatpush.msra.mxu0 %v492
          %588 = vmatpush.msra.mxu0 %v489
          %589 = vmatpush.msra.mxu0 %v486
          %590 = vmatpush.msra.mxu0 %v483
          %591 = vmatpush.msra.mxu0 %v480
          %592 = vmatpush.msra.mxu0 %v477
          %593 = vmatmul.f32.gmra.mxu0 %v473
          %v594 = vpop.f32.mrf.mxu0
          %v595 = vadd.f32 %v527, %v594
          %596 = vmatmul.f32.gmra.mxu0 %v474
          %v597 = vpop.f32.mrf.mxu0
          %v598 = vadd.f32 %v527, %v597
          %599 = vdwg.mxu0
          %601 = vrot.lane.b32.xlu0 %v549, 96
          %v602 = vpop.permute.xlu0 %601
          %604 = vrot.lane.b32.xlu0 %v549, 64
          %v605 = vpop.permute.xlu0 %604
          %607 = vrot.lane.b32.xlu0 %v549, 32
          %v608 = vpop.permute.xlu0 %607
          %v610 = vrot.slane %v605, 4
          %vm611 = vcmask 1047556
          %v612 = vsel %vm611, %v610, %v549
          %v613 = vrot.slane %v549, 4
          %v614 = vsel %vm611, %v605, %v613
          %v616 = vunpack.c.l.s4 1983009808
          %v617 = vunpack.c.0.s8 %v616
          %v618 = vperm.slane %v612, %v617
          %v620 = vunpack.c.l.s4 1983009808
          %v621 = vunpack.c.0.s8 %v620
          %v622 = vperm.slane %v614, %v621
          %v623 = vrot.slane %v608, 4
          %v624 = vsel %vm611, %v623, %v602
          %v625 = vrot.slane %v602, 4
          %v626 = vsel %vm611, %v608, %v625
          %v628 = vunpack.c.l.s4 1983009808
          %v629 = vunpack.c.0.s8 %v628
          %v630 = vperm.slane %v624, %v629
          %v632 = vunpack.c.l.s4 1983009808
          %v633 = vunpack.c.0.s8 %v632
          %v634 = vperm.slane %v626, %v633
          %v635 = vrot.slane %v630, 4
          %v636 = vsel %vm611, %v635, %v618
          %v637 = vrot.slane %v618, 4
          %v638 = vsel %vm611, %v630, %v637
          %v640 = vunpack.c.l.s4 1934713408
          %v641 = vunpack.c.0.s8 %v640
          %v642 = vperm.slane %v636, %v641
          %v644 = vunpack.c.l.s4 1934713408
          %v645 = vunpack.c.0.s8 %v644
          %v646 = vperm.slane %v638, %v645
          %v647 = vrot.slane %v634, 4
          %v648 = vsel %vm611, %v647, %v622
          %v649 = vrot.slane %v622, 4
          %v650 = vsel %vm611, %v634, %v649
          %v652 = vunpack.c.l.s4 1934713408
          %v653 = vunpack.c.0.s8 %v652
          %v654 = vperm.slane %v648, %v653
          %v656 = vunpack.c.l.s4 1934713408
          %v657 = vunpack.c.0.s8 %v656
          %v658 = vperm.slane %v650, %v657
          %v659 = vrot.slane %v642, 4
          %v660 = vsel %vm611, 0.0, %v659
          %v661 = vrot.slane %v646, 4
          %v662 = vsel %vm611, 0.0, %v661
          %v663 = vrot.slane %v654, 4
          %v664 = vsel %vm611, 0.0, %v663
          %v665 = vrot.slane %v658, 4
          %v666 = vsel %vm611, 0.0, %v665
          %v667 = vsel %vm611, %v661, %v642
          %v669 = vunpack.c.l.s4 1983009808
          %v670 = vunpack.c.0.s8 %v669
          %v671 = vperm.slane %v667, %v670
          %v672 = vrot.slane %v662, 4
          %v673 = vsel %vm611, %v672, %v660
          %v675 = vunpack.c.l.s4 1983009808
          %v676 = vunpack.c.0.s8 %v675
          %v677 = vperm.slane %v673, %v676
          %v678 = vsel %vm611, %v665, %v654
          %v680 = vunpack.c.l.s4 1983009808
          %v681 = vunpack.c.0.s8 %v680
          %v682 = vperm.slane %v678, %v681
          %v683 = vrot.slane %v666, 4
          %v684 = vsel %vm611, %v683, %v664
          %v686 = vunpack.c.l.s4 1983009808
          %v687 = vunpack.c.0.s8 %v686
          %v688 = vperm.slane %v684, %v687
          %v689 = vrot.slane %v677, 4
          %v690 = vsel %vm611, %v689, %v671
          %v691 = vrot.slane %v671, 4
          %v692 = vsel %vm611, %v677, %v691
          %v694 = vunpack.c.l.s4 1934713408
          %v695 = vunpack.c.0.s8 %v694
          %v696 = vperm.slane %v690, %v695
          %v698 = vunpack.c.l.s4 1934713408
          %v699 = vunpack.c.0.s8 %v698
          %v700 = vperm.slane %v692, %v699
          %v701 = vrot.slane %v688, 4
          %v702 = vsel %vm611, %v701, %v682
          %v703 = vrot.slane %v682, 4
          %v704 = vsel %vm611, %v688, %v703
          %v706 = vunpack.c.l.s4 1934713408
          %v707 = vunpack.c.0.s8 %v706
          %v708 = vperm.slane %v702, %v707
          %v710 = vunpack.c.l.s4 1934713408
          %v711 = vunpack.c.0.s8 %v710
          %v712 = vperm.slane %v704, %v711
          %v713 = vrot.slane %v708, 4
          %v714 = vsel %vm611, %v713, %v696
          %v715 = vrot.slane %v696, 4
          %v716 = vsel %vm611, %v708, %v715
          %v717 = vrot.slane %v712, 4
          %v718 = vsel %vm611, %v717, %v700
          %v719 = vrot.slane %v700, 4
          %v720 = vsel %vm611, %v712, %v719
          %722 = vrot.lane.b32.xlu0 %v572, 96
          %v723 = vpop.permute.xlu0 %722
          %725 = vrot.lane.b32.xlu0 %v572, 64
          %v726 = vpop.permute.xlu0 %725
          %728 = vrot.lane.b32.xlu0 %v572, 32
          %v729 = vpop.permute.xlu0 %728
          %v731 = vrot.slane %v726, 4
          %v732 = vsel %vm611, %v731, %v572
          %v733 = vrot.slane %v572, 4
          %v734 = vsel %vm611, %v726, %v733
          %v736 = vunpack.c.l.s4 1983009808
          %v737 = vunpack.c.0.s8 %v736
          %v738 = vperm.slane %v732, %v737
          %v740 = vunpack.c.l.s4 1983009808
          %v741 = vunpack.c.0.s8 %v740
          %v742 = vperm.slane %v734, %v741
          %v743 = vrot.slane %v729, 4
          %v744 = vsel %vm611, %v743, %v723
          %v745 = vrot.slane %v723, 4
          %v746 = vsel %vm611, %v729, %v745
          %v748 = vunpack.c.l.s4 1983009808
          %v749 = vunpack.c.0.s8 %v748
          %v750 = vperm.slane %v744, %v749
          %v752 = vunpack.c.l.s4 1983009808
          %v753 = vunpack.c.0.s8 %v752
          %v754 = vperm.slane %v746, %v753
          %v755 = vrot.slane %v750, 4
          %v756 = vsel %vm611, %v755, %v738
          %v757 = vrot.slane %v738, 4
          %v758 = vsel %vm611, %v750, %v757
          %v760 = vunpack.c.l.s4 1934713408
          %v761 = vunpack.c.0.s8 %v760
          %v762 = vperm.slane %v756, %v761
          %v764 = vunpack.c.l.s4 1934713408
          %v765 = vunpack.c.0.s8 %v764
          %v766 = vperm.slane %v758, %v765
          %v767 = vrot.slane %v754, 4
          %v768 = vsel %vm611, %v767, %v742
          %v769 = vrot.slane %v742, 4
          %v770 = vsel %vm611, %v754, %v769
          %v772 = vunpack.c.l.s4 1934713408
          %v773 = vunpack.c.0.s8 %v772
          %v774 = vperm.slane %v768, %v773
          %v776 = vunpack.c.l.s4 1934713408
          %v777 = vunpack.c.0.s8 %v776
          %v778 = vperm.slane %v770, %v777
          %v779 = vrot.slane %v762, 4
          %v780 = vsel %vm611, 0.0, %v779
          %v781 = vrot.slane %v766, 4
          %v782 = vsel %vm611, 0.0, %v781
          %v783 = vrot.slane %v774, 4
          %v784 = vsel %vm611, 0.0, %v783
          %v785 = vrot.slane %v778, 4
          %v786 = vsel %vm611, 0.0, %v785
          %v787 = vsel %vm611, %v781, %v762
          %v789 = vunpack.c.l.s4 1983009808
          %v790 = vunpack.c.0.s8 %v789
          %v791 = vperm.slane %v787, %v790
          %v792 = vrot.slane %v782, 4
          %v793 = vsel %vm611, %v792, %v780
          %v795 = vunpack.c.l.s4 1983009808
          %v796 = vunpack.c.0.s8 %v795
          %v797 = vperm.slane %v793, %v796
          %v798 = vsel %vm611, %v785, %v774
          %v800 = vunpack.c.l.s4 1983009808
          %v801 = vunpack.c.0.s8 %v800
          %v802 = vperm.slane %v798, %v801
          %v803 = vrot.slane %v786, 4
          %v804 = vsel %vm611, %v803, %v784
          %v806 = vunpack.c.l.s4 1983009808
          %v807 = vunpack.c.0.s8 %v806
          %v808 = vperm.slane %v804, %v807
          %v809 = vrot.slane %v797, 4
          %v810 = vsel %vm611, %v809, %v791
          %v811 = vrot.slane %v791, 4
          %v812 = vsel %vm611, %v797, %v811
          %v814 = vunpack.c.l.s4 1934713408
          %v815 = vunpack.c.0.s8 %v814
          %v816 = vperm.slane %v810, %v815
          %v818 = vunpack.c.l.s4 1934713408
          %v819 = vunpack.c.0.s8 %v818
          %v820 = vperm.slane %v812, %v819
          %v821 = vrot.slane %v808, 4
          %v822 = vsel %vm611, %v821, %v802
          %v823 = vrot.slane %v802, 4
          %v824 = vsel %vm611, %v808, %v823
          %v826 = vunpack.c.l.s4 1934713408
          %v827 = vunpack.c.0.s8 %v826
          %v828 = vperm.slane %v822, %v827
          %v830 = vunpack.c.l.s4 1934713408
          %v831 = vunpack.c.0.s8 %v830
          %v832 = vperm.slane %v824, %v831
          %v833 = vrot.slane %v828, 4
          %v834 = vsel %vm611, %v833, %v816
          %v835 = vrot.slane %v816, 4
          %v836 = vsel %vm611, %v828, %v835
          %v837 = vrot.slane %v832, 4
          %v838 = vsel %vm611, %v837, %v820
          %v839 = vrot.slane %v820, 4
          %v840 = vsel %vm611, %v832, %v839
          %842 = vrot.lane.b32.xlu0 %v595, 96
          %v843 = vpop.permute.xlu0 %842
          %845 = vrot.lane.b32.xlu0 %v595, 64
          %v846 = vpop.permute.xlu0 %845
          %848 = vrot.lane.b32.xlu0 %v595, 32
          %v849 = vpop.permute.xlu0 %848
          %v851 = vrot.slane %v846, 4
          %v852 = vsel %vm611, %v851, %v595
          %v853 = vrot.slane %v595, 4
          %v854 = vsel %vm611, %v846, %v853
          %v856 = vunpack.c.l.s4 1983009808
          %v857 = vunpack.c.0.s8 %v856
          %v858 = vperm.slane %v852, %v857
          %v860 = vunpack.c.l.s4 1983009808
          %v861 = vunpack.c.0.s8 %v860
          %v862 = vperm.slane %v854, %v861
          %v863 = vrot.slane %v849, 4
          %v864 = vsel %vm611, %v863, %v843
          %v865 = vrot.slane %v843, 4
          %v866 = vsel %vm611, %v849, %v865
          %v868 = vunpack.c.l.s4 1983009808
          %v869 = vunpack.c.0.s8 %v868
          %v870 = vperm.slane %v864, %v869
          %v872 = vunpack.c.l.s4 1983009808
          %v873 = vunpack.c.0.s8 %v872
          %v874 = vperm.slane %v866, %v873
          %v875 = vrot.slane %v870, 4
          %v876 = vsel %vm611, %v875, %v858
          %v877 = vrot.slane %v858, 4
          %v878 = vsel %vm611, %v870, %v877
          %v880 = vunpack.c.l.s4 1934713408
          %v881 = vunpack.c.0.s8 %v880
          %v882 = vperm.slane %v876, %v881
          %v884 = vunpack.c.l.s4 1934713408
          %v885 = vunpack.c.0.s8 %v884
          %v886 = vperm.slane %v878, %v885
          %v887 = vrot.slane %v874, 4
          %v888 = vsel %vm611, %v887, %v862
          %v889 = vrot.slane %v862, 4
          %v890 = vsel %vm611, %v874, %v889
          %v892 = vunpack.c.l.s4 1934713408
          %v893 = vunpack.c.0.s8 %v892
          %v894 = vperm.slane %v888, %v893
          %v896 = vunpack.c.l.s4 1934713408
          %v897 = vunpack.c.0.s8 %v896
          %v898 = vperm.slane %v890, %v897
          %v899 = vrot.slane %v882, 4
          %v900 = vsel %vm611, 0.0, %v899
          %v901 = vrot.slane %v886, 4
          %v902 = vsel %vm611, 0.0, %v901
          %v903 = vrot.slane %v894, 4
          %v904 = vsel %vm611, 0.0, %v903
          %v905 = vrot.slane %v898, 4
          %v906 = vsel %vm611, 0.0, %v905
          %v907 = vsel %vm611, %v901, %v882
          %v909 = vunpack.c.l.s4 1983009808
          %v910 = vunpack.c.0.s8 %v909
          %v911 = vperm.slane %v907, %v910
          %v912 = vrot.slane %v902, 4
          %v913 = vsel %vm611, %v912, %v900
          %v915 = vunpack.c.l.s4 1983009808
          %v916 = vunpack.c.0.s8 %v915
          %v917 = vperm.slane %v913, %v916
          %v918 = vsel %vm611, %v905, %v894
          %v920 = vunpack.c.l.s4 1983009808
          %v921 = vunpack.c.0.s8 %v920
          %v922 = vperm.slane %v918, %v921
          %v923 = vrot.slane %v906, 4
          %v924 = vsel %vm611, %v923, %v904
          %v926 = vunpack.c.l.s4 1983009808
          %v927 = vunpack.c.0.s8 %v926
          %v928 = vperm.slane %v924, %v927
          %v929 = vrot.slane %v917, 4
          %v930 = vsel %vm611, %v929, %v911
          %v931 = vrot.slane %v911, 4
          %v932 = vsel %vm611, %v917, %v931
          %v934 = vunpack.c.l.s4 1934713408
          %v935 = vunpack.c.0.s8 %v934
          %v936 = vperm.slane %v930, %v935
          %v938 = vunpack.c.l.s4 1934713408
          %v939 = vunpack.c.0.s8 %v938
          %v940 = vperm.slane %v932, %v939
          %v941 = vrot.slane %v928, 4
          %v942 = vsel %vm611, %v941, %v922
          %v943 = vrot.slane %v922, 4
          %v944 = vsel %vm611, %v928, %v943
          %v946 = vunpack.c.l.s4 1934713408
          %v947 = vunpack.c.0.s8 %v946
          %v948 = vperm.slane %v942, %v947
          %v950 = vunpack.c.l.s4 1934713408
          %v951 = vunpack.c.0.s8 %v950
          %v952 = vperm.slane %v944, %v951
          %v953 = vrot.slane %v948, 4
          %v954 = vsel %vm611, %v953, %v936
          %v955 = vrot.slane %v936, 4
          %v956 = vsel %vm611, %v948, %v955
          %v957 = vrot.slane %v952, 4
          %v958 = vsel %vm611, %v957, %v940
          %v959 = vrot.slane %v940, 4
          %v960 = vsel %vm611, %v952, %v959
          %vm961 = vcmask 261120
          %v963 = vsel %vm961, %v714, 0
          %v966 = vsel %vm961, %v834, 0
          %968 = vmatpush.xpose.msra.mxu0 0.0
          %969 = vmatpush.xpose.msra.mxu0 0.0
          %970 = vmatpush.xpose.msra.mxu0 0.0
          %971 = vmatpush.xpose.msra.mxu0 0.0
          %972 = vmatpush.xpose.msra.mxu0 0.0
          %973 = vmatpush.xpose.msra.mxu0 0.0
          %974 = vmatpush.xpose.msra.mxu0 0.0
          %975 = vmatpush.xpose.msra.mxu0 0.0
          %976 = vmatpush.xpose.msra.mxu0 0.0
          %977 = vmatpush.xpose.msra.mxu0 0.0
          %978 = vmatpush.xpose.msra.mxu0 0.0
          %979 = vmatpush.xpose.msra.mxu0 0.0
          %980 = vmatpush.xpose.msra.mxu0 0.0
          %981 = vmatpush.xpose.msra.mxu0 0.0
          %982 = vmatpush.xpose.msra.mxu0 0.0
          %983 = vmatpush.xpose.msra.mxu0 %v966
          %984 = vmatmul.f32.gmra.mxu0 %v963
          %v985 = vpop.f32.mrf.mxu0
          %v986 = vadd.f32 0.0, %v985
          %987 = vdwg.mxu0
          %v989 = vsel %vm961, %v716, 0
          %v992 = vsel %vm961, %v836, 0
          %994 = vmatpush.xpose.msra.mxu0 0.0
          %995 = vmatpush.xpose.msra.mxu0 0.0
          %996 = vmatpush.xpose.msra.mxu0 0.0
          %997 = vmatpush.xpose.msra.mxu0 0.0
          %998 = vmatpush.xpose.msra.mxu0 0.0
          %999 = vmatpush.xpose.msra.mxu0 0.0
          %1000 = vmatpush.xpose.msra.mxu0 0.0
          %1001 = vmatpush.xpose.msra.mxu0 0.0
          %1002 = vmatpush.xpose.msra.mxu0 0.0
          %1003 = vmatpush.xpose.msra.mxu0 0.0
          %1004 = vmatpush.xpose.msra.mxu0 0.0
          %1005 = vmatpush.xpose.msra.mxu0 0.0
          %1006 = vmatpush.xpose.msra.mxu0 0.0
          %1007 = vmatpush.xpose.msra.mxu0 0.0
          %1008 = vmatpush.xpose.msra.mxu0 0.0
          %1009 = vmatpush.xpose.msra.mxu0 %v992
          %1010 = vmatmul.f32.gmra.mxu0 %v989
          %v1011 = vpop.f32.mrf.mxu0
          %v1012 = vadd.f32 0.0, %v1011
          %1013 = vdwg.mxu0
          %v1015 = vsel %vm961, %v718, 0
          %v1018 = vsel %vm961, %v838, 0
          %1020 = vmatpush.xpose.msra.mxu0 0.0
          %1021 = vmatpush.xpose.msra.mxu0 0.0
          %1022 = vmatpush.xpose.msra.mxu0 0.0
          %1023 = vmatpush.xpose.msra.mxu0 0.0
          %1024 = vmatpush.xpose.msra.mxu0 0.0
          %1025 = vmatpush.xpose.msra.mxu0 0.0
          %1026 = vmatpush.xpose.msra.mxu0 0.0
          %1027 = vmatpush.xpose.msra.mxu0 0.0
          %1028 = vmatpush.xpose.msra.mxu0 0.0
          %1029 = vmatpush.xpose.msra.mxu0 0.0
          %1030 = vmatpush.xpose.msra.mxu0 0.0
          %1031 = vmatpush.xpose.msra.mxu0 0.0
          %1032 = vmatpush.xpose.msra.mxu0 0.0
          %1033 = vmatpush.xpose.msra.mxu0 0.0
          %1034 = vmatpush.xpose.msra.mxu0 0.0
          %1035 = vmatpush.xpose.msra.mxu0 %v1018
          %1036 = vmatmul.f32.gmra.mxu0 %v1015
          %v1037 = vpop.f32.mrf.mxu0
          %v1038 = vadd.f32 0.0, %v1037
          %1039 = vdwg.mxu0
          %v1041 = vsel %vm961, %v720, 0
          %v1044 = vsel %vm961, %v840, 0
          %1046 = vmatpush.xpose.msra.mxu0 0.0
          %1047 = vmatpush.xpose.msra.mxu0 0.0
          %1048 = vmatpush.xpose.msra.mxu0 0.0
          %1049 = vmatpush.xpose.msra.mxu0 0.0
          %1050 = vmatpush.xpose.msra.mxu0 0.0
          %1051 = vmatpush.xpose.msra.mxu0 0.0
          %1052 = vmatpush.xpose.msra.mxu0 0.0
          %1053 = vmatpush.xpose.msra.mxu0 0.0
          %1054 = vmatpush.xpose.msra.mxu0 0.0
          %1055 = vmatpush.xpose.msra.mxu0 0.0
          %1056 = vmatpush.xpose.msra.mxu0 0.0
          %1057 = vmatpush.xpose.msra.mxu0 0.0
          %1058 = vmatpush.xpose.msra.mxu0 0.0
          %1059 = vmatpush.xpose.msra.mxu0 0.0
          %1060 = vmatpush.xpose.msra.mxu0 0.0
          %1061 = vmatpush.xpose.msra.mxu0 %v1044
          %1062 = vmatmul.f32.gmra.mxu0 %v1041
          %v1063 = vpop.f32.mrf.mxu0
          %v1064 = vadd.f32 0.0, %v1063
          %1065 = vdwg.mxu0
          %v1066 = vmul.f32 %v986, 0.17677669
          %v1067 = vmul.f32 %v1012, 0.17677669
          %v1068 = vmul.f32 %v1038, 0.17677669
          %v1069 = vmul.f32 %v1064, 0.17677669
          %vm1070 = vcmask 64512
          %v1071 = vsel %vm1070, %v1066, -inf
          %1072 = vmax.xlane.f32.xlu0 %v1071
          %v1073 = vpop.xlane.xlu0 %1072
          %v1074 = vsel %vm1070, %v1067, -inf
          %1075 = vmax.xlane.f32.xlu0 %v1074
          %v1076 = vpop.xlane.xlu0 %1075
          %v1077 = vsel %vm1070, %v1068, -inf
          %1078 = vmax.xlane.f32.xlu0 %v1077
          %v1079 = vpop.xlane.xlu0 %1078
          %v1080 = vsel %vm1070, %v1069, -inf
          %1081 = vmax.xlane.f32.xlu0 %v1080
          %v1082 = vpop.xlane.xlu0 %1081
          %v1083 = vsub.f32 %v1066, %v1073
          %v1084 = vsub.f32 %v1067, %v1076
          %v1085 = vsub.f32 %v1068, %v1079
          %v1086 = vsub.f32 %v1069, %v1082
          %v1087 = vmul.f32 %v1083, 1.442695
          %v1088 = vpow.pop %v1087
          %v1089 = vmul.f32 %v1084, 1.442695
          %v1090 = vpow.pop %v1089
          %v1091 = vmul.f32 %v1085, 1.442695
          %v1092 = vpow.pop %v1091
          %v1093 = vmul.f32 %v1086, 1.442695
          %v1094 = vpow.pop %v1093
          %v1095 = vsel %vm1070, %v1088, 0.0
          %1096 = vadd.xlane.f32.xlu0 %v1095
          %v1097 = vpop.xlane.xlu0 %1096
          %v1098 = vsel %vm1070, %v1090, 0.0
          %1099 = vadd.xlane.f32.xlu0 %v1098
          %v1100 = vpop.xlane.xlu0 %1099
          %v1101 = vsel %vm1070, %v1092, 0.0
          %1102 = vadd.xlane.f32.xlu0 %v1101
          %v1103 = vpop.xlane.xlu0 %1102
          %v1104 = vsel %vm1070, %v1094, 0.0
          %1105 = vadd.xlane.f32.xlu0 %v1104
          %v1106 = vpop.xlane.xlu0 %1105
          %v1107 = vrcp.pop %v1097
          %v1108 = vrcp.pop %v1100
          %v1109 = vrcp.pop %v1103
          %v1110 = vrcp.pop %v1106
          %v1111 = vmul.f32 %v1088, %v1107
          %v1112 = vmul.f32 %v1090, %v1108
          %v1113 = vmul.f32 %v1092, %v1109
          %v1114 = vmul.f32 %v1094, %v1110
          %v1116 = vsel %vm1070, %v1111, 0
          %1118 = vmatpush.msra.mxu0 0.0
          %1119 = vmatpush.msra.mxu0 0.0
          %1120 = vmatpush.msra.mxu0 0.0
          %1121 = vmatpush.msra.mxu0 0.0
          %1122 = vmatpush.msra.mxu0 0.0
          %1123 = vmatpush.msra.mxu0 0.0
          %1124 = vmatpush.msra.mxu0 0.0
          %1125 = vmatpush.msra.mxu0 0.0
          %1126 = vmatpush.msra.mxu0 0.0
          %1127 = vmatpush.msra.mxu0 0.0
          %1128 = vmatpush.msra.mxu0 0.0
          %1129 = vmatpush.msra.mxu0 0.0
          %1130 = vmatpush.msra.mxu0 0.0
          %1131 = vmatpush.msra.mxu0 0.0
          %1132 = vmatpush.msra.mxu0 0.0
          %1133 = vmatpush.msra.mxu0 %v954
          %1134 = vmatmul.f32.gmra.mxu0 %v1116
          %v1135 = vpop.f32.mrf.mxu0
          %v1136 = vadd.f32 0.0, %v1135
          %1137 = vdwg.mxu0
          %v1139 = vsel %vm1070, %v1112, 0
          %1141 = vmatpush.msra.mxu0 0.0
          %1142 = vmatpush.msra.mxu0 0.0
          %1143 = vmatpush.msra.mxu0 0.0
          %1144 = vmatpush.msra.mxu0 0.0
          %1145 = vmatpush.msra.mxu0 0.0
          %1146 = vmatpush.msra.mxu0 0.0
          %1147 = vmatpush.msra.mxu0 0.0
          %1148 = vmatpush.msra.mxu0 0.0
          %1149 = vmatpush.msra.mxu0 0.0
          %1150 = vmatpush.msra.mxu0 0.0
          %1151 = vmatpush.msra.mxu0 0.0
          %1152 = vmatpush.msra.mxu0 0.0
          %1153 = vmatpush.msra.mxu0 0.0
          %1154 = vmatpush.msra.mxu0 0.0
          %1155 = vmatpush.msra.mxu0 0.0
          %1156 = vmatpush.msra.mxu0 %v956
          %1157 = vmatmul.f32.gmra.mxu0 %v1139
          %v1158 = vpop.f32.mrf.mxu0
          %v1159 = vadd.f32 0.0, %v1158
          %1160 = vdwg.mxu0
          %v1162 = vsel %vm1070, %v1113, 0
          %1164 = vmatpush.msra.mxu0 0.0
          %1165 = vmatpush.msra.mxu0 0.0
          %1166 = vmatpush.msra.mxu0 0.0
          %1167 = vmatpush.msra.mxu0 0.0
          %1168 = vmatpush.msra.mxu0 0.0
          %1169 = vmatpush.msra.mxu0 0.0
          %1170 = vmatpush.msra.mxu0 0.0
          %1171 = vmatpush.msra.mxu0 0.0
          %1172 = vmatpush.msra.mxu0 0.0
          %1173 = vmatpush.msra.mxu0 0.0
          %1174 = vmatpush.msra.mxu0 0.0
          %1175 = vmatpush.msra.mxu0 0.0
          %1176 = vmatpush.msra.mxu0 0.0
          %1177 = vmatpush.msra.mxu0 0.0
          %1178 = vmatpush.msra.mxu0 0.0
          %1179 = vmatpush.msra.mxu0 %v958
          %1180 = vmatmul.f32.gmra.mxu0 %v1162
          %v1181 = vpop.f32.mrf.mxu0
          %v1182 = vadd.f32 0.0, %v1181
          %1183 = vdwg.mxu0
          %v1185 = vsel %vm1070, %v1114, 0
          %1187 = vmatpush.msra.mxu0 0.0
          %1188 = vmatpush.msra.mxu0 0.0
          %1189 = vmatpush.msra.mxu0 0.0
          %1190 = vmatpush.msra.mxu0 0.0
          %1191 = vmatpush.msra.mxu0 0.0
          %1192 = vmatpush.msra.mxu0 0.0
          %1193 = vmatpush.msra.mxu0 0.0
          %1194 = vmatpush.msra.mxu0 0.0
          %1195 = vmatpush.msra.mxu0 0.0
          %1196 = vmatpush.msra.mxu0 0.0
          %1197 = vmatpush.msra.mxu0 0.0
          %1198 = vmatpush.msra.mxu0 0.0
          %1199 = vmatpush.msra.mxu0 0.0
          %1200 = vmatpush.msra.mxu0 0.0
          %1201 = vmatpush.msra.mxu0 0.0
          %1202 = vmatpush.msra.mxu0 %v960
          %1203 = vmatmul.f32.gmra.mxu0 %v1185
          %v1204 = vpop.f32.mrf.mxu0
          %v1205 = vadd.f32 0.0, %v1204
          %1206 = vdwg.mxu0
          %v1207 = vrot.slane %v1182, 4
          %v1208 = vsel %vm611, %v1207, %v1136
          %v1209 = vrot.slane %v1136, 4
          %v1210 = vsel %vm611, %v1182, %v1209
          %v1212 = vunpack.c.l.s4 1983009808
          %v1213 = vunpack.c.0.s8 %v1212
          %v1214 = vperm.slane %v1208, %v1213
          %v1216 = vunpack.c.l.s4 1983009808
          %v1217 = vunpack.c.0.s8 %v1216
          %v1218 = vperm.slane %v1210, %v1217
          %v1219 = vrot.slane %v1205, 4
          %v1220 = vsel %vm611, %v1219, %v1159
          %v1221 = vrot.slane %v1159, 4
          %v1222 = vsel %vm611, %v1205, %v1221
          %v1224 = vunpack.c.l.s4 1983009808
          %v1225 = vunpack.c.0.s8 %v1224
          %v1226 = vperm.slane %v1220, %v1225
          %v1228 = vunpack.c.l.s4 1983009808
          %v1229 = vunpack.c.0.s8 %v1228
          %v1230 = vperm.slane %v1222, %v1229
          %v1231 = vrot.slane %v1226, 4
          %v1232 = vsel %vm611, %v1231, %v1214
          %v1233 = vrot.slane %v1214, 4
          %v1234 = vsel %vm611, %v1226, %v1233
          %v1236 = vunpack.c.l.s4 1934713408
          %v1237 = vunpack.c.0.s8 %v1236
          %v1238 = vperm.slane %v1232, %v1237
          %v1240 = vunpack.c.l.s4 1934713408
          %v1241 = vunpack.c.0.s8 %v1240
          %v1242 = vperm.slane %v1234, %v1241
          %v1243 = vrot.slane %v1230, 4
          %v1244 = vsel %vm611, %v1243, %v1218
          %v1245 = vrot.slane %v1218, 4
          %v1246 = vsel %vm611, %v1230, %v1245
          %v1248 = vunpack.c.l.s4 1934713408
          %v1249 = vunpack.c.0.s8 %v1248
          %v1250 = vperm.slane %v1244, %v1249
          %v1252 = vunpack.c.l.s4 1934713408
          %v1253 = vunpack.c.0.s8 %v1252
          %v1254 = vperm.slane %v1246, %v1253
          %v1255 = vrot.slane %v1238, 4
          %v1256 = vsel %vm611, 0.0, %v1255
          %v1257 = vrot.slane %v1242, 4
          %v1258 = vsel %vm611, 0.0, %v1257
          %v1259 = vrot.slane %v1250, 4
          %v1260 = vsel %vm611, 0.0, %v1259
          %v1261 = vrot.slane %v1254, 4
          %v1262 = vsel %vm611, 0.0, %v1261
          %v1263 = vsel %vm611, %v1257, %v1238
          %v1265 = vunpack.c.l.s4 1983009808
          %v1266 = vunpack.c.0.s8 %v1265
          %v1267 = vperm.slane %v1263, %v1266
          %v1268 = vrot.slane %v1258, 4
          %v1269 = vsel %vm611, %v1268, %v1256
          %v1271 = vunpack.c.l.s4 1983009808
          %v1272 = vunpack.c.0.s8 %v1271
          %v1273 = vperm.slane %v1269, %v1272
          %v1274 = vsel %vm611, %v1261, %v1250
          %v1276 = vunpack.c.l.s4 1983009808
          %v1277 = vunpack.c.0.s8 %v1276
          %v1278 = vperm.slane %v1274, %v1277
          %v1279 = vrot.slane %v1262, 4
          %v1280 = vsel %vm611, %v1279, %v1260
          %v1282 = vunpack.c.l.s4 1983009808
          %v1283 = vunpack.c.0.s8 %v1282
          %v1284 = vperm.slane %v1280, %v1283
          %v1285 = vrot.slane %v1273, 4
          %v1286 = vsel %vm611, %v1285, %v1267
          %v1287 = vrot.slane %v1267, 4
          %v1288 = vsel %vm611, %v1273, %v1287
          %v1290 = vunpack.c.l.s4 1934713408
          %v1291 = vunpack.c.0.s8 %v1290
          %v1292 = vperm.slane %v1286, %v1291
          %v1294 = vunpack.c.l.s4 1934713408
          %v1295 = vunpack.c.0.s8 %v1294
          %v1296 = vperm.slane %v1288, %v1295
          %v1297 = vrot.slane %v1284, 4
          %v1298 = vsel %vm611, %v1297, %v1278
          %v1299 = vrot.slane %v1278, 4
          %v1300 = vsel %vm611, %v1284, %v1299
          %v1302 = vunpack.c.l.s4 1934713408
          %v1303 = vunpack.c.0.s8 %v1302
          %v1304 = vperm.slane %v1298, %v1303
          %v1306 = vunpack.c.l.s4 1934713408
          %v1307 = vunpack.c.0.s8 %v1306
          %v1308 = vperm.slane %v1300, %v1307
          %v1309 = vrot.slane %v1304, 4
          %v1310 = vsel %vm611, %v1309, %v1292
          %v1311 = vrot.slane %v1292, 4
          %v1312 = vsel %vm611, %v1304, %v1311
          %v1313 = vrot.slane %v1308, 4
          %v1314 = vsel %vm611, %v1313, %v1296
          %v1315 = vrot.slane %v1296, 4
          %v1316 = vsel %vm611, %v1308, %v1315
          %1318 = vrot.lane.b32.xlu0 %v1312, 32
          %v1319 = vpop.permute.xlu0 %1318
          %1322 = vrot.lane.b32.xlu0 %v1314, 64
          %v1323 = vpop.permute.xlu0 %1322
          %1326 = vrot.lane.b32.xlu0 %v1316, 96
          %v1327 = vpop.permute.xlu0 %1326
          %v1329 = vsel %vm961, %v1310, %v1319
          %vm1330 = vcmask 523264
          %v1331 = vsel %vm1330, %v1329, %v1323
          %vm1332 = vcmask 785408
          %v1333 = vsel %vm1332, %v1331, %v1327
          %1335 = vrot.lane.b32.xlu0 %v552, 96
          %v1336 = vpop.permute.xlu0 %1335
          %1338 = vrot.lane.b32.xlu0 %v552, 64
          %v1339 = vpop.permute.xlu0 %1338
          %1341 = vrot.lane.b32.xlu0 %v552, 32
          %v1342 = vpop.permute.xlu0 %1341
          %v1344 = vrot.slane %v1339, 4
          %v1345 = vsel %vm611, %v1344, %v552
          %v1346 = vrot.slane %v552, 4
          %v1347 = vsel %vm611, %v1339, %v1346
          %v1349 = vunpack.c.l.s4 1983009808
          %v1350 = vunpack.c.0.s8 %v1349
          %v1351 = vperm.slane %v1345, %v1350
          %v1353 = vunpack.c.l.s4 1983009808
          %v1354 = vunpack.c.0.s8 %v1353
          %v1355 = vperm.slane %v1347, %v1354
          %v1356 = vrot.slane %v1342, 4
          %v1357 = vsel %vm611, %v1356, %v1336
          %v1358 = vrot.slane %v1336, 4
          %v1359 = vsel %vm611, %v1342, %v1358
          %v1361 = vunpack.c.l.s4 1983009808
          %v1362 = vunpack.c.0.s8 %v1361
          %v1363 = vperm.slane %v1357, %v1362
          %v1365 = vunpack.c.l.s4 1983009808
          %v1366 = vunpack.c.0.s8 %v1365
          %v1367 = vperm.slane %v1359, %v1366
          %v1368 = vrot.slane %v1363, 4
          %v1369 = vsel %vm611, %v1368, %v1351
          %v1370 = vrot.slane %v1351, 4
          %v1371 = vsel %vm611, %v1363, %v1370
          %v1373 = vunpack.c.l.s4 1934713408
          %v1374 = vunpack.c.0.s8 %v1373
          %v1375 = vperm.slane %v1369, %v1374
          %v1377 = vunpack.c.l.s4 1934713408
          %v1378 = vunpack.c.0.s8 %v1377
          %v1379 = vperm.slane %v1371, %v1378
          %v1380 = vrot.slane %v1367, 4
          %v1381 = vsel %vm611, %v1380, %v1355
          %v1382 = vrot.slane %v1355, 4
          %v1383 = vsel %vm611, %v1367, %v1382
          %v1385 = vunpack.c.l.s4 1934713408
          %v1386 = vunpack.c.0.s8 %v1385
          %v1387 = vperm.slane %v1381, %v1386
          %v1389 = vunpack.c.l.s4 1934713408
          %v1390 = vunpack.c.0.s8 %v1389
          %v1391 = vperm.slane %v1383, %v1390
          %v1392 = vrot.slane %v1375, 4
          %v1393 = vsel %vm611, 0.0, %v1392
          %v1394 = vrot.slane %v1379, 4
          %v1395 = vsel %vm611, 0.0, %v1394
          %v1396 = vrot.slane %v1387, 4
          %v1397 = vsel %vm611, 0.0, %v1396
          %v1398 = vrot.slane %v1391, 4
          %v1399 = vsel %vm611, 0.0, %v1398
          %v1400 = vsel %vm611, %v1394, %v1375
          %v1402 = vunpack.c.l.s4 1983009808
          %v1403 = vunpack.c.0.s8 %v1402
          %v1404 = vperm.slane %v1400, %v1403
          %v1405 = vrot.slane %v1395, 4
          %v1406 = vsel %vm611, %v1405, %v1393
          %v1408 = vunpack.c.l.s4 1983009808
          %v1409 = vunpack.c.0.s8 %v1408
          %v1410 = vperm.slane %v1406, %v1409
          %v1411 = vsel %vm611, %v1398, %v1387
          %v1413 = vunpack.c.l.s4 1983009808
          %v1414 = vunpack.c.0.s8 %v1413
          %v1415 = vperm.slane %v1411, %v1414
          %v1416 = vrot.slane %v1399, 4
          %v1417 = vsel %vm611, %v1416, %v1397
          %v1419 = vunpack.c.l.s4 1983009808
          %v1420 = vunpack.c.0.s8 %v1419
          %v1421 = vperm.slane %v1417, %v1420
          %v1422 = vrot.slane %v1410, 4
          %v1423 = vsel %vm611, %v1422, %v1404
          %v1424 = vrot.slane %v1404, 4
          %v1425 = vsel %vm611, %v1410, %v1424
          %v1427 = vunpack.c.l.s4 1934713408
          %v1428 = vunpack.c.0.s8 %v1427
          %v1429 = vperm.slane %v1423, %v1428
          %v1431 = vunpack.c.l.s4 1934713408
          %v1432 = vunpack.c.0.s8 %v1431
          %v1433 = vperm.slane %v1425, %v1432
          %v1434 = vrot.slane %v1421, 4
          %v1435 = vsel %vm611, %v1434, %v1415
          %v1436 = vrot.slane %v1415, 4
          %v1437 = vsel %vm611, %v1421, %v1436
          %v1439 = vunpack.c.l.s4 1934713408
          %v1440 = vunpack.c.0.s8 %v1439
          %v1441 = vperm.slane %v1435, %v1440
          %v1443 = vunpack.c.l.s4 1934713408
          %v1444 = vunpack.c.0.s8 %v1443
          %v1445 = vperm.slane %v1437, %v1444
          %v1446 = vrot.slane %v1441, 4
          %v1447 = vsel %vm611, %v1446, %v1429
          %v1448 = vrot.slane %v1429, 4
          %v1449 = vsel %vm611, %v1441, %v1448
          %v1450 = vrot.slane %v1445, 4
          %v1451 = vsel %vm611, %v1450, %v1433
          %v1452 = vrot.slane %v1433, 4
          %v1453 = vsel %vm611, %v1445, %v1452
          %1455 = vrot.lane.b32.xlu0 %v575, 96
          %v1456 = vpop.permute.xlu0 %1455
          %1458 = vrot.lane.b32.xlu0 %v575, 64
          %v1459 = vpop.permute.xlu0 %1458
          %1461 = vrot.lane.b32.xlu0 %v575, 32
          %v1462 = vpop.permute.xlu0 %1461
          %v1464 = vrot.slane %v1459, 4
          %v1465 = vsel %vm611, %v1464, %v575
          %v1466 = vrot.slane %v575, 4
          %v1467 = vsel %vm611, %v1459, %v1466
          %v1469 = vunpack.c.l.s4 1983009808
          %v1470 = vunpack.c.0.s8 %v1469
          %v1471 = vperm.slane %v1465, %v1470
          %v1473 = vunpack.c.l.s4 1983009808
          %v1474 = vunpack.c.0.s8 %v1473
          %v1475 = vperm.slane %v1467, %v1474
          %v1476 = vrot.slane %v1462, 4
          %v1477 = vsel %vm611, %v1476, %v1456
          %v1478 = vrot.slane %v1456, 4
          %v1479 = vsel %vm611, %v1462, %v1478
          %v1481 = vunpack.c.l.s4 1983009808
          %v1482 = vunpack.c.0.s8 %v1481
          %v1483 = vperm.slane %v1477, %v1482
          %v1485 = vunpack.c.l.s4 1983009808
          %v1486 = vunpack.c.0.s8 %v1485
          %v1487 = vperm.slane %v1479, %v1486
          %v1488 = vrot.slane %v1483, 4
          %v1489 = vsel %vm611, %v1488, %v1471
          %v1490 = vrot.slane %v1471, 4
          %v1491 = vsel %vm611, %v1483, %v1490
          %v1493 = vunpack.c.l.s4 1934713408
          %v1494 = vunpack.c.0.s8 %v1493
          %v1495 = vperm.slane %v1489, %v1494
          %v1497 = vunpack.c.l.s4 1934713408
          %v1498 = vunpack.c.0.s8 %v1497
          %v1499 = vperm.slane %v1491, %v1498
          %v1500 = vrot.slane %v1487, 4
          %v1501 = vsel %vm611, %v1500, %v1475
          %v1502 = vrot.slane %v1475, 4
          %v1503 = vsel %vm611, %v1487, %v1502
          %v1505 = vunpack.c.l.s4 1934713408
          %v1506 = vunpack.c.0.s8 %v1505
          %v1507 = vperm.slane %v1501, %v1506
          %v1509 = vunpack.c.l.s4 1934713408
          %v1510 = vunpack.c.0.s8 %v1509
          %v1511 = vperm.slane %v1503, %v1510
          %v1512 = vrot.slane %v1495, 4
          %v1513 = vsel %vm611, 0.0, %v1512
          %v1514 = vrot.slane %v1499, 4
          %v1515 = vsel %vm611, 0.0, %v1514
          %v1516 = vrot.slane %v1507, 4
          %v1517 = vsel %vm611, 0.0, %v1516
          %v1518 = vrot.slane %v1511, 4
          %v1519 = vsel %vm611, 0.0, %v1518
          %v1520 = vsel %vm611, %v1514, %v1495
          %v1522 = vunpack.c.l.s4 1983009808
          %v1523 = vunpack.c.0.s8 %v1522
          %v1524 = vperm.slane %v1520, %v1523
          %v1525 = vrot.slane %v1515, 4
          %v1526 = vsel %vm611, %v1525, %v1513
          %v1528 = vunpack.c.l.s4 1983009808
          %v1529 = vunpack.c.0.s8 %v1528
          %v1530 = vperm.slane %v1526, %v1529
          %v1531 = vsel %vm611, %v1518, %v1507
          %v1533 = vunpack.c.l.s4 1983009808
          %v1534 = vunpack.c.0.s8 %v1533
          %v1535 = vperm.slane %v1531, %v1534
          %v1536 = vrot.slane %v1519, 4
          %v1537 = vsel %vm611, %v1536, %v1517
          %v1539 = vunpack.c.l.s4 1983009808
          %v1540 = vunpack.c.0.s8 %v1539
          %v1541 = vperm.slane %v1537, %v1540
          %v1542 = vrot.slane %v1530, 4
          %v1543 = vsel %vm611, %v1542, %v1524
          %v1544 = vrot.slane %v1524, 4
          %v1545 = vsel %vm611, %v1530, %v1544
          %v1547 = vunpack.c.l.s4 1934713408
          %v1548 = vunpack.c.0.s8 %v1547
          %v1549 = vperm.slane %v1543, %v1548
          %v1551 = vunpack.c.l.s4 1934713408
          %v1552 = vunpack.c.0.s8 %v1551
          %v1553 = vperm.slane %v1545, %v1552
          %v1554 = vrot.slane %v1541, 4
          %v1555 = vsel %vm611, %v1554, %v1535
          %v1556 = vrot.slane %v1535, 4
          %v1557 = vsel %vm611, %v1541, %v1556
          %v1559 = vunpack.c.l.s4 1934713408
          %v1560 = vunpack.c.0.s8 %v1559
          %v1561 = vperm.slane %v1555, %v1560
          %v1563 = vunpack.c.l.s4 1934713408
          %v1564 = vunpack.c.0.s8 %v1563
          %v1565 = vperm.slane %v1557, %v1564
          %v1566 = vrot.slane %v1561, 4
          %v1567 = vsel %vm611, %v1566, %v1549
          %v1568 = vrot.slane %v1549, 4
          %v1569 = vsel %vm611, %v1561, %v1568
          %v1570 = vrot.slane %v1565, 4
          %v1571 = vsel %vm611, %v1570, %v1553
          %v1572 = vrot.slane %v1553, 4
          %v1573 = vsel %vm611, %v1565, %v1572
          %1575 = vrot.lane.b32.xlu0 %v598, 96
          %v1576 = vpop.permute.xlu0 %1575
          %1578 = vrot.lane.b32.xlu0 %v598, 64
          %v1579 = vpop.permute.xlu0 %1578
          %1581 = vrot.lane.b32.xlu0 %v598, 32
          %v1582 = vpop.permute.xlu0 %1581
          %v1584 = vrot.slane %v1579, 4
          %v1585 = vsel %vm611, %v1584, %v598
          %v1586 = vrot.slane %v598, 4
          %v1587 = vsel %vm611, %v1579, %v1586
          %v1589 = vunpack.c.l.s4 1983009808
          %v1590 = vunpack.c.0.s8 %v1589
          %v1591 = vperm.slane %v1585, %v1590
          %v1593 = vunpack.c.l.s4 1983009808
          %v1594 = vunpack.c.0.s8 %v1593
          %v1595 = vperm.slane %v1587, %v1594
          %v1596 = vrot.slane %v1582, 4
          %v1597 = vsel %vm611, %v1596, %v1576
          %v1598 = vrot.slane %v1576, 4
          %v1599 = vsel %vm611, %v1582, %v1598
          %v1601 = vunpack.c.l.s4 1983009808
          %v1602 = vunpack.c.0.s8 %v1601
          %v1603 = vperm.slane %v1597, %v1602
          %v1605 = vunpack.c.l.s4 1983009808
          %v1606 = vunpack.c.0.s8 %v1605
          %v1607 = vperm.slane %v1599, %v1606
          %v1608 = vrot.slane %v1603, 4
          %v1609 = vsel %vm611, %v1608, %v1591
          %v1610 = vrot.slane %v1591, 4
          %v1611 = vsel %vm611, %v1603, %v1610
          %v1613 = vunpack.c.l.s4 1934713408
          %v1614 = vunpack.c.0.s8 %v1613
          %v1615 = vperm.slane %v1609, %v1614
          %v1617 = vunpack.c.l.s4 1934713408
          %v1618 = vunpack.c.0.s8 %v1617
          %v1619 = vperm.slane %v1611, %v1618
          %v1620 = vrot.slane %v1607, 4
          %v1621 = vsel %vm611, %v1620, %v1595
          %v1622 = vrot.slane %v1595, 4
          %v1623 = vsel %vm611, %v1607, %v1622
          %v1625 = vunpack.c.l.s4 1934713408
          %v1626 = vunpack.c.0.s8 %v1625
          %v1627 = vperm.slane %v1621, %v1626
          %v1629 = vunpack.c.l.s4 1934713408
          %v1630 = vunpack.c.0.s8 %v1629
          %v1631 = vperm.slane %v1623, %v1630
          %v1632 = vrot.slane %v1615, 4
          %v1633 = vsel %vm611, 0.0, %v1632
          %v1634 = vrot.slane %v1619, 4
          %v1635 = vsel %vm611, 0.0, %v1634
          %v1636 = vrot.slane %v1627, 4
          %v1637 = vsel %vm611, 0.0, %v1636
          %v1638 = vrot.slane %v1631, 4
          %v1639 = vsel %vm611, 0.0, %v1638
          %v1640 = vsel %vm611, %v1634, %v1615
          %v1642 = vunpack.c.l.s4 1983009808
          %v1643 = vunpack.c.0.s8 %v1642
          %v1644 = vperm.slane %v1640, %v1643
          %v1645 = vrot.slane %v1635, 4
          %v1646 = vsel %vm611, %v1645, %v1633
          %v1648 = vunpack.c.l.s4 1983009808
          %v1649 = vunpack.c.0.s8 %v1648
          %v1650 = vperm.slane %v1646, %v1649
          %v1651 = vsel %vm611, %v1638, %v1627
          %v1653 = vunpack.c.l.s4 1983009808
          %v1654 = vunpack.c.0.s8 %v1653
          %v1655 = vperm.slane %v1651, %v1654
          %v1656 = vrot.slane %v1639, 4
          %v1657 = vsel %vm611, %v1656, %v1637
          %v1659 = vunpack.c.l.s4 1983009808
          %v1660 = vunpack.c.0.s8 %v1659
          %v1661 = vperm.slane %v1657, %v1660
          %v1662 = vrot.slane %v1650, 4
          %v1663 = vsel %vm611, %v1662, %v1644
          %v1664 = vrot.slane %v1644, 4
          %v1665 = vsel %vm611, %v1650, %v1664
          %v1667 = vunpack.c.l.s4 1934713408
          %v1668 = vunpack.c.0.s8 %v1667
          %v1669 = vperm.slane %v1663, %v1668
          %v1671 = vunpack.c.l.s4 1934713408
          %v1672 = vunpack.c.0.s8 %v1671
          %v1673 = vperm.slane %v1665, %v1672
          %v1674 = vrot.slane %v1661, 4
          %v1675 = vsel %vm611, %v1674, %v1655
          %v1676 = vrot.slane %v1655, 4
          %v1677 = vsel %vm611, %v1661, %v1676
          %v1679 = vunpack.c.l.s4 1934713408
          %v1680 = vunpack.c.0.s8 %v1679
          %v1681 = vperm.slane %v1675, %v1680
          %v1683 = vunpack.c.l.s4 1934713408
          %v1684 = vunpack.c.0.s8 %v1683
          %v1685 = vperm.slane %v1677, %v1684
          %v1686 = vrot.slane %v1681, 4
          %v1687 = vsel %vm611, %v1686, %v1669
          %v1688 = vrot.slane %v1669, 4
          %v1689 = vsel %vm611, %v1681, %v1688
          %v1690 = vrot.slane %v1685, 4
          %v1691 = vsel %vm611, %v1690, %v1673
          %v1692 = vrot.slane %v1673, 4
          %v1693 = vsel %vm611, %v1685, %v1692
          %v1695 = vsel %vm961, %v1447, 0
          %v1698 = vsel %vm961, %v1567, 0
          %1700 = vmatpush.xpose.msra.mxu0 0.0
          %1701 = vmatpush.xpose.msra.mxu0 0.0
          %1702 = vmatpush.xpose.msra.mxu0 0.0
          %1703 = vmatpush.xpose.msra.mxu0 0.0
          %1704 = vmatpush.xpose.msra.mxu0 0.0
          %1705 = vmatpush.xpose.msra.mxu0 0.0
          %1706 = vmatpush.xpose.msra.mxu0 0.0
          %1707 = vmatpush.xpose.msra.mxu0 0.0
          %1708 = vmatpush.xpose.msra.mxu0 0.0
          %1709 = vmatpush.xpose.msra.mxu0 0.0
          %1710 = vmatpush.xpose.msra.mxu0 0.0
          %1711 = vmatpush.xpose.msra.mxu0 0.0
          %1712 = vmatpush.xpose.msra.mxu0 0.0
          %1713 = vmatpush.xpose.msra.mxu0 0.0
          %1714 = vmatpush.xpose.msra.mxu0 0.0
          %1715 = vmatpush.xpose.msra.mxu0 %v1698
          %1716 = vmatmul.f32.gmra.mxu0 %v1695
          %v1717 = vpop.f32.mrf.mxu0
          %v1718 = vadd.f32 0.0, %v1717
          %1719 = vdwg.mxu0
          %v1721 = vsel %vm961, %v1449, 0
          %v1724 = vsel %vm961, %v1569, 0
          %1726 = vmatpush.xpose.msra.mxu0 0.0
          %1727 = vmatpush.xpose.msra.mxu0 0.0
          %1728 = vmatpush.xpose.msra.mxu0 0.0
          %1729 = vmatpush.xpose.msra.mxu0 0.0
          %1730 = vmatpush.xpose.msra.mxu0 0.0
          %1731 = vmatpush.xpose.msra.mxu0 0.0
          %1732 = vmatpush.xpose.msra.mxu0 0.0
          %1733 = vmatpush.xpose.msra.mxu0 0.0
          %1734 = vmatpush.xpose.msra.mxu0 0.0
          %1735 = vmatpush.xpose.msra.mxu0 0.0
          %1736 = vmatpush.xpose.msra.mxu0 0.0
          %1737 = vmatpush.xpose.msra.mxu0 0.0
          %1738 = vmatpush.xpose.msra.mxu0 0.0
          %1739 = vmatpush.xpose.msra.mxu0 0.0
          %1740 = vmatpush.xpose.msra.mxu0 0.0
          %1741 = vmatpush.xpose.msra.mxu0 %v1724
          %1742 = vmatmul.f32.gmra.mxu0 %v1721
          %v1743 = vpop.f32.mrf.mxu0
          %v1744 = vadd.f32 0.0, %v1743
          %1745 = vdwg.mxu0
          %v1747 = vsel %vm961, %v1451, 0
          %v1750 = vsel %vm961, %v1571, 0
          %1752 = vmatpush.xpose.msra.mxu0 0.0
          %1753 = vmatpush.xpose.msra.mxu0 0.0
          %1754 = vmatpush.xpose.msra.mxu0 0.0
          %1755 = vmatpush.xpose.msra.mxu0 0.0
          %1756 = vmatpush.xpose.msra.mxu0 0.0
          %1757 = vmatpush.xpose.msra.mxu0 0.0
          %1758 = vmatpush.xpose.msra.mxu0 0.0
          %1759 = vmatpush.xpose.msra.mxu0 0.0
          %1760 = vmatpush.xpose.msra.mxu0 0.0
          %1761 = vmatpush.xpose.msra.mxu0 0.0
          %1762 = vmatpush.xpose.msra.mxu0 0.0
          %1763 = vmatpush.xpose.msra.mxu0 0.0
          %1764 = vmatpush.xpose.msra.mxu0 0.0
          %1765 = vmatpush.xpose.msra.mxu0 0.0
          %1766 = vmatpush.xpose.msra.mxu0 0.0
          %1767 = vmatpush.xpose.msra.mxu0 %v1750
          %1768 = vmatmul.f32.gmra.mxu0 %v1747
          %v1769 = vpop.f32.mrf.mxu0
          %v1770 = vadd.f32 0.0, %v1769
          %1771 = vdwg.mxu0
          %v1773 = vsel %vm961, %v1453, 0
          %v1776 = vsel %vm961, %v1573, 0
          %1778 = vmatpush.xpose.msra.mxu0 0.0
          %1779 = vmatpush.xpose.msra.mxu0 0.0
          %1780 = vmatpush.xpose.msra.mxu0 0.0
          %1781 = vmatpush.xpose.msra.mxu0 0.0
          %1782 = vmatpush.xpose.msra.mxu0 0.0
          %1783 = vmatpush.xpose.msra.mxu0 0.0
          %1784 = vmatpush.xpose.msra.mxu0 0.0
          %1785 = vmatpush.xpose.msra.mxu0 0.0
          %1786 = vmatpush.xpose.msra.mxu0 0.0
          %1787 = vmatpush.xpose.msra.mxu0 0.0
          %1788 = vmatpush.xpose.msra.mxu0 0.0
          %1789 = vmatpush.xpose.msra.mxu0 0.0
          %1790 = vmatpush.xpose.msra.mxu0 0.0
          %1791 = vmatpush.xpose.msra.mxu0 0.0
          %1792 = vmatpush.xpose.msra.mxu0 0.0
          %1793 = vmatpush.xpose.msra.mxu0 %v1776
          %1794 = vmatmul.f32.gmra.mxu0 %v1773
          %v1795 = vpop.f32.mrf.mxu0
          %v1796 = vadd.f32 0.0, %v1795
          %1797 = vdwg.mxu0
          %v1798 = vmul.f32 %v1718, 0.17677669
          %v1799 = vmul.f32 %v1744, 0.17677669
          %v1800 = vmul.f32 %v1770, 0.17677669
          %v1801 = vmul.f32 %v1796, 0.17677669
          %v1802 = vsel %vm1070, %v1798, -inf
          %1803 = vmax.xlane.f32.xlu0 %v1802
          %v1804 = vpop.xlane.xlu0 %1803
          %v1805 = vsel %vm1070, %v1799, -inf
          %1806 = vmax.xlane.f32.xlu0 %v1805
          %v1807 = vpop.xlane.xlu0 %1806
          %v1808 = vsel %vm1070, %v1800, -inf
          %1809 = vmax.xlane.f32.xlu0 %v1808
          %v1810 = vpop.xlane.xlu0 %1809
          %v1811 = vsel %vm1070, %v1801, -inf
          %1812 = vmax.xlane.f32.xlu0 %v1811
          %v1813 = vpop.xlane.xlu0 %1812
          %v1814 = vsub.f32 %v1798, %v1804
          %v1815 = vsub.f32 %v1799, %v1807
          %v1816 = vsub.f32 %v1800, %v1810
          %v1817 = vsub.f32 %v1801, %v1813
          %v1818 = vmul.f32 %v1814, 1.442695
          %v1819 = vpow.pop %v1818
          %v1820 = vmul.f32 %v1815, 1.442695
          %v1821 = vpow.pop %v1820
          %v1822 = vmul.f32 %v1816, 1.442695
          %v1823 = vpow.pop %v1822
          %v1824 = vmul.f32 %v1817, 1.442695
          %v1825 = vpow.pop %v1824
          %v1826 = vsel %vm1070, %v1819, 0.0
          %1827 = vadd.xlane.f32.xlu0 %v1826
          %v1828 = vpop.xlane.xlu0 %1827
          %v1829 = vsel %vm1070, %v1821, 0.0
          %1830 = vadd.xlane.f32.xlu0 %v1829
          %v1831 = vpop.xlane.xlu0 %1830
          %v1832 = vsel %vm1070, %v1823, 0.0
          %1833 = vadd.xlane.f32.xlu0 %v1832
          %v1834 = vpop.xlane.xlu0 %1833
          %v1835 = vsel %vm1070, %v1825, 0.0
          %1836 = vadd.xlane.f32.xlu0 %v1835
          %v1837 = vpop.xlane.xlu0 %1836
          %v1838 = vrcp.pop %v1828
          %v1839 = vrcp.pop %v1831
          %v1840 = vrcp.pop %v1834
          %v1841 = vrcp.pop %v1837
          %v1842 = vmul.f32 %v1819, %v1838
          %v1843 = vmul.f32 %v1821, %v1839
          %v1844 = vmul.f32 %v1823, %v1840
          %v1845 = vmul.f32 %v1825, %v1841
          %v1847 = vsel %vm1070, %v1842, 0
          %1849 = vmatpush.msra.mxu0 0.0
          %1850 = vmatpush.msra.mxu0 0.0
          %1851 = vmatpush.msra.mxu0 0.0
          %1852 = vmatpush.msra.mxu0 0.0
          %1853 = vmatpush.msra.mxu0 0.0
          %1854 = vmatpush.msra.mxu0 0.0
          %1855 = vmatpush.msra.mxu0 0.0
          %1856 = vmatpush.msra.mxu0 0.0
          %1857 = vmatpush.msra.mxu0 0.0
          %1858 = vmatpush.msra.mxu0 0.0
          %1859 = vmatpush.msra.mxu0 0.0
          %1860 = vmatpush.msra.mxu0 0.0
          %1861 = vmatpush.msra.mxu0 0.0
          %1862 = vmatpush.msra.mxu0 0.0
          %1863 = vmatpush.msra.mxu0 0.0
          %1864 = vmatpush.msra.mxu0 %v1687
          %1865 = vmatmul.f32.gmra.mxu0 %v1847
          %v1866 = vpop.f32.mrf.mxu0
          %v1867 = vadd.f32 0.0, %v1866
          %1868 = vdwg.mxu0
          %v1870 = vsel %vm1070, %v1843, 0
          %1872 = vmatpush.msra.mxu0 0.0
          %1873 = vmatpush.msra.mxu0 0.0
          %1874 = vmatpush.msra.mxu0 0.0
          %1875 = vmatpush.msra.mxu0 0.0
          %1876 = vmatpush.msra.mxu0 0.0
          %1877 = vmatpush.msra.mxu0 0.0
          %1878 = vmatpush.msra.mxu0 0.0
          %1879 = vmatpush.msra.mxu0 0.0
          %1880 = vmatpush.msra.mxu0 0.0
          %1881 = vmatpush.msra.mxu0 0.0
          %1882 = vmatpush.msra.mxu0 0.0
          %1883 = vmatpush.msra.mxu0 0.0
          %1884 = vmatpush.msra.mxu0 0.0
          %1885 = vmatpush.msra.mxu0 0.0
          %1886 = vmatpush.msra.mxu0 0.0
          %1887 = vmatpush.msra.mxu0 %v1689
          %1888 = vmatmul.f32.gmra.mxu0 %v1870
          %v1889 = vpop.f32.mrf.mxu0
          %v1890 = vadd.f32 0.0, %v1889
          %1891 = vdwg.mxu0
          %v1893 = vsel %vm1070, %v1844, 0
          %1895 = vmatpush.msra.mxu0 0.0
          %1896 = vmatpush.msra.mxu0 0.0
          %1897 = vmatpush.msra.mxu0 0.0
          %1898 = vmatpush.msra.mxu0 0.0
          %1899 = vmatpush.msra.mxu0 0.0
          %1900 = vmatpush.msra.mxu0 0.0
          %1901 = vmatpush.msra.mxu0 0.0
          %1902 = vmatpush.msra.mxu0 0.0
          %1903 = vmatpush.msra.mxu0 0.0
          %1904 = vmatpush.msra.mxu0 0.0
          %1905 = vmatpush.msra.mxu0 0.0
          %1906 = vmatpush.msra.mxu0 0.0
          %1907 = vmatpush.msra.mxu0 0.0
          %1908 = vmatpush.msra.mxu0 0.0
          %1909 = vmatpush.msra.mxu0 0.0
          %1910 = vmatpush.msra.mxu0 %v1691
          %1911 = vmatmul.f32.gmra.mxu0 %v1893
          %v1912 = vpop.f32.mrf.mxu0
          %v1913 = vadd.f32 0.0, %v1912
          %1914 = vdwg.mxu0
          %v1916 = vsel %vm1070, %v1845, 0
          %1918 = vmatpush.msra.mxu0 0.0
          %1919 = vmatpush.msra.mxu0 0.0
          %1920 = vmatpush.msra.mxu0 0.0
          %1921 = vmatpush.msra.mxu0 0.0
          %1922 = vmatpush.msra.mxu0 0.0
          %1923 = vmatpush.msra.mxu0 0.0
          %1924 = vmatpush.msra.mxu0 0.0
          %1925 = vmatpush.msra.mxu0 0.0
          %1926 = vmatpush.msra.mxu0 0.0
          %1927 = vmatpush.msra.mxu0 0.0
          %1928 = vmatpush.msra.mxu0 0.0
          %1929 = vmatpush.msra.mxu0 0.0
          %1930 = vmatpush.msra.mxu0 0.0
          %1931 = vmatpush.msra.mxu0 0.0
          %1932 = vmatpush.msra.mxu0 0.0
          %1933 = vmatpush.msra.mxu0 %v1693
          %1934 = vmatmul.f32.gmra.mxu0 %v1916
          %v1935 = vpop.f32.mrf.mxu0
          %v1936 = vadd.f32 0.0, %v1935
          %1937 = vdwg.mxu0
          %v1938 = vrot.slane %v1913, 4
          %v1939 = vsel %vm611, %v1938, %v1867
          %v1940 = vrot.slane %v1867, 4
          %v1941 = vsel %vm611, %v1913, %v1940
          %v1943 = vunpack.c.l.s4 1983009808
          %v1944 = vunpack.c.0.s8 %v1943
          %v1945 = vperm.slane %v1939, %v1944
          %v1947 = vunpack.c.l.s4 1983009808
          %v1948 = vunpack.c.0.s8 %v1947
          %v1949 = vperm.slane %v1941, %v1948
          %v1950 = vrot.slane %v1936, 4
          %v1951 = vsel %vm611, %v1950, %v1890
          %v1952 = vrot.slane %v1890, 4
          %v1953 = vsel %vm611, %v1936, %v1952
          %v1955 = vunpack.c.l.s4 1983009808
          %v1956 = vunpack.c.0.s8 %v1955
          %v1957 = vperm.slane %v1951, %v1956
          %v1959 = vunpack.c.l.s4 1983009808
          %v1960 = vunpack.c.0.s8 %v1959
          %v1961 = vperm.slane %v1953, %v1960
          %v1962 = vrot.slane %v1957, 4
          %v1963 = vsel %vm611, %v1962, %v1945
          %v1964 = vrot.slane %v1945, 4
          %v1965 = vsel %vm611, %v1957, %v1964
          %v1967 = vunpack.c.l.s4 1934713408
          %v1968 = vunpack.c.0.s8 %v1967
          %v1969 = vperm.slane %v1963, %v1968
          %v1971 = vunpack.c.l.s4 1934713408
          %v1972 = vunpack.c.0.s8 %v1971
          %v1973 = vperm.slane %v1965, %v1972
          %v1974 = vrot.slane %v1961, 4
          %v1975 = vsel %vm611, %v1974, %v1949
          %v1976 = vrot.slane %v1949, 4
          %v1977 = vsel %vm611, %v1961, %v1976
          %v1979 = vunpack.c.l.s4 1934713408
          %v1980 = vunpack.c.0.s8 %v1979
          %v1981 = vperm.slane %v1975, %v1980
          %v1983 = vunpack.c.l.s4 1934713408
          %v1984 = vunpack.c.0.s8 %v1983
          %v1985 = vperm.slane %v1977, %v1984
          %v1986 = vrot.slane %v1969, 4
          %v1987 = vsel %vm611, 0.0, %v1986
          %v1988 = vrot.slane %v1973, 4
          %v1989 = vsel %vm611, 0.0, %v1988
          %v1990 = vrot.slane %v1981, 4
          %v1991 = vsel %vm611, 0.0, %v1990
          %v1992 = vrot.slane %v1985, 4
          %v1993 = vsel %vm611, 0.0, %v1992
          %v1994 = vsel %vm611, %v1988, %v1969
          %v1996 = vunpack.c.l.s4 1983009808
          %v1997 = vunpack.c.0.s8 %v1996
          %v1998 = vperm.slane %v1994, %v1997
          %v1999 = vrot.slane %v1989, 4
          %v2000 = vsel %vm611, %v1999, %v1987
          %v2002 = vunpack.c.l.s4 1983009808
          %v2003 = vunpack.c.0.s8 %v2002
          %v2004 = vperm.slane %v2000, %v2003
          %v2005 = vsel %vm611, %v1992, %v1981
          %v2007 = vunpack.c.l.s4 1983009808
          %v2008 = vunpack.c.0.s8 %v2007
          %v2009 = vperm.slane %v2005, %v2008
          %v2010 = vrot.slane %v1993, 4
          %v2011 = vsel %vm611, %v2010, %v1991
          %v2013 = vunpack.c.l.s4 1983009808
          %v2014 = vunpack.c.0.s8 %v2013
          %v2015 = vperm.slane %v2011, %v2014
          %v2016 = vrot.slane %v2004, 4
          %v2017 = vsel %vm611, %v2016, %v1998
          %v2018 = vrot.slane %v1998, 4
          %v2019 = vsel %vm611, %v2004, %v2018
          %v2021 = vunpack.c.l.s4 1934713408
          %v2022 = vunpack.c.0.s8 %v2021
          %v2023 = vperm.slane %v2017, %v2022
          %v2025 = vunpack.c.l.s4 1934713408
          %v2026 = vunpack.c.0.s8 %v2025
          %v2027 = vperm.slane %v2019, %v2026
          %v2028 = vrot.slane %v2015, 4
          %v2029 = vsel %vm611, %v2028, %v2009
          %v2030 = vrot.slane %v2009, 4
          %v2031 = vsel %vm611, %v2015, %v2030
          %v2033 = vunpack.c.l.s4 1934713408
          %v2034 = vunpack.c.0.s8 %v2033
          %v2035 = vperm.slane %v2029, %v2034
          %v2037 = vunpack.c.l.s4 1934713408
          %v2038 = vunpack.c.0.s8 %v2037
          %v2039 = vperm.slane %v2031, %v2038
          %v2040 = vrot.slane %v2035, 4
          %v2041 = vsel %vm611, %v2040, %v2023
          %v2042 = vrot.slane %v2023, 4
          %v2043 = vsel %vm611, %v2035, %v2042
          %v2044 = vrot.slane %v2039, 4
          %v2045 = vsel %vm611, %v2044, %v2027
          %v2046 = vrot.slane %v2027, 4
          %v2047 = vsel %vm611, %v2039, %v2046
          %2049 = vrot.lane.b32.xlu0 %v2043, 32
          %v2050 = vpop.permute.xlu0 %2049
          %2053 = vrot.lane.b32.xlu0 %v2045, 64
          %v2054 = vpop.permute.xlu0 %2053
          %2057 = vrot.lane.b32.xlu0 %v2047, 96
          %v2058 = vpop.permute.xlu0 %2057
          %v2060 = vsel %vm961, %v2041, %v2050
          %v2061 = vsel %vm1330, %v2060, %v2054
          %v2062 = vsel %vm1332, %v2061, %v2058
          %v2063 = vld [vmem:[%s3] sm:$0xff]
          %v2064 = vld [vmem:[%s3 + $0x8] sm:$0xff]
          %v2065 = vld [vmem:[%s3 + $0x10] sm:$0xff]
          %v2066 = vld [vmem:[%s3 + $0x18] sm:$0xff]
          %v2067 = vld [vmem:[%s3 + $0x20] sm:$0xff]
          %v2068 = vld [vmem:[%s3 + $0x28] sm:$0xff]
          %v2069 = vld [vmem:[%s3 + $0x30] sm:$0xff]
          %v2070 = vld [vmem:[%s3 + $0x38] sm:$0xff]
          %v2071 = vld [vmem:[%s3 + $0x40] sm:$0xff]
          %v2072 = vld [vmem:[%s3 + $0x48] sm:$0xff]
          %v2073 = vld [vmem:[%s3 + $0x50] sm:$0xff]
          %v2074 = vld [vmem:[%s3 + $0x58] sm:$0xff]
          %v2075 = vld [vmem:[%s3 + $0x60] sm:$0xff]
          %v2076 = vld [vmem:[%s3 + $0x68] sm:$0xff]
          %v2077 = vld [vmem:[%s3 + $0x70] sm:$0xff]
          %v2078 = vld [vmem:[%s3 + $0x78] sm:$0xff]
          %v2079 = vld [vmem:[%s4] sm:$0x1]
          %v2081 = vperm.slane %v2079, 0
          %2083 = vmatpush.msra.mxu0 %v2078
          %2084 = vmatpush.msra.mxu0 %v2077
          %2085 = vmatpush.msra.mxu0 %v2076
          %2086 = vmatpush.msra.mxu0 %v2075
          %2087 = vmatpush.msra.mxu0 %v2074
          %2088 = vmatpush.msra.mxu0 %v2073
          %2089 = vmatpush.msra.mxu0 %v2072
          %2090 = vmatpush.msra.mxu0 %v2071
          %2091 = vmatpush.msra.mxu0 %v2070
          %2092 = vmatpush.msra.mxu0 %v2069
          %2093 = vmatpush.msra.mxu0 %v2068
          %2094 = vmatpush.msra.mxu0 %v2067
          %2095 = vmatpush.msra.mxu0 %v2066
          %2096 = vmatpush.msra.mxu0 %v2065
          %2097 = vmatpush.msra.mxu0 %v2064
          %2098 = vmatpush.msra.mxu0 %v2063
          %2099 = vmatmul.f32.gmra.mxu0 %v1333
          %v2100 = vpop.f32.mrf.mxu0
          %v2101 = vadd.f32 %v2081, %v2100
          %2102 = vmatmul.f32.gmra.mxu0 %v2062
          %v2103 = vpop.f32.mrf.mxu0
          %v2104 = vadd.f32 %v2081, %v2103
          %2105 = vdwg.mxu0
          %v2106 = vadd.f32 %v2101, %v473
          %v2107 = vadd.f32 %v2104, %v474
          %2108 = vadd.xlane.f32.xlu0 %v2106
          %v2109 = vpop.xlane.xlu0 %2108
          %2110 = vadd.xlane.f32.xlu0 %v2107
          %v2111 = vpop.xlane.xlu0 %2110
          %v2112 = vrcp.pop 128.0
          %v2113 = vmul.f32 128.0, %v2112
          %v2114 = vsub.f32 1.0, %v2113
          %v2115 = vmul.f32 %v2112, %v2114
          %v2116 = vadd.f32 %v2112, %v2115
          %vm2117 = vweird.f32 %v2112
          %v2118 = vsel %vm2117, %v2112, %v2116
          %v2119 = vmul.f32 %v2109, %v2118
          %v2120 = vmul.f32 %v2111, %v2118
          %v2121 = vsub.f32 %v2106, %v2119
          %v2122 = vsub.f32 %v2107, %v2120
          %v2123 = vmul.f32 %v2121, %v2121
          %v2124 = vmul.f32 %v2122, %v2122
          %2125 = vadd.xlane.f32.xlu0 %v2123
          %v2126 = vpop.xlane.xlu0 %2125
          %2127 = vadd.xlane.f32.xlu0 %v2124
          %v2128 = vpop.xlane.xlu0 %2127
          %v2129 = vmul.f32 %v2126, %v2118
          %v2130 = vmul.f32 %v2128, %v2118
          %v2131 = vadd.f32 %v2129, 1e-05
          %v2132 = vadd.f32 %v2130, 1e-05
          %v2133 = vrsqrt.pop %v2131
          %v2134 = vmul.f32 %v2133, %v2131
          %v2135 = vmul.f32 %v2134, %v2133
          %v2136 = vmul.f32 0.5, %v2135
          %v2137 = vsub.f32 1.5, %v2136
          %v2138 = vmul.f32 %v2133, %v2137
          %vm2139 = vweird.f32 %v2131
          %vm2140 = vweird.f32 %v2133
          %vm2141 = vmor %vm2139, %vm2140
          %v2142 = vsel %vm2141, %v2133, %v2138
          %v2143 = vrsqrt.pop %v2132
          %v2144 = vmul.f32 %v2143, %v2132
          %v2145 = vmul.f32 %v2144, %v2143
          %v2146 = vmul.f32 0.5, %v2145
          %v2147 = vsub.f32 1.5, %v2146
          %v2148 = vmul.f32 %v2143, %v2147
          %vm2149 = vweird.f32 %v2132
          %vm2150 = vweird.f32 %v2143
          %vm2151 = vmor %vm2149, %vm2150
          %v2152 = vsel %vm2151, %v2143, %v2148
          %v2153 = vmul.f32 %v2121, %v2142
          %v2154 = vmul.f32 %v2122, %v2152
          %v2155 = vld [vmem:[%s5] sm:$0x1]
          %v2157 = vperm.slane %v2155, 0
          %v2159 = vmul.f32 %v2153, %v2157
          %v2160 = vmul.f32 %v2154, %v2157
          %v2161 = vld [vmem:[#allocation11] sm:$0x1]
          %v2163 = vperm.slane %v2161, 0
          %v2165 = vadd.f32 %v2159, %v2163
          %v2166 = vadd.f32 %v2160, %v2163
          %2167 = vst [vmem:[#allocation2] sm:$0xff] %v2165
          %2168 = vst [vmem:[#allocation2 + $0x8] sm:$0xff] %v2166
          %v2169 = vld [vmem:[%s7] sm:$0xff]
          %v2170 = vld [vmem:[%s7 + $0x8] sm:$0xff]
          %v2171 = vld [vmem:[%s7 + $0x10] sm:$0xff]
          %v2172 = vld [vmem:[%s7 + $0x18] sm:$0xff]
          %v2173 = vld [vmem:[%s7 + $0x20] sm:$0xff]
          %v2174 = vld [vmem:[%s7 + $0x28] sm:$0xff]
          %v2175 = vld [vmem:[%s7 + $0x30] sm:$0xff]
          %v2176 = vld [vmem:[%s7 + $0x38] sm:$0xff]
          %v2177 = vld [vmem:[%s7 + $0x40] sm:$0xff]
          %v2178 = vld [vmem:[%s7 + $0x48] sm:$0xff]
          %v2179 = vld [vmem:[%s7 + $0x50] sm:$0xff]
          %v2180 = vld [vmem:[%s7 + $0x58] sm:$0xff]
          %v2181 = vld [vmem:[%s7 + $0x60] sm:$0xff]
          %v2182 = vld [vmem:[%s7 + $0x68] sm:$0xff]
          %v2183 = vld [vmem:[%s7 + $0x70] sm:$0xff]
          %v2184 = vld [vmem:[%s7 + $0x78] sm:$0xff]
          %2185 = vmatpush.msra.mxu0 %v2184
          %2186 = vmatpush.msra.mxu0 %v2183
          %2187 = vmatpush.msra.mxu0 %v2182
          %2188 = vmatpush.msra.mxu0 %v2181
          %2189 = vmatpush.msra.mxu0 %v2180
          %2190 = vmatpush.msra.mxu0 %v2179
          %2191 = vmatpush.msra.mxu0 %v2178
          %2192 = vmatpush.msra.mxu0 %v2177
          %2193 = vmatpush.msra.mxu0 %v2176
          %2194 = vmatpush.msra.mxu0 %v2175
          %2195 = vmatpush.msra.mxu0 %v2174
          %2196 = vmatpush.msra.mxu0 %v2173
          %2197 = vmatpush.msra.mxu0 %v2172
          %2198 = vmatpush.msra.mxu0 %v2171
          %2199 = vmatpush.msra.mxu0 %v2170
          %2200 = vmatpush.msra.mxu0 %v2169
          %2201 = vmatmul.f32.gmra.mxu0 %v2165
          %v2202 = vpop.f32.mrf.mxu0
          %v2203 = vadd.f32 0.0, %v2202
          %2204 = vmatmul.f32.gmra.mxu0 %v2166
          %v2205 = vpop.f32.mrf.mxu0
          %v2206 = vadd.f32 0.0, %v2205
          %2207 = vdwg.mxu0
          %vm2208 = vcmask 31744
          %v2209 = vsel %vm2208, %v2203, -inf
          %2210 = vmax.xlane.f32.xlu0 %v2209
          %v2211 = vpop.xlane.xlu0 %2210
          %v2212 = vsel %vm2208, %v2206, -inf
          %2213 = vmax.xlane.f32.xlu0 %v2212
          %v2214 = vpop.xlane.xlu0 %2213
          %v2215 = vsub.f32 %v2203, %v2211
          %v2216 = vsub.f32 %v2206, %v2214
          %v2217 = vmul.f32 %v2215, 1.442695
          %v2218 = vpow.pop %v2217
          %v2219 = vmul.f32 %v2216, 1.442695
          %v2220 = vpow.pop %v2219
          %v2221 = vsel %vm2208, %v2218, 0.0
          %2222 = vadd.xlane.f32.xlu0 %v2221
          %v2223 = vpop.xlane.xlu0 %2222
          %v2224 = vsel %vm2208, %v2220, 0.0
          %2225 = vadd.xlane.f32.xlu0 %v2224
          %v2226 = vpop.xlane.xlu0 %2225
          %v2227 = vrcp.pop %v2223
          %v2228 = vrcp.pop %v2226
          %v2229 = vmul.f32 %v2218, %v2227
          %v2230 = vmul.f32 %v2220, %v2228
          %v2231 = vlaneseq
          %v2232 = vand.u32 %v2231, 127
          %vm2233 = vcmp.eq.s32.totalorder %v2232, 0
          %v2234 = vsel %vm2233, %v2229, 0.0
          %v2235 = vsel %vm2233, %v2230, 0.0
          %v2236 = vsel %vm2208, %v2234, 0.0
          %2237 = vadd.xlane.f32.xlu0 %v2236
          %v2238 = vpop.xlane.xlu0 %2237
          %v2239 = vsel %vm2208, %v2235, 0.0
          %2240 = vadd.xlane.f32.xlu0 %v2239
          %v2241 = vpop.xlane.xlu0 %2240
          %vm2242 = vcmask 7168
          %2243 = vst.msk [vmem:[#allocation3] sm:$0xff] %vm2242, %v2238
          %2244 = vst.msk [vmem:[#allocation3 + $0x8] sm:$0xff] %vm2242, %v2241
          %vm2245 = vcmp.eq.s32.totalorder %v2232, 1
          %v2246 = vsel %vm2245, %v2229, 0.0
          %v2247 = vsel %vm2245, %v2230, 0.0
          %v2248 = vsel %vm2208, %v2246, 0.0
          %2249 = vadd.xlane.f32.xlu0 %v2248
          %v2250 = vpop.xlane.xlu0 %2249
          %v2251 = vsel %vm2208, %v2247, 0.0
          %2252 = vadd.xlane.f32.xlu0 %v2251
          %v2253 = vpop.xlane.xlu0 %2252
          %s2254 = scalar_lea.vmem [#allocation3], 16
          %2255 = vst.msk [vmem:[%s2254] sm:$0xff] %vm2242, %v2250
          %2256 = vst.msk [vmem:[%s2254 + $0x8] sm:$0xff] %vm2242, %v2253
          %vm2257 = vcmp.eq.s32.totalorder %v2232, 2
          %v2258 = vsel %vm2257, %v2229, 0.0
          %v2259 = vsel %vm2257, %v2230, 0.0
          %v2260 = vsel %vm2208, %v2258, 0.0
          %2261 = vadd.xlane.f32.xlu0 %v2260
          %v2262 = vpop.xlane.xlu0 %2261
          %v2263 = vsel %vm2208, %v2259, 0.0
          %2264 = vadd.xlane.f32.xlu0 %v2263
          %v2265 = vpop.xlane.xlu0 %2264
          %s2266 = scalar_lea.vmem [#allocation3], 32
          %2267 = vst.msk [vmem:[%s2266] sm:$0xff] %vm2242, %v2262
          %2268 = vst.msk [vmem:[%s2266 + $0x8] sm:$0xff] %vm2242, %v2265
          %vm2269 = vcmp.eq.s32.totalorder %v2232, 3
          %v2270 = vsel %vm2269, %v2229, 0.0
          %v2271 = vsel %vm2269, %v2230, 0.0
          %v2272 = vsel %vm2208, %v2270, 0.0
          %2273 = vadd.xlane.f32.xlu0 %v2272
          %v2274 = vpop.xlane.xlu0 %2273
          %v2275 = vsel %vm2208, %v2271, 0.0
          %2276 = vadd.xlane.f32.xlu0 %v2275
          %v2277 = vpop.xlane.xlu0 %2276
          %s2278 = scalar_lea.vmem [#allocation3], 48
          %2279 = vst.msk [vmem:[%s2278] sm:$0xff] %vm2242, %v2274
          %2280 = vst.msk [vmem:[%s2278 + $0x8] sm:$0xff] %vm2242, %v2277
          %2281 = vst [vmem:[#allocation4] sm:$0xff] 0.0
          %2282 = vst [vmem:[#allocation4 + $0x8] sm:$0xff] 0.0
        $region84: #{tpu_custom_call.1} parent=59 // pred_fallthru
          _
        %s2283 = smul.u32 %s36, 128
        %s2284 = scalar_lea.vmem [#allocation13], %s2283
        %v2285 = vld [vmem:[%s2284] sm:$0xff]
        %v2286 = vld [vmem:[%s2284 + $0x8] sm:$0xff]
        %v2287 = vld [vmem:[%s2284 + $0x10] sm:$0xff]
        %v2288 = vld [vmem:[%s2284 + $0x18] sm:$0xff]
        %v2289 = vld [vmem:[%s2284 + $0x20] sm:$0xff]
        %v2290 = vld [vmem:[%s2284 + $0x28] sm:$0xff]
        %v2291 = vld [vmem:[%s2284 + $0x30] sm:$0xff]
        %v2292 = vld [vmem:[%s2284 + $0x38] sm:$0xff]
        %v2293 = vld [vmem:[%s2284 + $0x40] sm:$0xff]
        %v2294 = vld [vmem:[%s2284 + $0x48] sm:$0xff]
        %v2295 = vld [vmem:[%s2284 + $0x50] sm:$0xff]
        %v2296 = vld [vmem:[%s2284 + $0x58] sm:$0xff]
        %v2297 = vld [vmem:[%s2284 + $0x60] sm:$0xff]
        %v2298 = vld [vmem:[%s2284 + $0x68] sm:$0xff]
        %v2299 = vld [vmem:[%s2284 + $0x70] sm:$0xff]
        %v2300 = vld [vmem:[%s2284 + $0x78] sm:$0xff]
        %s2301 = scalar_lea.vmem %s9, %s36
        %v2302 = vld [vmem:[%s2301] sm:$0x1]
        %v2303 = vld [vmem:[#allocation2] sm:$0xff]
        %v2304 = vld [vmem:[#allocation2 + $0x8] sm:$0xff]
        %v2306 = vperm.slane %v2302, 0
        %2308 = vmatpush.msra.mxu0 %v2300
        %2309 = vmatpush.msra.mxu0 %v2299
        %2310 = vmatpush.msra.mxu0 %v2298
        %2311 = vmatpush.msra.mxu0 %v2297
        %2312 = vmatpush.msra.mxu0 %v2296
        %2313 = vmatpush.msra.mxu0 %v2295
        %2314 = vmatpush.msra.mxu0 %v2294
        %2315 = vmatpush.msra.mxu0 %v2293
        %2316 = vmatpush.msra.mxu0 %v2292
        %2317 = vmatpush.msra.mxu0 %v2291
        %2318 = vmatpush.msra.mxu0 %v2290
        %2319 = vmatpush.msra.mxu0 %v2289
        %2320 = vmatpush.msra.mxu0 %v2288
        %2321 = vmatpush.msra.mxu0 %v2287
        %2322 = vmatpush.msra.mxu0 %v2286
        %2323 = vmatpush.msra.mxu0 %v2285
        %2324 = vmatmul.f32.gmra.mxu0 %v2303
        %v2325 = vpop.f32.mrf.mxu0
        %v2326 = vadd.f32 %v2306, %v2325
        %2327 = vmatmul.f32.gmra.mxu0 %v2304
        %v2328 = vpop.f32.mrf.mxu0
        %v2329 = vadd.f32 %v2306, %v2328
        %2330 = vdwg.mxu0
        %v2331 = vld [vmem:[#allocation4] sm:$0xff]
        %v2332 = vld [vmem:[#allocation4 + $0x8] sm:$0xff]
        %s2333 = smul.u32 %s36, 16
        %s2334 = scalar_lea.vmem [#allocation3], %s2333
        %v2335 = vld [vmem:[%s2334] sm:$0xff]
        %v2336 = vld [vmem:[%s2334 + $0x8] sm:$0xff]
        %2338 = vset.pattern.permute.xlu0 0
        %2339 = vperm.xlu0 %2338, %v2335
        %v2340 = vpop.permute.xlu0 %2339
        %2343 = vset.pattern.permute.xlu0 0
        %2344 = vperm.xlu0 %2343, %v2336
        %v2345 = vpop.permute.xlu0 %2344
        %v2347 = vmul.f32 %v2340, %v2326
        %v2348 = vmul.f32 %v2345, %v2329
        %v2349 = vadd.f32 %v2331, %v2347
        %v2350 = vadd.f32 %v2332, %v2348
        %2351 = vst [vmem:[#allocation4] sm:$0xff] %v2349
        %2352 = vst [vmem:[#allocation4 + $0x8] sm:$0xff] %v2350
        %p2353 = scmp.eq.s32.totalorder %s36, 3
        // Predicated region
        $region85: #{tpu_custom_call.1} parent=59 // pred_check
          %p2354 = pneg %p2353
        $region86: #{tpu_custom_call.1} parent=59 // pred_check_branch
          %2356 = sbr.rel (%p2354) target = $region88
        $region87: #{tpu_custom_call.1} parent=59 // pred_region
          %v2357 = vld [vmem:[#allocation4] sm:$0xff]
          %v2358 = vld [vmem:[#allocation4 + $0x8] sm:$0xff]
          %2359 = vst [vmem:[%s466] sm:$0xff] %v2357
          %2360 = vst [vmem:[%s466 + $0x8] sm:$0xff] %v2358
        $region88: #{tpu_custom_call.1} parent=59 // pred_fallthru
          _
        %s2361 = sand.u32 %s275, 1
        %s2362 = scalar_lea.sflag [#allocation7], %s2361
        %s2363 = sand.u32 %s275, 1
        %s2364 = smul.addr %s2363, 16
        %s2365 = scalar_lea.vmem [#allocation14], %s2364
        // Predicated region
        $region89: #{tpu_custom_call.1} parent=59 // pred_check
          %p2366 = pneg %p285
        $region90: #{tpu_custom_call.1} parent=59 // pred_check_branch
          %2368 = sbr.rel (%p2366) target = $region92
        $region91: #{tpu_custom_call.1} parent=59 // pred_region
          %s2369 = smul.u32 2, %s35
          %2371 = vsyncadd %s2362, 0
          %s2372 = smul.addr %s34, 2
          %s2373 = sadd.s32 %s2369, %s2372
          %s2374 = smul.addr %s2373, 8
          %s2375 = scalar_lea.hbm %s10, %s2374
          %s2376 = sshll.u32 %s2365, 4
          %s2377 = int_to_ptr.vmem [resolvable:$true] %s2376
          %s2378 = sshll.u32 %s2375, 4
          %s2379 = int_to_ptr.hbm [resolvable:$true] %s2378
          %2384 = dma.vmem_to_hbm [thread:$0]  %s2377, 256, %s2379, %s2362, 128, 128, 8
        $region92: #{tpu_custom_call.1} parent=59 // pred_fallthru
          _
      $region60: #{tpu_custom_call.1} parent=5 // pred_fallthru
        _
      %p2385 = scmp.le.s32.totalorder 2, %s24
      // Predicated region
      $region93: #{tpu_custom_call.1} parent=5 // pred_check
        %p2386 = pneg %p2385
      $region94: #{tpu_custom_call.1} parent=5 // pred_check_branch
        %2388 = sbr.rel (%p2386) target = $region96
      $region95: #{tpu_custom_call.1} parent=5 // pred_region
        %s2389 = ssub.s32 %s24, 2
        // Predicated region
        $region97: #{tpu_custom_call.1} parent=95 // pred_check
          %p2390 = pneg %p291
        $region98: #{tpu_custom_call.1} parent=95 // pred_check_branch
          %2392 = sbr.rel (%p2390) target = $region100
        $region99: #{tpu_custom_call.1} parent=95 // pred_region
          %s2393 = sand.u32 %s276, 1
          %s2394 = scalar_lea.sflag [#allocation7], %s2393
          %s2395 = sand.u32 %s276, 1
          %s2396 = smul.addr %s2395, 16
          %s2397 = scalar_lea.vmem [#allocation14], %s2396
          %2399 = dma.done %s2394, 256
        $region100: #{tpu_custom_call.1} parent=95 // pred_fallthru
          _
      $region96: #{tpu_custom_call.1} parent=5 // pred_fallthru
        _
    $region6: #{tpu_custom_call.1} parent=1 // loop_footer
      %s28 = sadd.s32 1, %s24
    $region7: #{tpu_custom_call.1} parent=1 // loop_footer_branch
      %23 = sbr.rel target = $region3
    $region8: #{tpu_custom_call.1} parent=1 // loop_exit
      _
    %2400 = vsyncpa [#allocation6], 1
    %s2401 = scalar_lea.sflag [#allocation6], 1
    %2402 = vsyncpa %s2401, 1
    %2403 = vsyncpa [#allocation9], 1
    %2404 = vsyncpa [#allocation12], 1
    %2405 = vsyncpa [#allocation7], 1
    %s2406 = scalar_lea.sflag [#allocation7], 1
    %2407 = vsyncpa %s2406, 1

</llo_original>
